<compile_context>
chip_gen: v7x
topology: tpu7x:2x2x1
jax: 0.10.0
libtpu: 0.0.40
codegen_flags: <defaults>
</compile_context>

<pallas_src>
import jax
import jax.numpy as jnp
from jax.experimental import pallas as pl
from jax.experimental.pallas import tpu as pltpu

SEQ = 150                 # sequence length (fixed by the module: 32*150, 150*4)
CIN = 4                   # input channels
CCONV = 32                # conv output channels
HID = 64                  # hidden width of both MLPs
LATENT = 8                # latent_dim
FLAT = SEQ * CCONV        # 4800
OUT_FLAT = SEQ * CIN      # 600
OUT_PAD = 640             # 5*128: lane-dense recon slab (sliced to 600 outside)
HEAD_PAD = 128            # lane-dense mean|logvar slab (sliced to 16 outside)

GROUP = 8                 # conv output timesteps handled per group step
NG = (SEQ + GROUP - 1) // GROUP   # 19 groups
SEQ_PAD = NG * GROUP      # 152 (timesteps 150,151 are dead; their fc1 rows are 0)
K_IM = (GROUP + 2) * CIN  # 40 im2col features per group (8 outputs + 2 halo)
NWIDE = GROUP * CCONV     # 256 conv outputs per group (8 timesteps x 32 channels)


# ------------------------------------------------------------- fused kernel
def cvae_kernel(xg_ref, cond_ref, eps_ref,
                w8_ref, b8_ref, w1_ref, b1_ref, w2_ref, b2_ref,
                wd1z_ref, wd1c_ref, bd1_ref, wd2_ref, bd2_ref,
                recon_ref, mlv_ref):
    tb = xg_ref.shape[1]

    # ----- Conv1d(4->32, k=3, pad=1) + ReLU + encoder fc1, fused per group ---
    # conv_g: (tb, 256) = 8 timesteps x 32 channels via one aligned matmul;
    # fc1 accumulated as h1 += relu(conv_g) @ w1[g]; no flat slab, no masked
    # stores, no lane rotates.
    w8 = w8_ref[...]
    b8 = b8_ref[...]
    acc = jnp.zeros((tb, HID), jnp.float32)
    for g in range(NG):                                   # 19 unrolled steps
        conv_g = (jnp.dot(xg_ref[g], w8,
                          preferred_element_type=jnp.float32) + b8)
        a_g = jnp.maximum(conv_g, 0.0).astype(jnp.bfloat16)   # ReLU + bf16 at source
        acc = acc + jnp.dot(a_g, w1_ref[g],
                            preferred_element_type=jnp.float32)
    h1 = jnp.maximum(acc + b1_ref[...], 0.0)              # (tb, HID)

    # ----- mean/logvar head, padded to a lane-dense 128-wide slab ------------
    h2 = (jnp.dot(h1, w2_ref[...], preferred_element_type=jnp.float32)
          + b2_ref[...])                                   # (tb, 128); cols 0..15 used
    mean = h2[:, :LATENT]
    logvar = h2[:, LATENT:2 * LATENT]

    # ----- reparameterize: eps * exp(0.5*logvar) + mean ----------------------
    z = eps_ref[...] * jnp.exp(0.5 * logvar) + mean        # (tb, LATENT)

    # ----- decoder fc1 on concat([z, condition]) -----------------------------
    d1 = (jnp.dot(z, wd1z_ref[...], preferred_element_type=jnp.float32)
          + cond_ref[...] * wd1c_ref[...] + bd1_ref[...])  # (tb, HID)
    d1 = jnp.maximum(d1, 0.0)

    # ----- decoder fc2 + sigmoid, lane-dense 640-wide output -----------------
    logits = (jnp.dot(d1.astype(jnp.bfloat16), wd2_ref[...],
                      preferred_element_type=jnp.float32)
              + bd2_ref[...])                              # (tb, 640)
    recon_ref[...] = jax.nn.sigmoid(logits)
    mlv_ref[...] = h2                                      # packed mean|logvar (padded)


# ------------------------------------------------------------------ wrapper
def cvae_forward(x, condition, eps, params):
    B = x.shape[0]

    # Batch tiling (review items 3/4): large tiles (up to 128 rows, multiple
    # of 8 sublanes), and >=2 grid steps once the batch is non-trivial so the
    # "parallel" batch axis can be split across both v7x TensorCores.
    if B <= 16:
        tb, bp = B, B
    else:
        tb = min(128, ((B + 15) // 16) * 8)     # ~half the batch, multiple of 8
        bp = ((B + tb - 1) // tb) * tb
    if bp != B:
        padn = bp - B
        x = jnp.pad(x, ((0, padn), (0, 0), (0, 0)))
        condition = jnp.pad(condition, ((0, padn), (0, 0)))
        eps = jnp.pad(eps, ((0, padn), (0, 0)))
    nb = bp // tb

    # im2col in the wrapper (cheap XLA slicing): group g needs input times
    # 8g-1 .. 8g+8 (10 positions x 4 channels = 40 features); the conv's
    # zero padding is folded in here.  Group dim leads so xg_ref[g] is a
    # contiguous, natural-layout (tb, 40) slice in the kernel.
    x_pad = jnp.pad(x, ((0, 0), (1, SEQ_PAD + 1 - SEQ), (0, 0)))   # (bp, 154, CIN)
    xg = jnp.stack(
        [x_pad[:, GROUP * g: GROUP * g + GROUP + 2, :].reshape(bp, K_IM)
         for g in range(NG)], axis=0).astype(jnp.bfloat16)         # (NG, bp, 40)

    recon_pad, mlv = pl.pallas_call(
        cvae_kernel,
        out_shape=(
            jax.ShapeDtypeStruct((bp, OUT_PAD), jnp.float32),
            jax.ShapeDtypeStruct((bp, HEAD_PAD), jnp.float32),
        ),
        grid=(nb,),
        in_specs=[
            pl.BlockSpec((NG, tb, K_IM), lambda i: (0, i, 0)),    # im2col input
            pl.BlockSpec((tb, 1), lambda i: (i, 0)),              # condition
            pl.BlockSpec((tb, LATENT), lambda i: (i, 0)),         # eps
            pl.BlockSpec((K_IM, NWIDE), lambda i: (0, 0)),        # conv group weight (bf16)
            pl.BlockSpec((1, NWIDE), lambda i: (0, 0)),           # conv group bias
            pl.BlockSpec((NG, NWIDE, HID), lambda i: (0, 0, 0)),  # fc1 weight grouped (bf16)
            pl.BlockSpec((1, HID), lambda i: (0, 0)),             # fc1 bias
            pl.BlockSpec((HID, HEAD_PAD), lambda i: (0, 0)),      # head weight (padded)
            pl.BlockSpec((1, HEAD_PAD), lambda i: (0, 0)),        # head bias (padded)
            pl.BlockSpec((LATENT, HID), lambda i: (0, 0)),        # dec fc1 (z part)
            pl.BlockSpec((1, HID), lambda i: (0, 0)),             # dec fc1 (cond col)
            pl.BlockSpec((1, HID), lambda i: (0, 0)),             # dec fc1 bias
            pl.BlockSpec((HID, OUT_PAD), lambda i: (0, 0)),       # dec fc2 weight (bf16)
            pl.BlockSpec((1, OUT_PAD), lambda i: (0, 0)),         # dec fc2 bias
        ],
        out_specs=(
            pl.BlockSpec((tb, OUT_PAD), lambda i: (i, 0)),
            pl.BlockSpec((tb, HEAD_PAD), lambda i: (i, 0)),
        ),
        compiler_params=pltpu.CompilerParams(dimension_semantics=("parallel",)),
    )(xg, condition, eps,
      params["w8"], params["b8"], params["w1"], params["b1"],
      params["w2"], params["b2"], params["wd1z"], params["wd1c"],
      params["bd1"], params["wd2"], params["bd2"])

    recon = recon_pad[:B, :OUT_FLAT].reshape(B, SEQ, CIN)   # matches torch .view(-1,150,4)
    mean = mlv[:B, :LATENT]
    logvar = mlv[:B, LATENT:2 * LATENT]
    return recon, mean, logvar


# ------------------------------------------------------ parameter creation
def init_params(key):
    keys = jax.random.split(key, 10)

    def rnd(k, shape, scale=0.05):
        return (scale * jax.random.normal(k, shape)).astype(jnp.float32)

    # PyTorch-layout parameters first (documents exactly how real checkpoint
    # weights would be plugged in), then convert to kernel layouts.
    w_conv_t = rnd(keys[0], (CCONV, CIN, 3))     # Conv1d.weight (out, in, k)
    b_conv_t = rnd(keys[1], (CCONV,))
    w1_t = rnd(keys[2], (HID, FLAT))             # Linear(32*150, 64).weight
    b1_t = rnd(keys[3], (HID,))
    w2_t = rnd(keys[4], (2 * LATENT, HID))       # Linear(64, 2*latent).weight
    b2_t = rnd(keys[5], (2 * LATENT,))
    wd1_t = rnd(keys[6], (HID, LATENT + 1))      # Linear(latent+1, 64).weight
    bd1_t = rnd(keys[7], (HID,))
    wd2_t = rnd(keys[8], (OUT_FLAT, HID))        # Linear(64, 150*4).weight
    bd2_t = rnd(keys[9], (OUT_FLAT,))

    # --- conv group weight: 40 im2col features -> 8*32 conv outputs ----------
    # column dt*32+co of group g is conv output (t=8g+dt, channel co); im2col
    # feature i*4+ci is input time 8g-1+i channel ci, so the conv tap is
    # k = i-dt (zero outside 0..2).
    w8 = jnp.zeros((K_IM, NWIDE), jnp.float32)
    for dt in range(GROUP):
        for k in range(3):
            i = dt + k
            w8 = w8.at[i * CIN:(i + 1) * CIN,
                       dt * CCONV:(dt + 1) * CCONV].set(jnp.transpose(w_conv_t[:, :, k]))
    b8 = jnp.tile(b_conv_t.reshape(1, CCONV), (1, GROUP))          # (1, 256)

    # --- fc1 weight regrouped to (NG, 256, HID): row dt*32+co of group g is
    # PyTorch flatten index co*150 + (8g+dt); rows for padded t in {150,151}
    # are zero so the (bias-only) conv outputs there contribute nothing.
    w1_cts = w1_t.reshape(HID, CCONV, SEQ)                         # [j, co, t]
    w1_cts = jnp.pad(w1_cts, ((0, 0), (0, 0), (0, SEQ_PAD - SEQ)))
    w1_k = jnp.transpose(w1_cts.reshape(HID, CCONV, NG, GROUP),
                         (2, 3, 1, 0)).reshape(NG, NWIDE, HID)

    # --- mean|logvar head padded to a lane-dense 128-wide output -------------
    w2_k = jnp.zeros((HID, HEAD_PAD), jnp.float32).at[:, :2 * LATENT].set(jnp.transpose(w2_t))
    b2_k = jnp.zeros((1, HEAD_PAD), jnp.float32).at[:, :2 * LATENT].set(b2_t)

    # --- decoder fc2 zero-padded to the lane-dense 640-wide recon slab -------
    wd2_k = jnp.zeros((HID, OUT_PAD), jnp.float32).at[:, :OUT_FLAT].set(jnp.transpose(wd2_t))
    bd2_k = jnp.zeros((1, OUT_PAD), jnp.float32).at[:, :OUT_FLAT].set(bd2_t.reshape(1, OUT_FLAT))

    return {
        "w8": w8.astype(jnp.bfloat16),           # (40, 256) conv group weight
        "b8": b8,                                # (1, 256)
        "w1": w1_k.astype(jnp.bfloat16),         # (19, 256, 64) big weight -> bf16
        "b1": b1_t.reshape(1, HID),
        "w2": w2_k,                              # (64, 128) padded head
        "b2": b2_k,                              # (1, 128)
        "wd1z": jnp.transpose(wd1_t[:, :LATENT]),   # (8, 64)
        "wd1c": jnp.transpose(wd1_t[:, LATENT:]),   # (1, 64)
        "bd1": bd1_t.reshape(1, HID),
        "wd2": wd2_k.astype(jnp.bfloat16),       # (64, 640) big weight -> bf16
        "bd2": bd2_k,                            # (1, 640)
    }


if __name__ == "__main__":
    key = jax.random.PRNGKey(0)
    kx, kc, ke, kp = jax.random.split(key, 4)

    B = 2
    x = jax.random.normal(kx, (B, SEQ, CIN), jnp.float32)        # (B, 150, 4)
    condition = jax.random.normal(kc, (B, 1), jnp.float32)       # (B, 1)
    # torch.randn_like(mean) equivalent: standard-normal noise supplied from
    # the host RNG so the kernel stays deterministic.
    eps = jax.random.normal(ke, (B, LATENT), jnp.float32)        # (B, latent)

    params = init_params(kp)

    recon, mean, logvar = jax.jit(cvae_forward)(x, condition, eps, params)
    jax.block_until_ready((recon, mean, logvar))

    assert recon.shape == (B, SEQ, CIN)
    assert mean.shape == (B, LATENT)
    assert logvar.shape == (B, LATENT)
    print("KERNEL_OK")
</pallas_src>

<mosaic_0001>
module attributes {stable_mosaic.version = 11 : i64} {
  func.func @cvae_kernel(%arg0: i32, %arg1: memref<19x2x40xbf16, #tpu.memory_space<vmem>>, %arg2: memref<2x1xf32, #tpu.memory_space<vmem>>, %arg3: memref<2x8xf32, #tpu.memory_space<vmem>>, %arg4: memref<40x256xbf16, #tpu.memory_space<vmem>>, %arg5: memref<1x256xf32, #tpu.memory_space<vmem>>, %arg6: memref<19x256x64xbf16, #tpu.memory_space<vmem>>, %arg7: memref<1x64xf32, #tpu.memory_space<vmem>>, %arg8: memref<64x128xf32, #tpu.memory_space<vmem>>, %arg9: memref<1x128xf32, #tpu.memory_space<vmem>>, %arg10: memref<8x64xf32, #tpu.memory_space<vmem>>, %arg11: memref<1x64xf32, #tpu.memory_space<vmem>>, %arg12: memref<1x64xf32, #tpu.memory_space<vmem>>, %arg13: memref<64x640xbf16, #tpu.memory_space<vmem>>, %arg14: memref<1x640xf32, #tpu.memory_space<vmem>>, %arg15: memref<2x640xf32, #tpu.memory_space<vmem>>, %arg16: memref<2x128xf32, #tpu.memory_space<vmem>>) attributes {dimension_semantics = [#tpu.dimension_semantics<parallel>], iteration_bounds = array<i64: 1>, scalar_prefetch = 0 : i64, scratch_operands = 0 : i64, tpu.core_type = #tpu.core_type<tc>, window_params = [{transform_indices = @transform_0, window_bounds = array<i64: 19, 2, 40>}, {transform_indices = @transform_1, window_bounds = array<i64: 2, 1>}, {transform_indices = @transform_2, window_bounds = array<i64: 2, 8>}, {pipeline_mode = #tpu.pipeline_mode<synchronous>, transform_indices = @transform_3, window_bounds = array<i64: 40, 256>}, {pipeline_mode = #tpu.pipeline_mode<synchronous>, transform_indices = @transform_4, window_bounds = array<i64: 1, 256>}, {pipeline_mode = #tpu.pipeline_mode<synchronous>, transform_indices = @transform_5, window_bounds = array<i64: 19, 256, 64>}, {pipeline_mode = #tpu.pipeline_mode<synchronous>, transform_indices = @transform_6, window_bounds = array<i64: 1, 64>}, {pipeline_mode = #tpu.pipeline_mode<synchronous>, transform_indices = @transform_7, window_bounds = array<i64: 64, 128>}, {pipeline_mode = #tpu.pipeline_mode<synchronous>, transform_indices = @transform_8, window_bounds = array<i64: 1, 128>}, {pipeline_mode = #tpu.pipeline_mode<synchronous>, transform_indices = @transform_9, window_bounds = array<i64: 8, 64>}, {pipeline_mode = #tpu.pipeline_mode<synchronous>, transform_indices = @transform_10, window_bounds = array<i64: 1, 64>}, {pipeline_mode = #tpu.pipeline_mode<synchronous>, transform_indices = @transform_11, window_bounds = array<i64: 1, 64>}, {pipeline_mode = #tpu.pipeline_mode<synchronous>, transform_indices = @transform_12, window_bounds = array<i64: 64, 640>}, {pipeline_mode = #tpu.pipeline_mode<synchronous>, transform_indices = @transform_13, window_bounds = array<i64: 1, 640>}, {transform_indices = @transform_14, window_bounds = array<i64: 2, 640>}, {transform_indices = @transform_15, window_bounds = array<i64: 2, 128>}]} {
    %c0 = arith.constant 0 : index
    %c0_0 = arith.constant 0 : index
    %0 = vector.load %arg4[%c0, %c0_0] : memref<40x256xbf16, #tpu.memory_space<vmem>>, vector<40x256xbf16>
    %c0_1 = arith.constant 0 : index
    %c0_2 = arith.constant 0 : index
    %1 = vector.load %arg5[%c0_1, %c0_2] : memref<1x256xf32, #tpu.memory_space<vmem>>, vector<1x256xf32>
    %cst = arith.constant 0.000000e+00 : f32
    %2 = vector.broadcast %cst : f32 to vector<2x64xf32>
    %c0_3 = arith.constant 0 : index
    %c0_4 = arith.constant 0 : index
    %c0_5 = arith.constant 0 : index
    %3 = vector.load %arg1[%c0_3, %c0_4, %c0_5] : memref<19x2x40xbf16, #tpu.memory_space<vmem>>, vector<1x2x40xbf16>
    %4 = vector.shape_cast %3 : vector<1x2x40xbf16> to vector<2x40xbf16>
    %cst_6 = arith.constant dense<0.000000e+00> : vector<2x256xf32>
    %5 = tpu.matmul %4, %0, %cst_6 {dimension_numbers = #tpu.dot_dimension_numbers<[1], [0], [0], [1], [0, 0, 1, 1], [], []>} : vector<2x40xbf16>, vector<40x256xbf16>, vector<2x256xf32> -> vector<2x256xf32>
    %6 = vector.broadcast %1 : vector<1x256xf32> to vector<2x256xf32>
    %7 = arith.addf %5, %6 : vector<2x256xf32>
    %cst_7 = arith.constant 0.000000e+00 : f32
    %8 = vector.broadcast %cst_7 : f32 to vector<2x256xf32>
    %9 = arith.maximumf %7, %8 : vector<2x256xf32>
    %10 = arith.truncf %9 : vector<2x256xf32> to vector<2x256xbf16>
    %c0_8 = arith.constant 0 : index
    %c0_9 = arith.constant 0 : index
    %c0_10 = arith.constant 0 : index
    %11 = vector.load %arg6[%c0_8, %c0_9, %c0_10] : memref<19x256x64xbf16, #tpu.memory_space<vmem>>, vector<1x256x64xbf16>
    %12 = vector.shape_cast %11 : vector<1x256x64xbf16> to vector<256x64xbf16>
    %cst_11 = arith.constant dense<0.000000e+00> : vector<2x64xf32>
    %13 = tpu.matmul %10, %12, %cst_11 {dimension_numbers = #tpu.dot_dimension_numbers<[1], [0], [0], [1], [0, 0, 1, 1], [], []>} : vector<2x256xbf16>, vector<256x64xbf16>, vector<2x64xf32> -> vector<2x64xf32>
    %14 = arith.addf %2, %13 : vector<2x64xf32>
    %c1 = arith.constant 1 : index
    %c0_12 = arith.constant 0 : index
    %c0_13 = arith.constant 0 : index
    %15 = vector.load %arg1[%c1, %c0_12, %c0_13] : memref<19x2x40xbf16, #tpu.memory_space<vmem>>, vector<1x2x40xbf16>
    %16 = vector.shape_cast %15 : vector<1x2x40xbf16> to vector<2x40xbf16>
    %cst_14 = arith.constant dense<0.000000e+00> : vector<2x256xf32>
    %17 = tpu.matmul %16, %0, %cst_14 {dimension_numbers = #tpu.dot_dimension_numbers<[1], [0], [0], [1], [0, 0, 1, 1], [], []>} : vector<2x40xbf16>, vector<40x256xbf16>, vector<2x256xf32> -> vector<2x256xf32>
    %18 = vector.broadcast %1 : vector<1x256xf32> to vector<2x256xf32>
    %19 = arith.addf %17, %18 : vector<2x256xf32>
    %cst_15 = arith.constant 0.000000e+00 : f32
    %20 = vector.broadcast %cst_15 : f32 to vector<2x256xf32>
    %21 = arith.maximumf %19, %20 : vector<2x256xf32>
    %22 = arith.truncf %21 : vector<2x256xf32> to vector<2x256xbf16>
    %c1_16 = arith.constant 1 : index
    %c0_17 = arith.constant 0 : index
    %c0_18 = arith.constant 0 : index
    %23 = vector.load %arg6[%c1_16, %c0_17, %c0_18] : memref<19x256x64xbf16, #tpu.memory_space<vmem>>, vector<1x256x64xbf16>
    %24 = vector.shape_cast %23 : vector<1x256x64xbf16> to vector<256x64xbf16>
    %cst_19 = arith.constant dense<0.000000e+00> : vector<2x64xf32>
    %25 = tpu.matmul %22, %24, %cst_19 {dimension_numbers = #tpu.dot_dimension_numbers<[1], [0], [0], [1], [0, 0, 1, 1], [], []>} : vector<2x256xbf16>, vector<256x64xbf16>, vector<2x64xf32> -> vector<2x64xf32>
    %26 = arith.addf %14, %25 : vector<2x64xf32>
    %c2 = arith.constant 2 : index
    %c0_20 = arith.constant 0 : index
    %c0_21 = arith.constant 0 : index
    %27 = vector.load %arg1[%c2, %c0_20, %c0_21] : memref<19x2x40xbf16, #tpu.memory_space<vmem>>, vector<1x2x40xbf16>
    %28 = vector.shape_cast %27 : vector<1x2x40xbf16> to vector<2x40xbf16>
    %cst_22 = arith.constant dense<0.000000e+00> : vector<2x256xf32>
    %29 = tpu.matmul %28, %0, %cst_22 {dimension_numbers = #tpu.dot_dimension_numbers<[1], [0], [0], [1], [0, 0, 1, 1], [], []>} : vector<2x40xbf16>, vector<40x256xbf16>, vector<2x256xf32> -> vector<2x256xf32>
    %30 = vector.broadcast %1 : vector<1x256xf32> to vector<2x256xf32>
    %31 = arith.addf %29, %30 : vector<2x256xf32>
    %cst_23 = arith.constant 0.000000e+00 : f32
    %32 = vector.broadcast %cst_23 : f32 to vector<2x256xf32>
    %33 = arith.maximumf %31, %32 : vector<2x256xf32>
    %34 = arith.truncf %33 : vector<2x256xf32> to vector<2x256xbf16>
    %c2_24 = arith.constant 2 : index
    %c0_25 = arith.constant 0 : index
    %c0_26 = arith.constant 0 : index
    %35 = vector.load %arg6[%c2_24, %c0_25, %c0_26] : memref<19x256x64xbf16, #tpu.memory_space<vmem>>, vector<1x256x64xbf16>
    %36 = vector.shape_cast %35 : vector<1x256x64xbf16> to vector<256x64xbf16>
    %cst_27 = arith.constant dense<0.000000e+00> : vector<2x64xf32>
    %37 = tpu.matmul %34, %36, %cst_27 {dimension_numbers = #tpu.dot_dimension_numbers<[1], [0], [0], [1], [0, 0, 1, 1], [], []>} : vector<2x256xbf16>, vector<256x64xbf16>, vector<2x64xf32> -> vector<2x64xf32>
    %38 = arith.addf %26, %37 : vector<2x64xf32>
    %c3 = arith.constant 3 : index
    %c0_28 = arith.constant 0 : index
    %c0_29 = arith.constant 0 : index
    %39 = vector.load %arg1[%c3, %c0_28, %c0_29] : memref<19x2x40xbf16, #tpu.memory_space<vmem>>, vector<1x2x40xbf16>
    %40 = vector.shape_cast %39 : vector<1x2x40xbf16> to vector<2x40xbf16>
    %cst_30 = arith.constant dense<0.000000e+00> : vector<2x256xf32>
    %41 = tpu.matmul %40, %0, %cst_30 {dimension_numbers = #tpu.dot_dimension_numbers<[1], [0], [0], [1], [0, 0, 1, 1], [], []>} : vector<2x40xbf16>, vector<40x256xbf16>, vector<2x256xf32> -> vector<2x256xf32>
    %42 = vector.broadcast %1 : vector<1x256xf32> to vector<2x256xf32>
    %43 = arith.addf %41, %42 : vector<2x256xf32>
    %cst_31 = arith.constant 0.000000e+00 : f32
    %44 = vector.broadcast %cst_31 : f32 to vector<2x256xf32>
    %45 = arith.maximumf %43, %44 : vector<2x256xf32>
    %46 = arith.truncf %45 : vector<2x256xf32> to vector<2x256xbf16>
    %c3_32 = arith.constant 3 : index
    %c0_33 = arith.constant 0 : index
    %c0_34 = arith.constant 0 : index
    %47 = vector.load %arg6[%c3_32, %c0_33, %c0_34] : memref<19x256x64xbf16, #tpu.memory_space<vmem>>, vector<1x256x64xbf16>
    %48 = vector.shape_cast %47 : vector<1x256x64xbf16> to vector<256x64xbf16>
    %cst_35 = arith.constant dense<0.000000e+00> : vector<2x64xf32>
    %49 = tpu.matmul %46, %48, %cst_35 {dimension_numbers = #tpu.dot_dimension_numbers<[1], [0], [0], [1], [0, 0, 1, 1], [], []>} : vector<2x256xbf16>, vector<256x64xbf16>, vector<2x64xf32> -> vector<2x64xf32>
    %50 = arith.addf %38, %49 : vector<2x64xf32>
    %c4 = arith.constant 4 : index
    %c0_36 = arith.constant 0 : index
    %c0_37 = arith.constant 0 : index
    %51 = vector.load %arg1[%c4, %c0_36, %c0_37] : memref<19x2x40xbf16, #tpu.memory_space<vmem>>, vector<1x2x40xbf16>
    %52 = vector.shape_cast %51 : vector<1x2x40xbf16> to vector<2x40xbf16>
    %cst_38 = arith.constant dense<0.000000e+00> : vector<2x256xf32>
    %53 = tpu.matmul %52, %0, %cst_38 {dimension_numbers = #tpu.dot_dimension_numbers<[1], [0], [0], [1], [0, 0, 1, 1], [], []>} : vector<2x40xbf16>, vector<40x256xbf16>, vector<2x256xf32> -> vector<2x256xf32>
    %54 = vector.broadcast %1 : vector<1x256xf32> to vector<2x256xf32>
    %55 = arith.addf %53, %54 : vector<2x256xf32>
    %cst_39 = arith.constant 0.000000e+00 : f32
    %56 = vector.broadcast %cst_39 : f32 to vector<2x256xf32>
    %57 = arith.maximumf %55, %56 : vector<2x256xf32>
    %58 = arith.truncf %57 : vector<2x256xf32> to vector<2x256xbf16>
    %c4_40 = arith.constant 4 : index
    %c0_41 = arith.constant 0 : index
    %c0_42 = arith.constant 0 : index
    %59 = vector.load %arg6[%c4_40, %c0_41, %c0_42] : memref<19x256x64xbf16, #tpu.memory_space<vmem>>, vector<1x256x64xbf16>
    %60 = vector.shape_cast %59 : vector<1x256x64xbf16> to vector<256x64xbf16>
    %cst_43 = arith.constant dense<0.000000e+00> : vector<2x64xf32>
    %61 = tpu.matmul %58, %60, %cst_43 {dimension_numbers = #tpu.dot_dimension_numbers<[1], [0], [0], [1], [0, 0, 1, 1], [], []>} : vector<2x256xbf16>, vector<256x64xbf16>, vector<2x64xf32> -> vector<2x64xf32>
    %62 = arith.addf %50, %61 : vector<2x64xf32>
    %c5 = arith.constant 5 : index
    %c0_44 = arith.constant 0 : index
    %c0_45 = arith.constant 0 : index
    %63 = vector.load %arg1[%c5, %c0_44, %c0_45] : memref<19x2x40xbf16, #tpu.memory_space<vmem>>, vector<1x2x40xbf16>
    %64 = vector.shape_cast %63 : vector<1x2x40xbf16> to vector<2x40xbf16>
    %cst_46 = arith.constant dense<0.000000e+00> : vector<2x256xf32>
    %65 = tpu.matmul %64, %0, %cst_46 {dimension_numbers = #tpu.dot_dimension_numbers<[1], [0], [0], [1], [0, 0, 1, 1], [], []>} : vector<2x40xbf16>, vector<40x256xbf16>, vector<2x256xf32> -> vector<2x256xf32>
    %66 = vector.broadcast %1 : vector<1x256xf32> to vector<2x256xf32>
    %67 = arith.addf %65, %66 : vector<2x256xf32>
    %cst_47 = arith.constant 0.000000e+00 : f32
    %68 = vector.broadcast %cst_47 : f32 to vector<2x256xf32>
    %69 = arith.maximumf %67, %68 : vector<2x256xf32>
    %70 = arith.truncf %69 : vector<2x256xf32> to vector<2x256xbf16>
    %c5_48 = arith.constant 5 : index
    %c0_49 = arith.constant 0 : index
    %c0_50 = arith.constant 0 : index
    %71 = vector.load %arg6[%c5_48, %c0_49, %c0_50] : memref<19x256x64xbf16, #tpu.memory_space<vmem>>, vector<1x256x64xbf16>
    %72 = vector.shape_cast %71 : vector<1x256x64xbf16> to vector<256x64xbf16>
    %cst_51 = arith.constant dense<0.000000e+00> : vector<2x64xf32>
    %73 = tpu.matmul %70, %72, %cst_51 {dimension_numbers = #tpu.dot_dimension_numbers<[1], [0], [0], [1], [0, 0, 1, 1], [], []>} : vector<2x256xbf16>, vector<256x64xbf16>, vector<2x64xf32> -> vector<2x64xf32>
    %74 = arith.addf %62, %73 : vector<2x64xf32>
    %c6 = arith.constant 6 : index
    %c0_52 = arith.constant 0 : index
    %c0_53 = arith.constant 0 : index
    %75 = vector.load %arg1[%c6, %c0_52, %c0_53] : memref<19x2x40xbf16, #tpu.memory_space<vmem>>, vector<1x2x40xbf16>
    %76 = vector.shape_cast %75 : vector<1x2x40xbf16> to vector<2x40xbf16>
    %cst_54 = arith.constant dense<0.000000e+00> : vector<2x256xf32>
    %77 = tpu.matmul %76, %0, %cst_54 {dimension_numbers = #tpu.dot_dimension_numbers<[1], [0], [0], [1], [0, 0, 1, 1], [], []>} : vector<2x40xbf16>, vector<40x256xbf16>, vector<2x256xf32> -> vector<2x256xf32>
    %78 = vector.broadcast %1 : vector<1x256xf32> to vector<2x256xf32>
    %79 = arith.addf %77, %78 : vector<2x256xf32>
    %cst_55 = arith.constant 0.000000e+00 : f32
    %80 = vector.broadcast %cst_55 : f32 to vector<2x256xf32>
    %81 = arith.maximumf %79, %80 : vector<2x256xf32>
    %82 = arith.truncf %81 : vector<2x256xf32> to vector<2x256xbf16>
    %c6_56 = arith.constant 6 : index
    %c0_57 = arith.constant 0 : index
    %c0_58 = arith.constant 0 : index
    %83 = vector.load %arg6[%c6_56, %c0_57, %c0_58] : memref<19x256x64xbf16, #tpu.memory_space<vmem>>, vector<1x256x64xbf16>
    %84 = vector.shape_cast %83 : vector<1x256x64xbf16> to vector<256x64xbf16>
    %cst_59 = arith.constant dense<0.000000e+00> : vector<2x64xf32>
    %85 = tpu.matmul %82, %84, %cst_59 {dimension_numbers = #tpu.dot_dimension_numbers<[1], [0], [0], [1], [0, 0, 1, 1], [], []>} : vector<2x256xbf16>, vector<256x64xbf16>, vector<2x64xf32> -> vector<2x64xf32>
    %86 = arith.addf %74, %85 : vector<2x64xf32>
    %c7 = arith.constant 7 : index
    %c0_60 = arith.constant 0 : index
    %c0_61 = arith.constant 0 : index
    %87 = vector.load %arg1[%c7, %c0_60, %c0_61] : memref<19x2x40xbf16, #tpu.memory_space<vmem>>, vector<1x2x40xbf16>
    %88 = vector.shape_cast %87 : vector<1x2x40xbf16> to vector<2x40xbf16>
    %cst_62 = arith.constant dense<0.000000e+00> : vector<2x256xf32>
    %89 = tpu.matmul %88, %0, %cst_62 {dimension_numbers = #tpu.dot_dimension_numbers<[1], [0], [0], [1], [0, 0, 1, 1], [], []>} : vector<2x40xbf16>, vector<40x256xbf16>, vector<2x256xf32> -> vector<2x256xf32>
    %90 = vector.broadcast %1 : vector<1x256xf32> to vector<2x256xf32>
    %91 = arith.addf %89, %90 : vector<2x256xf32>
    %cst_63 = arith.constant 0.000000e+00 : f32
    %92 = vector.broadcast %cst_63 : f32 to vector<2x256xf32>
    %93 = arith.maximumf %91, %92 : vector<2x256xf32>
    %94 = arith.truncf %93 : vector<2x256xf32> to vector<2x256xbf16>
    %c7_64 = arith.constant 7 : index
    %c0_65 = arith.constant 0 : index
    %c0_66 = arith.constant 0 : index
    %95 = vector.load %arg6[%c7_64, %c0_65, %c0_66] : memref<19x256x64xbf16, #tpu.memory_space<vmem>>, vector<1x256x64xbf16>
    %96 = vector.shape_cast %95 : vector<1x256x64xbf16> to vector<256x64xbf16>
    %cst_67 = arith.constant dense<0.000000e+00> : vector<2x64xf32>
    %97 = tpu.matmul %94, %96, %cst_67 {dimension_numbers = #tpu.dot_dimension_numbers<[1], [0], [0], [1], [0, 0, 1, 1], [], []>} : vector<2x256xbf16>, vector<256x64xbf16>, vector<2x64xf32> -> vector<2x64xf32>
    %98 = arith.addf %86, %97 : vector<2x64xf32>
    %c8 = arith.constant 8 : index
    %c0_68 = arith.constant 0 : index
    %c0_69 = arith.constant 0 : index
    %99 = vector.load %arg1[%c8, %c0_68, %c0_69] : memref<19x2x40xbf16, #tpu.memory_space<vmem>>, vector<1x2x40xbf16>
    %100 = vector.shape_cast %99 : vector<1x2x40xbf16> to vector<2x40xbf16>
    %cst_70 = arith.constant dense<0.000000e+00> : vector<2x256xf32>
    %101 = tpu.matmul %100, %0, %cst_70 {dimension_numbers = #tpu.dot_dimension_numbers<[1], [0], [0], [1], [0, 0, 1, 1], [], []>} : vector<2x40xbf16>, vector<40x256xbf16>, vector<2x256xf32> -> vector<2x256xf32>
    %102 = vector.broadcast %1 : vector<1x256xf32> to vector<2x256xf32>
    %103 = arith.addf %101, %102 : vector<2x256xf32>
    %cst_71 = arith.constant 0.000000e+00 : f32
    %104 = vector.broadcast %cst_71 : f32 to vector<2x256xf32>
    %105 = arith.maximumf %103, %104 : vector<2x256xf32>
    %106 = arith.truncf %105 : vector<2x256xf32> to vector<2x256xbf16>
    %c8_72 = arith.constant 8 : index
    %c0_73 = arith.constant 0 : index
    %c0_74 = arith.constant 0 : index
    %107 = vector.load %arg6[%c8_72, %c0_73, %c0_74] : memref<19x256x64xbf16, #tpu.memory_space<vmem>>, vector<1x256x64xbf16>
    %108 = vector.shape_cast %107 : vector<1x256x64xbf16> to vector<256x64xbf16>
    %cst_75 = arith.constant dense<0.000000e+00> : vector<2x64xf32>
    %109 = tpu.matmul %106, %108, %cst_75 {dimension_numbers = #tpu.dot_dimension_numbers<[1], [0], [0], [1], [0, 0, 1, 1], [], []>} : vector<2x256xbf16>, vector<256x64xbf16>, vector<2x64xf32> -> vector<2x64xf32>
    %110 = arith.addf %98, %109 : vector<2x64xf32>
    %c9 = arith.constant 9 : index
    %c0_76 = arith.constant 0 : index
    %c0_77 = arith.constant 0 : index
    %111 = vector.load %arg1[%c9, %c0_76, %c0_77] : memref<19x2x40xbf16, #tpu.memory_space<vmem>>, vector<1x2x40xbf16>
    %112 = vector.shape_cast %111 : vector<1x2x40xbf16> to vector<2x40xbf16>
    %cst_78 = arith.constant dense<0.000000e+00> : vector<2x256xf32>
    %113 = tpu.matmul %112, %0, %cst_78 {dimension_numbers = #tpu.dot_dimension_numbers<[1], [0], [0], [1], [0, 0, 1, 1], [], []>} : vector<2x40xbf16>, vector<40x256xbf16>, vector<2x256xf32> -> vector<2x256xf32>
    %114 = vector.broadcast %1 : vector<1x256xf32> to vector<2x256xf32>
    %115 = arith.addf %113, %114 : vector<2x256xf32>
    %cst_79 = arith.constant 0.000000e+00 : f32
    %116 = vector.broadcast %cst_79 : f32 to vector<2x256xf32>
    %117 = arith.maximumf %115, %116 : vector<2x256xf32>
    %118 = arith.truncf %117 : vector<2x256xf32> to vector<2x256xbf16>
    %c9_80 = arith.constant 9 : index
    %c0_81 = arith.constant 0 : index
    %c0_82 = arith.constant 0 : index
    %119 = vector.load %arg6[%c9_80, %c0_81, %c0_82] : memref<19x256x64xbf16, #tpu.memory_space<vmem>>, vector<1x256x64xbf16>
    %120 = vector.shape_cast %119 : vector<1x256x64xbf16> to vector<256x64xbf16>
    %cst_83 = arith.constant dense<0.000000e+00> : vector<2x64xf32>
    %121 = tpu.matmul %118, %120, %cst_83 {dimension_numbers = #tpu.dot_dimension_numbers<[1], [0], [0], [1], [0, 0, 1, 1], [], []>} : vector<2x256xbf16>, vector<256x64xbf16>, vector<2x64xf32> -> vector<2x64xf32>
    %122 = arith.addf %110, %121 : vector<2x64xf32>
    %c10 = arith.constant 10 : index
    %c0_84 = arith.constant 0 : index
    %c0_85 = arith.constant 0 : index
    %123 = vector.load %arg1[%c10, %c0_84, %c0_85] : memref<19x2x40xbf16, #tpu.memory_space<vmem>>, vector<1x2x40xbf16>
    %124 = vector.shape_cast %123 : vector<1x2x40xbf16> to vector<2x40xbf16>
    %cst_86 = arith.constant dense<0.000000e+00> : vector<2x256xf32>
    %125 = tpu.matmul %124, %0, %cst_86 {dimension_numbers = #tpu.dot_dimension_numbers<[1], [0], [0], [1], [0, 0, 1, 1], [], []>} : vector<2x40xbf16>, vector<40x256xbf16>, vector<2x256xf32> -> vector<2x256xf32>
    %126 = vector.broadcast %1 : vector<1x256xf32> to vector<2x256xf32>
    %127 = arith.addf %125, %126 : vector<2x256xf32>
    %cst_87 = arith.constant 0.000000e+00 : f32
    %128 = vector.broadcast %cst_87 : f32 to vector<2x256xf32>
    %129 = arith.maximumf %127, %128 : vector<2x256xf32>
    %130 = arith.truncf %129 : vector<2x256xf32> to vector<2x256xbf16>
    %c10_88 = arith.constant 10 : index
    %c0_89 = arith.constant 0 : index
    %c0_90 = arith.constant 0 : index
    %131 = vector.load %arg6[%c10_88, %c0_89, %c0_90] : memref<19x256x64xbf16, #tpu.memory_space<vmem>>, vector<1x256x64xbf16>
    %132 = vector.shape_cast %131 : vector<1x256x64xbf16> to vector<256x64xbf16>
    %cst_91 = arith.constant dense<0.000000e+00> : vector<2x64xf32>
    %133 = tpu.matmul %130, %132, %cst_91 {dimension_numbers = #tpu.dot_dimension_numbers<[1], [0], [0], [1], [0, 0, 1, 1], [], []>} : vector<2x256xbf16>, vector<256x64xbf16>, vector<2x64xf32> -> vector<2x64xf32>
    %134 = arith.addf %122, %133 : vector<2x64xf32>
    %c11 = arith.constant 11 : index
    %c0_92 = arith.constant 0 : index
    %c0_93 = arith.constant 0 : index
    %135 = vector.load %arg1[%c11, %c0_92, %c0_93] : memref<19x2x40xbf16, #tpu.memory_space<vmem>>, vector<1x2x40xbf16>
    %136 = vector.shape_cast %135 : vector<1x2x40xbf16> to vector<2x40xbf16>
    %cst_94 = arith.constant dense<0.000000e+00> : vector<2x256xf32>
    %137 = tpu.matmul %136, %0, %cst_94 {dimension_numbers = #tpu.dot_dimension_numbers<[1], [0], [0], [1], [0, 0, 1, 1], [], []>} : vector<2x40xbf16>, vector<40x256xbf16>, vector<2x256xf32> -> vector<2x256xf32>
    %138 = vector.broadcast %1 : vector<1x256xf32> to vector<2x256xf32>
    %139 = arith.addf %137, %138 : vector<2x256xf32>
    %cst_95 = arith.constant 0.000000e+00 : f32
    %140 = vector.broadcast %cst_95 : f32 to vector<2x256xf32>
    %141 = arith.maximumf %139, %140 : vector<2x256xf32>
    %142 = arith.truncf %141 : vector<2x256xf32> to vector<2x256xbf16>
    %c11_96 = arith.constant 11 : index
    %c0_97 = arith.constant 0 : index
    %c0_98 = arith.constant 0 : index
    %143 = vector.load %arg6[%c11_96, %c0_97, %c0_98] : memref<19x256x64xbf16, #tpu.memory_space<vmem>>, vector<1x256x64xbf16>
    %144 = vector.shape_cast %143 : vector<1x256x64xbf16> to vector<256x64xbf16>
    %cst_99 = arith.constant dense<0.000000e+00> : vector<2x64xf32>
    %145 = tpu.matmul %142, %144, %cst_99 {dimension_numbers = #tpu.dot_dimension_numbers<[1], [0], [0], [1], [0, 0, 1, 1], [], []>} : vector<2x256xbf16>, vector<256x64xbf16>, vector<2x64xf32> -> vector<2x64xf32>
    %146 = arith.addf %134, %145 : vector<2x64xf32>
    %c12 = arith.constant 12 : index
    %c0_100 = arith.constant 0 : index
    %c0_101 = arith.constant 0 : index
    %147 = vector.load %arg1[%c12, %c0_100, %c0_101] : memref<19x2x40xbf16, #tpu.memory_space<vmem>>, vector<1x2x40xbf16>
    %148 = vector.shape_cast %147 : vector<1x2x40xbf16> to vector<2x40xbf16>
    %cst_102 = arith.constant dense<0.000000e+00> : vector<2x256xf32>
    %149 = tpu.matmul %148, %0, %cst_102 {dimension_numbers = #tpu.dot_dimension_numbers<[1], [0], [0], [1], [0, 0, 1, 1], [], []>} : vector<2x40xbf16>, vector<40x256xbf16>, vector<2x256xf32> -> vector<2x256xf32>
    %150 = vector.broadcast %1 : vector<1x256xf32> to vector<2x256xf32>
    %151 = arith.addf %149, %150 : vector<2x256xf32>
    %cst_103 = arith.constant 0.000000e+00 : f32
    %152 = vector.broadcast %cst_103 : f32 to vector<2x256xf32>
    %153 = arith.maximumf %151, %152 : vector<2x256xf32>
    %154 = arith.truncf %153 : vector<2x256xf32> to vector<2x256xbf16>
    %c12_104 = arith.constant 12 : index
    %c0_105 = arith.constant 0 : index
    %c0_106 = arith.constant 0 : index
    %155 = vector.load %arg6[%c12_104, %c0_105, %c0_106] : memref<19x256x64xbf16, #tpu.memory_space<vmem>>, vector<1x256x64xbf16>
    %156 = vector.shape_cast %155 : vector<1x256x64xbf16> to vector<256x64xbf16>
    %cst_107 = arith.constant dense<0.000000e+00> : vector<2x64xf32>
    %157 = tpu.matmul %154, %156, %cst_107 {dimension_numbers = #tpu.dot_dimension_numbers<[1], [0], [0], [1], [0, 0, 1, 1], [], []>} : vector<2x256xbf16>, vector<256x64xbf16>, vector<2x64xf32> -> vector<2x64xf32>
    %158 = arith.addf %146, %157 : vector<2x64xf32>
    %c13 = arith.constant 13 : index
    %c0_108 = arith.constant 0 : index
    %c0_109 = arith.constant 0 : index
    %159 = vector.load %arg1[%c13, %c0_108, %c0_109] : memref<19x2x40xbf16, #tpu.memory_space<vmem>>, vector<1x2x40xbf16>
    %160 = vector.shape_cast %159 : vector<1x2x40xbf16> to vector<2x40xbf16>
    %cst_110 = arith.constant dense<0.000000e+00> : vector<2x256xf32>
    %161 = tpu.matmul %160, %0, %cst_110 {dimension_numbers = #tpu.dot_dimension_numbers<[1], [0], [0], [1], [0, 0, 1, 1], [], []>} : vector<2x40xbf16>, vector<40x256xbf16>, vector<2x256xf32> -> vector<2x256xf32>
    %162 = vector.broadcast %1 : vector<1x256xf32> to vector<2x256xf32>
    %163 = arith.addf %161, %162 : vector<2x256xf32>
    %cst_111 = arith.constant 0.000000e+00 : f32
    %164 = vector.broadcast %cst_111 : f32 to vector<2x256xf32>
    %165 = arith.maximumf %163, %164 : vector<2x256xf32>
    %166 = arith.truncf %165 : vector<2x256xf32> to vector<2x256xbf16>
    %c13_112 = arith.constant 13 : index
    %c0_113 = arith.constant 0 : index
    %c0_114 = arith.constant 0 : index
    %167 = vector.load %arg6[%c13_112, %c0_113, %c0_114] : memref<19x256x64xbf16, #tpu.memory_space<vmem>>, vector<1x256x64xbf16>
    %168 = vector.shape_cast %167 : vector<1x256x64xbf16> to vector<256x64xbf16>
    %cst_115 = arith.constant dense<0.000000e+00> : vector<2x64xf32>
    %169 = tpu.matmul %166, %168, %cst_115 {dimension_numbers = #tpu.dot_dimension_numbers<[1], [0], [0], [1], [0, 0, 1, 1], [], []>} : vector<2x256xbf16>, vector<256x64xbf16>, vector<2x64xf32> -> vector<2x64xf32>
    %170 = arith.addf %158, %169 : vector<2x64xf32>
    %c14 = arith.constant 14 : index
    %c0_116 = arith.constant 0 : index
    %c0_117 = arith.constant 0 : index
    %171 = vector.load %arg1[%c14, %c0_116, %c0_117] : memref<19x2x40xbf16, #tpu.memory_space<vmem>>, vector<1x2x40xbf16>
    %172 = vector.shape_cast %171 : vector<1x2x40xbf16> to vector<2x40xbf16>
    %cst_118 = arith.constant dense<0.000000e+00> : vector<2x256xf32>
    %173 = tpu.matmul %172, %0, %cst_118 {dimension_numbers = #tpu.dot_dimension_numbers<[1], [0], [0], [1], [0, 0, 1, 1], [], []>} : vector<2x40xbf16>, vector<40x256xbf16>, vector<2x256xf32> -> vector<2x256xf32>
    %174 = vector.broadcast %1 : vector<1x256xf32> to vector<2x256xf32>
    %175 = arith.addf %173, %174 : vector<2x256xf32>
    %cst_119 = arith.constant 0.000000e+00 : f32
    %176 = vector.broadcast %cst_119 : f32 to vector<2x256xf32>
    %177 = arith.maximumf %175, %176 : vector<2x256xf32>
    %178 = arith.truncf %177 : vector<2x256xf32> to vector<2x256xbf16>
    %c14_120 = arith.constant 14 : index
    %c0_121 = arith.constant 0 : index
    %c0_122 = arith.constant 0 : index
    %179 = vector.load %arg6[%c14_120, %c0_121, %c0_122] : memref<19x256x64xbf16, #tpu.memory_space<vmem>>, vector<1x256x64xbf16>
    %180 = vector.shape_cast %179 : vector<1x256x64xbf16> to vector<256x64xbf16>
    %cst_123 = arith.constant dense<0.000000e+00> : vector<2x64xf32>
    %181 = tpu.matmul %178, %180, %cst_123 {dimension_numbers = #tpu.dot_dimension_numbers<[1], [0], [0], [1], [0, 0, 1, 1], [], []>} : vector<2x256xbf16>, vector<256x64xbf16>, vector<2x64xf32> -> vector<2x64xf32>
    %182 = arith.addf %170, %181 : vector<2x64xf32>
    %c15 = arith.constant 15 : index
    %c0_124 = arith.constant 0 : index
    %c0_125 = arith.constant 0 : index
    %183 = vector.load %arg1[%c15, %c0_124, %c0_125] : memref<19x2x40xbf16, #tpu.memory_space<vmem>>, vector<1x2x40xbf16>
    %184 = vector.shape_cast %183 : vector<1x2x40xbf16> to vector<2x40xbf16>
    %cst_126 = arith.constant dense<0.000000e+00> : vector<2x256xf32>
    %185 = tpu.matmul %184, %0, %cst_126 {dimension_numbers = #tpu.dot_dimension_numbers<[1], [0], [0], [1], [0, 0, 1, 1], [], []>} : vector<2x40xbf16>, vector<40x256xbf16>, vector<2x256xf32> -> vector<2x256xf32>
    %186 = vector.broadcast %1 : vector<1x256xf32> to vector<2x256xf32>
    %187 = arith.addf %185, %186 : vector<2x256xf32>
    %cst_127 = arith.constant 0.000000e+00 : f32
    %188 = vector.broadcast %cst_127 : f32 to vector<2x256xf32>
    %189 = arith.maximumf %187, %188 : vector<2x256xf32>
    %190 = arith.truncf %189 : vector<2x256xf32> to vector<2x256xbf16>
    %c15_128 = arith.constant 15 : index
    %c0_129 = arith.constant 0 : index
    %c0_130 = arith.constant 0 : index
    %191 = vector.load %arg6[%c15_128, %c0_129, %c0_130] : memref<19x256x64xbf16, #tpu.memory_space<vmem>>, vector<1x256x64xbf16>
    %192 = vector.shape_cast %191 : vector<1x256x64xbf16> to vector<256x64xbf16>
    %cst_131 = arith.constant dense<0.000000e+00> : vector<2x64xf32>
    %193 = tpu.matmul %190, %192, %cst_131 {dimension_numbers = #tpu.dot_dimension_numbers<[1], [0], [0], [1], [0, 0, 1, 1], [], []>} : vector<2x256xbf16>, vector<256x64xbf16>, vector<2x64xf32> -> vector<2x64xf32>
    %194 = arith.addf %182, %193 : vector<2x64xf32>
    %c16 = arith.constant 16 : index
    %c0_132 = arith.constant 0 : index
    %c0_133 = arith.constant 0 : index
    %195 = vector.load %arg1[%c16, %c0_132, %c0_133] : memref<19x2x40xbf16, #tpu.memory_space<vmem>>, vector<1x2x40xbf16>
    %196 = vector.shape_cast %195 : vector<1x2x40xbf16> to vector<2x40xbf16>
    %cst_134 = arith.constant dense<0.000000e+00> : vector<2x256xf32>
    %197 = tpu.matmul %196, %0, %cst_134 {dimension_numbers = #tpu.dot_dimension_numbers<[1], [0], [0], [1], [0, 0, 1, 1], [], []>} : vector<2x40xbf16>, vector<40x256xbf16>, vector<2x256xf32> -> vector<2x256xf32>
    %198 = vector.broadcast %1 : vector<1x256xf32> to vector<2x256xf32>
    %199 = arith.addf %197, %198 : vector<2x256xf32>
    %cst_135 = arith.constant 0.000000e+00 : f32
    %200 = vector.broadcast %cst_135 : f32 to vector<2x256xf32>
    %201 = arith.maximumf %199, %200 : vector<2x256xf32>
    %202 = arith.truncf %201 : vector<2x256xf32> to vector<2x256xbf16>
    %c16_136 = arith.constant 16 : index
    %c0_137 = arith.constant 0 : index
    %c0_138 = arith.constant 0 : index
    %203 = vector.load %arg6[%c16_136, %c0_137, %c0_138] : memref<19x256x64xbf16, #tpu.memory_space<vmem>>, vector<1x256x64xbf16>
    %204 = vector.shape_cast %203 : vector<1x256x64xbf16> to vector<256x64xbf16>
    %cst_139 = arith.constant dense<0.000000e+00> : vector<2x64xf32>
    %205 = tpu.matmul %202, %204, %cst_139 {dimension_numbers = #tpu.dot_dimension_numbers<[1], [0], [0], [1], [0, 0, 1, 1], [], []>} : vector<2x256xbf16>, vector<256x64xbf16>, vector<2x64xf32> -> vector<2x64xf32>
    %206 = arith.addf %194, %205 : vector<2x64xf32>
    %c17 = arith.constant 17 : index
    %c0_140 = arith.constant 0 : index
    %c0_141 = arith.constant 0 : index
    %207 = vector.load %arg1[%c17, %c0_140, %c0_141] : memref<19x2x40xbf16, #tpu.memory_space<vmem>>, vector<1x2x40xbf16>
    %208 = vector.shape_cast %207 : vector<1x2x40xbf16> to vector<2x40xbf16>
    %cst_142 = arith.constant dense<0.000000e+00> : vector<2x256xf32>
    %209 = tpu.matmul %208, %0, %cst_142 {dimension_numbers = #tpu.dot_dimension_numbers<[1], [0], [0], [1], [0, 0, 1, 1], [], []>} : vector<2x40xbf16>, vector<40x256xbf16>, vector<2x256xf32> -> vector<2x256xf32>
    %210 = vector.broadcast %1 : vector<1x256xf32> to vector<2x256xf32>
    %211 = arith.addf %209, %210 : vector<2x256xf32>
    %cst_143 = arith.constant 0.000000e+00 : f32
    %212 = vector.broadcast %cst_143 : f32 to vector<2x256xf32>
    %213 = arith.maximumf %211, %212 : vector<2x256xf32>
    %214 = arith.truncf %213 : vector<2x256xf32> to vector<2x256xbf16>
    %c17_144 = arith.constant 17 : index
    %c0_145 = arith.constant 0 : index
    %c0_146 = arith.constant 0 : index
    %215 = vector.load %arg6[%c17_144, %c0_145, %c0_146] : memref<19x256x64xbf16, #tpu.memory_space<vmem>>, vector<1x256x64xbf16>
    %216 = vector.shape_cast %215 : vector<1x256x64xbf16> to vector<256x64xbf16>
    %cst_147 = arith.constant dense<0.000000e+00> : vector<2x64xf32>
    %217 = tpu.matmul %214, %216, %cst_147 {dimension_numbers = #tpu.dot_dimension_numbers<[1], [0], [0], [1], [0, 0, 1, 1], [], []>} : vector<2x256xbf16>, vector<256x64xbf16>, vector<2x64xf32> -> vector<2x64xf32>
    %218 = arith.addf %206, %217 : vector<2x64xf32>
    %c18 = arith.constant 18 : index
    %c0_148 = arith.constant 0 : index
    %c0_149 = arith.constant 0 : index
    %219 = vector.load %arg1[%c18, %c0_148, %c0_149] : memref<19x2x40xbf16, #tpu.memory_space<vmem>>, vector<1x2x40xbf16>
    %220 = vector.shape_cast %219 : vector<1x2x40xbf16> to vector<2x40xbf16>
    %cst_150 = arith.constant dense<0.000000e+00> : vector<2x256xf32>
    %221 = tpu.matmul %220, %0, %cst_150 {dimension_numbers = #tpu.dot_dimension_numbers<[1], [0], [0], [1], [0, 0, 1, 1], [], []>} : vector<2x40xbf16>, vector<40x256xbf16>, vector<2x256xf32> -> vector<2x256xf32>
    %222 = vector.broadcast %1 : vector<1x256xf32> to vector<2x256xf32>
    %223 = arith.addf %221, %222 : vector<2x256xf32>
    %cst_151 = arith.constant 0.000000e+00 : f32
    %224 = vector.broadcast %cst_151 : f32 to vector<2x256xf32>
    %225 = arith.maximumf %223, %224 : vector<2x256xf32>
    %226 = arith.truncf %225 : vector<2x256xf32> to vector<2x256xbf16>
    %c18_152 = arith.constant 18 : index
    %c0_153 = arith.constant 0 : index
    %c0_154 = arith.constant 0 : index
    %227 = vector.load %arg6[%c18_152, %c0_153, %c0_154] : memref<19x256x64xbf16, #tpu.memory_space<vmem>>, vector<1x256x64xbf16>
    %228 = vector.shape_cast %227 : vector<1x256x64xbf16> to vector<256x64xbf16>
    %cst_155 = arith.constant dense<0.000000e+00> : vector<2x64xf32>
    %229 = tpu.matmul %226, %228, %cst_155 {dimension_numbers = #tpu.dot_dimension_numbers<[1], [0], [0], [1], [0, 0, 1, 1], [], []>} : vector<2x256xbf16>, vector<256x64xbf16>, vector<2x64xf32> -> vector<2x64xf32>
    %230 = arith.addf %218, %229 : vector<2x64xf32>
    %c0_156 = arith.constant 0 : index
    %c0_157 = arith.constant 0 : index
    %231 = vector.load %arg7[%c0_156, %c0_157] : memref<1x64xf32, #tpu.memory_space<vmem>>, vector<1x64xf32>
    %232 = vector.broadcast %231 : vector<1x64xf32> to vector<2x64xf32>
    %233 = arith.addf %230, %232 : vector<2x64xf32>
    %cst_158 = arith.constant 0.000000e+00 : f32
    %234 = vector.broadcast %cst_158 : f32 to vector<2x64xf32>
    %235 = arith.maximumf %233, %234 : vector<2x64xf32>
    %c0_159 = arith.constant 0 : index
    %c0_160 = arith.constant 0 : index
    %236 = vector.load %arg8[%c0_159, %c0_160] : memref<64x128xf32, #tpu.memory_space<vmem>>, vector<64x128xf32>
    %cst_161 = arith.constant dense<0.000000e+00> : vector<2x128xf32>
    %237 = tpu.matmul %235, %236, %cst_161 {dimension_numbers = #tpu.dot_dimension_numbers<[1], [0], [0], [1], [0, 0, 1, 1], [], []>} : vector<2x64xf32>, vector<64x128xf32>, vector<2x128xf32> -> vector<2x128xf32>
    %c0_162 = arith.constant 0 : index
    %c0_163 = arith.constant 0 : index
    %238 = vector.load %arg9[%c0_162, %c0_163] : memref<1x128xf32, #tpu.memory_space<vmem>>, vector<1x128xf32>
    %239 = vector.broadcast %238 : vector<1x128xf32> to vector<2x128xf32>
    %240 = arith.addf %237, %239 : vector<2x128xf32>
    %241 = vector.extract_strided_slice %240 {offsets = [0, 0], sizes = [2, 8], strides = [1, 1]} : vector<2x128xf32> to vector<2x8xf32>
    %242 = vector.extract_strided_slice %240 {offsets = [0, 8], sizes = [2, 8], strides = [1, 1]} : vector<2x128xf32> to vector<2x8xf32>
    %c0_164 = arith.constant 0 : index
    %c0_165 = arith.constant 0 : index
    %243 = vector.load %arg3[%c0_164, %c0_165] : memref<2x8xf32, #tpu.memory_space<vmem>>, vector<2x8xf32>
    %cst_166 = arith.constant 5.000000e-01 : f32
    %244 = vector.broadcast %cst_166 : f32 to vector<2x8xf32>
    %245 = arith.mulf %244, %242 : vector<2x8xf32>
    %246 = math.exp %245 : vector<2x8xf32>
    %247 = arith.mulf %243, %246 : vector<2x8xf32>
    %248 = arith.addf %247, %241 : vector<2x8xf32>
    %c0_167 = arith.constant 0 : index
    %c0_168 = arith.constant 0 : index
    %249 = vector.load %arg10[%c0_167, %c0_168] : memref<8x64xf32, #tpu.memory_space<vmem>>, vector<8x64xf32>
    %cst_169 = arith.constant dense<0.000000e+00> : vector<2x64xf32>
    %250 = tpu.matmul %248, %249, %cst_169 {dimension_numbers = #tpu.dot_dimension_numbers<[1], [0], [0], [1], [0, 0, 1, 1], [], []>} : vector<2x8xf32>, vector<8x64xf32>, vector<2x64xf32> -> vector<2x64xf32>
    %c0_170 = arith.constant 0 : index
    %c0_171 = arith.constant 0 : index
    %251 = vector.load %arg2[%c0_170, %c0_171] : memref<2x1xf32, #tpu.memory_space<vmem>>, vector<2x1xf32>
    %c0_172 = arith.constant 0 : index
    %c0_173 = arith.constant 0 : index
    %252 = vector.load %arg11[%c0_172, %c0_173] : memref<1x64xf32, #tpu.memory_space<vmem>>, vector<1x64xf32>
    %253 = vector.broadcast %251 : vector<2x1xf32> to vector<2x64xf32>
    %254 = vector.broadcast %252 : vector<1x64xf32> to vector<2x64xf32>
    %255 = arith.mulf %253, %254 : vector<2x64xf32>
    %256 = arith.addf %250, %255 : vector<2x64xf32>
    %c0_174 = arith.constant 0 : index
    %c0_175 = arith.constant 0 : index
    %257 = vector.load %arg12[%c0_174, %c0_175] : memref<1x64xf32, #tpu.memory_space<vmem>>, vector<1x64xf32>
    %258 = vector.broadcast %257 : vector<1x64xf32> to vector<2x64xf32>
    %259 = arith.addf %256, %258 : vector<2x64xf32>
    %cst_176 = arith.constant 0.000000e+00 : f32
    %260 = vector.broadcast %cst_176 : f32 to vector<2x64xf32>
    %261 = arith.maximumf %259, %260 : vector<2x64xf32>
    %262 = arith.truncf %261 : vector<2x64xf32> to vector<2x64xbf16>
    %c0_177 = arith.constant 0 : index
    %c0_178 = arith.constant 0 : index
    %263 = vector.load %arg13[%c0_177, %c0_178] : memref<64x640xbf16, #tpu.memory_space<vmem>>, vector<64x640xbf16>
    %cst_179 = arith.constant dense<0.000000e+00> : vector<2x640xf32>
    %264 = tpu.matmul %262, %263, %cst_179 {dimension_numbers = #tpu.dot_dimension_numbers<[1], [0], [0], [1], [0, 0, 1, 1], [], []>} : vector<2x64xbf16>, vector<64x640xbf16>, vector<2x640xf32> -> vector<2x640xf32>
    %c0_180 = arith.constant 0 : index
    %c0_181 = arith.constant 0 : index
    %265 = vector.load %arg14[%c0_180, %c0_181] : memref<1x640xf32, #tpu.memory_space<vmem>>, vector<1x640xf32>
    %266 = vector.broadcast %265 : vector<1x640xf32> to vector<2x640xf32>
    %267 = arith.addf %264, %266 : vector<2x640xf32>
    %268 = arith.negf %267 : vector<2x640xf32>
    %269 = math.exp %268 : vector<2x640xf32>
    %cst_182 = arith.constant 1.000000e+00 : f32
    %270 = vector.broadcast %cst_182 : f32 to vector<2x640xf32>
    %271 = arith.addf %270, %269 : vector<2x640xf32>
    %272 = arith.divf %270, %271 : vector<2x640xf32>
    %c0_183 = arith.constant 0 : index
    %c0_184 = arith.constant 0 : index
    %273 = vector.load %arg15[%c0_183, %c0_184] : memref<2x640xf32, #tpu.memory_space<vmem>>, vector<2x640xf32>
    tpu.vector_store %arg15[%c0_183, %c0_184], %272 {strides = array<i32>} : memref<2x640xf32, #tpu.memory_space<vmem>>, vector<2x640xf32>,
    %c0_185 = arith.constant 0 : index
    %c0_186 = arith.constant 0 : index
    %274 = vector.load %arg16[%c0_185, %c0_186] : memref<2x128xf32, #tpu.memory_space<vmem>>, vector<2x128xf32>
    tpu.vector_store %arg16[%c0_185, %c0_186], %240 {strides = array<i32>} : memref<2x128xf32, #tpu.memory_space<vmem>>, vector<2x128xf32>,
    return
  }
  func.func @transform_0(%arg0: i32) -> (i32, i32, i32) {
    %c0_i32 = arith.constant 0 : i32
    %c0_i32_0 = arith.constant 0 : i32
    %c0_i32_1 = arith.constant 0 : i32
    return %c0_i32, %arg0, %c0_i32_0 : i32, i32, i32
  }
  func.func @transform_1(%arg0: i32) -> (i32, i32) {
    %c0_i32 = arith.constant 0 : i32
    %c0_i32_0 = arith.constant 0 : i32
    return %arg0, %c0_i32 : i32, i32
  }
  func.func @transform_2(%arg0: i32) -> (i32, i32) {
    %c0_i32 = arith.constant 0 : i32
    %c0_i32_0 = arith.constant 0 : i32
    return %arg0, %c0_i32 : i32, i32
  }
  func.func @transform_3(%arg0: i32) -> (i32, i32) {
    %c0_i32 = arith.constant 0 : i32
    %c0_i32_0 = arith.constant 0 : i32
    %c0_i32_1 = arith.constant 0 : i32
    return %c0_i32, %c0_i32_0 : i32, i32
  }
  func.func @transform_4(%arg0: i32) -> (i32, i32) {
    %c0_i32 = arith.constant 0 : i32
    %c0_i32_0 = arith.constant 0 : i32
    %c0_i32_1 = arith.constant 0 : i32
    return %c0_i32, %c0_i32_0 : i32, i32
  }
  func.func @transform_5(%arg0: i32) -> (i32, i32, i32) {
    %c0_i32 = arith.constant 0 : i32
    %c0_i32_0 = arith.constant 0 : i32
    %c0_i32_1 = arith.constant 0 : i32
    %c0_i32_2 = arith.constant 0 : i32
    return %c0_i32, %c0_i32_0, %c0_i32_1 : i32, i32, i32
  }
  func.func @transform_6(%arg0: i32) -> (i32, i32) {
    %c0_i32 = arith.constant 0 : i32
    %c0_i32_0 = arith.constant 0 : i32
    %c0_i32_1 = arith.constant 0 : i32
    return %c0_i32, %c0_i32_0 : i32, i32
  }
  func.func @transform_7(%arg0: i32) -> (i32, i32) {
    %c0_i32 = arith.constant 0 : i32
    %c0_i32_0 = arith.constant 0 : i32
    %c0_i32_1 = arith.constant 0 : i32
    return %c0_i32, %c0_i32_0 : i32, i32
  }
  func.func @transform_8(%arg0: i32) -> (i32, i32) {
    %c0_i32 = arith.constant 0 : i32
    %c0_i32_0 = arith.constant 0 : i32
    %c0_i32_1 = arith.constant 0 : i32
    return %c0_i32, %c0_i32_0 : i32, i32
  }
  func.func @transform_9(%arg0: i32) -> (i32, i32) {
    %c0_i32 = arith.constant 0 : i32
    %c0_i32_0 = arith.constant 0 : i32
    %c0_i32_1 = arith.constant 0 : i32
    return %c0_i32, %c0_i32_0 : i32, i32
  }
  func.func @transform_10(%arg0: i32) -> (i32, i32) {
    %c0_i32 = arith.constant 0 : i32
    %c0_i32_0 = arith.constant 0 : i32
    %c0_i32_1 = arith.constant 0 : i32
    return %c0_i32, %c0_i32_0 : i32, i32
  }
  func.func @transform_11(%arg0: i32) -> (i32, i32) {
    %c0_i32 = arith.constant 0 : i32
    %c0_i32_0 = arith.constant 0 : i32
    %c0_i32_1 = arith.constant 0 : i32
    return %c0_i32, %c0_i32_0 : i32, i32
  }
  func.func @transform_12(%arg0: i32) -> (i32, i32) {
    %c0_i32 = arith.constant 0 : i32
    %c0_i32_0 = arith.constant 0 : i32
    %c0_i32_1 = arith.constant 0 : i32
    return %c0_i32, %c0_i32_0 : i32, i32
  }
  func.func @transform_13(%arg0: i32) -> (i32, i32) {
    %c0_i32 = arith.constant 0 : i32
    %c0_i32_0 = arith.constant 0 : i32
    %c0_i32_1 = arith.constant 0 : i32
    return %c0_i32, %c0_i32_0 : i32, i32
  }
  func.func @transform_14(%arg0: i32) -> (i32, i32) {
    %c0_i32 = arith.constant 0 : i32
    %c0_i32_0 = arith.constant 0 : i32
    return %arg0, %c0_i32 : i32, i32
  }
  func.func @transform_15(%arg0: i32) -> (i32, i32) {
    %c0_i32 = arith.constant 0 : i32
    %c0_i32_0 = arith.constant 0 : i32
    return %arg0, %c0_i32 : i32, i32
  }
}

</mosaic_0001>

<llo_original>
// kernel: cvae_forward.1
$region0: #{cvae_forward.1}
  #allocation0 [shape = 'u32[]', space=smem, size = 0x4, offset = 0x4, fixed_abs, tag = 'smem constant byte address 0x4 - core index']
  #allocation1 [shape = 'u32[144,128]{1,0:T(1,128)}', space=vmem, size = 0x12000, scoped, tag = 'internal scratch']
  %s0 = inlined_call_operand.vmem [shape: bf16[19,2,40], index: 0, kind: input, shape index: {}]
  %s1 = inlined_call_operand.vmem [shape: f32[2,1], index: 1, kind: input, shape index: {}]
  %s2 = inlined_call_operand.vmem [shape: f32[2,8], index: 2, kind: input, shape index: {}]
  %s3 = inlined_call_operand.vmem [shape: bf16[40,256], index: 3, kind: input, shape index: {}]
  %s4 = inlined_call_operand.vmem [shape: f32[1,256], index: 4, kind: input, shape index: {}]
  %s5 = inlined_call_operand.vmem [shape: bf16[19,256,64], index: 5, kind: input, shape index: {}]
  %s6 = inlined_call_operand.vmem [shape: f32[1,64], index: 6, kind: input, shape index: {}]
  %s7 = inlined_call_operand.vmem [shape: f32[64,128], index: 7, kind: input, shape index: {}]
  %s8 = inlined_call_operand.vmem [shape: f32[1,128], index: 8, kind: input, shape index: {}]
  %s9 = inlined_call_operand.vmem [shape: f32[8,64], index: 9, kind: input, shape index: {}]
  %s10 = inlined_call_operand.vmem [shape: f32[1,64], index: 10, kind: input, shape index: {}]
  %s11 = inlined_call_operand.vmem [shape: f32[1,64], index: 11, kind: input, shape index: {}]
  %s12 = inlined_call_operand.vmem [shape: bf16[64,640], index: 12, kind: input, shape index: {}]
  %s13 = inlined_call_operand.vmem [shape: f32[1,640], index: 13, kind: input, shape index: {}]
  %s14 = inlined_call_operand.vmem [shape: f32[2,640], index: 14, kind: output, shape index: {0}]
  %s15 = inlined_call_operand.vmem [shape: f32[2,128], index: 15, kind: output, shape index: {1}]
  %16 = xla_tuple %s14, %s15
  %s17 = sld [smem:[#allocation0]]
  $region74: #{cvae_forward.1} parent=0
    _
  %s19 = ssub.s32 1, %s17
  %s20 = scalar_select 0, %s19, %s17
  // Predicated region
  $region2: #{cvae_forward.1} parent=0 // pred_check
    _
  $region3: #{cvae_forward.1} parent=0 // pred_check_branch
    %22 = sbr.rel (0) target = $region5
  $region4: #{cvae_forward.1} parent=0 // pred_region
    _
  $region5: #{cvae_forward.1} parent=0 // pred_fallthru
    _
  // Predicated region
  $region6: #{cvae_forward.1} parent=0 // pred_check
    _
  $region7: #{cvae_forward.1} parent=0 // pred_check_branch
    %24 = sbr.rel (0) target = $region9
  $region8: #{cvae_forward.1} parent=0 // pred_region
    _
  $region9: #{cvae_forward.1} parent=0 // pred_fallthru
    _
  // Predicated region
  $region10: #{cvae_forward.1} parent=0 // pred_check
    _
  $region11: #{cvae_forward.1} parent=0 // pred_check_branch
    %26 = sbr.rel (0) target = $region13
  $region12: #{cvae_forward.1} parent=0 // pred_region
    _
  $region13: #{cvae_forward.1} parent=0 // pred_fallthru
    _
  // Predicated region
  $region14: #{cvae_forward.1} parent=0 // pred_check
    _
  $region15: #{cvae_forward.1} parent=0 // pred_check_branch
    %28 = sbr.rel (0) target = $region17
  $region16: #{cvae_forward.1} parent=0 // pred_region
    _
  $region17: #{cvae_forward.1} parent=0 // pred_fallthru
    _
  // Predicated region
  $region18: #{cvae_forward.1} parent=0 // pred_check
    _
  $region19: #{cvae_forward.1} parent=0 // pred_check_branch
    %30 = sbr.rel (0) target = $region21
  $region20: #{cvae_forward.1} parent=0 // pred_region
    _
  $region21: #{cvae_forward.1} parent=0 // pred_fallthru
    _
  // Predicated region
  $region22: #{cvae_forward.1} parent=0 // pred_check
    _
  $region23: #{cvae_forward.1} parent=0 // pred_check_branch
    %32 = sbr.rel (0) target = $region25
  $region24: #{cvae_forward.1} parent=0 // pred_region
    _
  $region25: #{cvae_forward.1} parent=0 // pred_fallthru
    _
  // Predicated region
  $region26: #{cvae_forward.1} parent=0 // pred_check
    _
  $region27: #{cvae_forward.1} parent=0 // pred_check_branch
    %34 = sbr.rel (0) target = $region29
  $region28: #{cvae_forward.1} parent=0 // pred_region
    _
  $region29: #{cvae_forward.1} parent=0 // pred_fallthru
    _
  // Predicated region
  $region30: #{cvae_forward.1} parent=0 // pred_check
    _
  $region31: #{cvae_forward.1} parent=0 // pred_check_branch
    %36 = sbr.rel (0) target = $region33
  $region32: #{cvae_forward.1} parent=0 // pred_region
    _
  $region33: #{cvae_forward.1} parent=0 // pred_fallthru
    _
  // Predicated region
  $region34: #{cvae_forward.1} parent=0 // pred_check
    _
  $region35: #{cvae_forward.1} parent=0 // pred_check_branch
    %38 = sbr.rel (0) target = $region37
  $region36: #{cvae_forward.1} parent=0 // pred_region
    _
  $region37: #{cvae_forward.1} parent=0 // pred_fallthru
    _
  // Predicated region
  $region38: #{cvae_forward.1} parent=0 // pred_check
    _
  $region39: #{cvae_forward.1} parent=0 // pred_check_branch
    %40 = sbr.rel (0) target = $region41
  $region40: #{cvae_forward.1} parent=0 // pred_region
    _
  $region41: #{cvae_forward.1} parent=0 // pred_fallthru
    _
  // Predicated region
  $region42: #{cvae_forward.1} parent=0 // pred_check
    _
  $region43: #{cvae_forward.1} parent=0 // pred_check_branch
    %42 = sbr.rel (0) target = $region45
  $region44: #{cvae_forward.1} parent=0 // pred_region
    _
  $region45: #{cvae_forward.1} parent=0 // pred_fallthru
    _
  // Predicated region
  $region46: #{cvae_forward.1} parent=0 // pred_check
    _
  $region47: #{cvae_forward.1} parent=0 // pred_check_branch
    %44 = sbr.rel (0) target = $region49
  $region48: #{cvae_forward.1} parent=0 // pred_region
    _
  $region49: #{cvae_forward.1} parent=0 // pred_fallthru
    _
  // Predicated region
  $region50: #{cvae_forward.1} parent=0 // pred_check
    _
  $region51: #{cvae_forward.1} parent=0 // pred_check_branch
    %46 = sbr.rel (0) target = $region53
  $region52: #{cvae_forward.1} parent=0 // pred_region
    _
  $region53: #{cvae_forward.1} parent=0 // pred_fallthru
    _
  // Predicated region
  $region54: #{cvae_forward.1} parent=0 // pred_check
    _
  $region55: #{cvae_forward.1} parent=0 // pred_check_branch
    %48 = sbr.rel (0) target = $region57
  $region56: #{cvae_forward.1} parent=0 // pred_region
    _
  $region57: #{cvae_forward.1} parent=0 // pred_fallthru
    _
  %v50 = vld [vmem:[%s3] sm:$0xff]
  %v51 = vld [vmem:[%s3 + $0x8] sm:$0xff]
  %v52 = vld [vmem:[%s3 + $0x10] sm:$0xff]
  %v53 = vld [vmem:[%s3 + $0x18] sm:$0xff]
  %v54 = vld [vmem:[%s3 + $0x20] sm:$0xff]
  %v55 = vld [vmem:[%s4] sm:$0x3]
  %v56 = vld [vmem:[%s0] sm:$0x1]
  %v58 = vlaneseq
  %v59 = vshrl.u32 %v58, 7
  %v60 = vsub.s32 0, %v59
  %v61 = vrot.slane %v55, %v60
  %v62 = vlaneseq
  %v63 = vshrl.u32 %v62, 7
  %v64 = vsub.s32 1, %v63
  %v65 = vrot.slane %v55, %v64
  %v73 = vunpack.c.l.b16 %v50
  %v74 = vunpack.c.h.b16 %v50
  %v75 = vunpack.c.l.b16 %v51
  %v76 = vunpack.c.h.b16 %v51
  %v77 = vunpack.c.l.b16 %v52
  %v78 = vunpack.c.h.b16 %v52
  %v79 = vunpack.c.l.b16 %v53
  %v80 = vunpack.c.h.b16 %v53
  %v81 = vunpack.c.l.b16 %v54
  %v82 = vunpack.c.h.b16 %v54
  %v83 = vpack.c.b16 %v75, %v73
  %v84 = vpack.c.b16 %v76, %v74
  %v85 = vpack.c.b16 %v79, %v77
  %v86 = vpack.c.b16 %v80, %v78
  %v87 = vpack.c.b16 %v81, %v81
  %v88 = vpack.c.b16 %v82, %v82
  %vm93 = vcmask 326656
  %v95 = vsel %vm93, %v56, 0
  %vm97 = vcmask 1043456
  %v99 = vsel %vm97, %v87, 0
  %v102 = vsel %vm97, %v88, 0
  %104 = vmatprep.subr.bf16.mxu0 %v84
  %105 = vmatpush1.bf16.msra.mxu0 %v83
  %106 = vmatprep.subr.bf16.mxu0 %v86
  %107 = vmatpush1.bf16.msra.mxu0 %v85
  %108 = vmatprep.subr.bf16.mxu0 %v102
  %109 = vmatpush1.bf16.msra.mxu0 %v99
  %110 = vmatprep.subr.bf16.mxu0 0
  %111 = vmatpush1.bf16.msra.mxu0 0
  %112 = vmatprep.subr.bf16.mxu0 0
  %113 = vmatpush1.bf16.msra.mxu0 0
  %114 = vmatprep.subr.bf16.mxu0 0
  %115 = vmatpush1.bf16.msra.mxu0 0
  %116 = vmatprep.subr.bf16.mxu0 0
  %117 = vmatpush1.bf16.msra.mxu0 0
  %118 = vmatprep.subr.bf16.mxu0 0
  %119 = vmatpush1.bf16.msra.mxu0 0
  %120 = vmatprep.subr.bf16.mxu0 0
  %121 = vmatpush1.bf16.msra.mxu0 0
  %122 = vmatprep.subr.bf16.mxu0 0
  %123 = vmatpush1.bf16.msra.mxu0 0
  %124 = vmatprep.subr.bf16.mxu0 0
  %125 = vmatpush1.bf16.msra.mxu0 0
  %126 = vmatprep.subr.bf16.mxu0 0
  %127 = vmatpush1.bf16.msra.mxu0 0
  %128 = vmatprep.subr.bf16.mxu0 0
  %129 = vmatpush1.bf16.msra.mxu0 0
  %130 = vmatprep.subr.bf16.mxu0 0
  %131 = vmatpush1.bf16.msra.mxu0 0
  %132 = vmatprep.subr.bf16.mxu0 0
  %133 = vmatpush1.bf16.msra.mxu0 0
  %134 = vmatprep.subr.bf16.mxu0 0
  %135 = vmatpush1.bf16.msra.mxu0 0
  %136 = vmatprep.mubr.bf16.mxu0 0
  %137 = vmatmul.mubr.bf16.gmra.mrb[0].mxu0 %v95
  %v138 = vpop.f32.mrb[0].mxu0
  %v139 = vadd.f32 %v61, %v138
  %v140 = vpop.f32.mrb[0].mxu0
  %v141 = vadd.f32 %v65, %v140
  %v142 = vpop.f32.mrb[0].mxu0
  %v143 = vpop.f32.mrb[0].mxu0
  %144 = vdwg.mxu0
  %v145 = vmax.f32 %v139, 0.0
  %v146 = vmax.f32 %v141, 0.0
  %v147 = vpack.c.bf16 %v145, %v145
  %v148 = vpack.c.bf16 %v146, %v146
  %v149 = vld [vmem:[%s5] sm:$0xf]
  %v150 = vld [vmem:[%s5 + $0x4] sm:$0xf]
  %v151 = vld [vmem:[%s5 + $0x8] sm:$0xf]
  %v152 = vld [vmem:[%s5 + $0xc] sm:$0xf]
  %v153 = vld [vmem:[%s5 + $0x10] sm:$0xf]
  %v154 = vld [vmem:[%s5 + $0x14] sm:$0xf]
  %v155 = vld [vmem:[%s5 + $0x18] sm:$0xf]
  %v156 = vld [vmem:[%s5 + $0x1c] sm:$0xf]
  %v157 = vld [vmem:[%s5 + $0x20] sm:$0xf]
  %v158 = vld [vmem:[%s5 + $0x24] sm:$0xf]
  %v159 = vld [vmem:[%s5 + $0x28] sm:$0xf]
  %v160 = vld [vmem:[%s5 + $0x2c] sm:$0xf]
  %v161 = vld [vmem:[%s5 + $0x30] sm:$0xf]
  %v162 = vld [vmem:[%s5 + $0x34] sm:$0xf]
  %v163 = vld [vmem:[%s5 + $0x38] sm:$0xf]
  %v164 = vld [vmem:[%s5 + $0x3c] sm:$0xf]
  %v165 = vld [vmem:[%s5 + $0x40] sm:$0xf]
  %v166 = vld [vmem:[%s5 + $0x44] sm:$0xf]
  %v167 = vld [vmem:[%s5 + $0x48] sm:$0xf]
  %v168 = vld [vmem:[%s5 + $0x4c] sm:$0xf]
  %v169 = vld [vmem:[%s5 + $0x50] sm:$0xf]
  %v170 = vld [vmem:[%s5 + $0x54] sm:$0xf]
  %v171 = vld [vmem:[%s5 + $0x58] sm:$0xf]
  %v172 = vld [vmem:[%s5 + $0x5c] sm:$0xf]
  %v173 = vld [vmem:[%s5 + $0x60] sm:$0xf]
  %v174 = vld [vmem:[%s5 + $0x64] sm:$0xf]
  %v175 = vld [vmem:[%s5 + $0x68] sm:$0xf]
  %v176 = vld [vmem:[%s5 + $0x6c] sm:$0xf]
  %v177 = vld [vmem:[%s5 + $0x70] sm:$0xf]
  %v178 = vld [vmem:[%s5 + $0x74] sm:$0xf]
  %v179 = vld [vmem:[%s5 + $0x78] sm:$0xf]
  %v180 = vld [vmem:[%s5 + $0x7c] sm:$0xf]
  %s181 = scalar_lea.vmem %s0, 1
  %v182 = vld [vmem:[%s181] sm:$0x1]
  %v184 = vsel %vm93, %v182, 0
  %186 = vmatprep.subr.bf16.mxu0 %v84
  %187 = vmatpush1.bf16.msra.mxu0 %v83
  %188 = vmatprep.subr.bf16.mxu0 %v86
  %189 = vmatpush1.bf16.msra.mxu0 %v85
  %190 = vmatprep.subr.bf16.mxu0 %v102
  %191 = vmatpush1.bf16.msra.mxu0 %v99
  %192 = vmatprep.subr.bf16.mxu0 0
  %193 = vmatpush1.bf16.msra.mxu0 0
  %194 = vmatprep.subr.bf16.mxu0 0
  %195 = vmatpush1.bf16.msra.mxu0 0
  %196 = vmatprep.subr.bf16.mxu0 0
  %197 = vmatpush1.bf16.msra.mxu0 0
  %198 = vmatprep.subr.bf16.mxu0 0
  %199 = vmatpush1.bf16.msra.mxu0 0
  %200 = vmatprep.subr.bf16.mxu0 0
  %201 = vmatpush1.bf16.msra.mxu0 0
  %202 = vmatprep.subr.bf16.mxu0 0
  %203 = vmatpush1.bf16.msra.mxu0 0
  %204 = vmatprep.subr.bf16.mxu0 0
  %205 = vmatpush1.bf16.msra.mxu0 0
  %206 = vmatprep.subr.bf16.mxu0 0
  %207 = vmatpush1.bf16.msra.mxu0 0
  %208 = vmatprep.subr.bf16.mxu0 0
  %209 = vmatpush1.bf16.msra.mxu0 0
  %210 = vmatprep.subr.bf16.mxu0 0
  %211 = vmatpush1.bf16.msra.mxu0 0
  %212 = vmatprep.subr.bf16.mxu0 0
  %213 = vmatpush1.bf16.msra.mxu0 0
  %214 = vmatprep.subr.bf16.mxu0 0
  %215 = vmatpush1.bf16.msra.mxu0 0
  %216 = vmatprep.subr.bf16.mxu0 0
  %217 = vmatpush1.bf16.msra.mxu0 0
  %218 = vmatprep.mubr.bf16.mxu0 0
  %219 = vmatmul.mubr.bf16.gmra.mrb[0].mxu0 %v184
  %v220 = vpop.f32.mrb[0].mxu0
  %v221 = vadd.f32 %v61, %v220
  %v222 = vpop.f32.mrb[0].mxu0
  %v223 = vadd.f32 %v65, %v222
  %v224 = vpop.f32.mrb[0].mxu0
  %v225 = vpop.f32.mrb[0].mxu0
  %226 = vdwg.mxu0
  %v227 = vmax.f32 %v221, 0.0
  %v228 = vmax.f32 %v223, 0.0
  %v229 = vpack.c.bf16 %v227, %v227
  %v230 = vpack.c.bf16 %v228, %v228
  %s231 = scalar_lea.vmem %s5, 128
  %v232 = vld [vmem:[%s231] sm:$0xf]
  %v233 = vld [vmem:[%s231 + $0x4] sm:$0xf]
  %v234 = vld [vmem:[%s231 + $0x8] sm:$0xf]
  %v235 = vld [vmem:[%s231 + $0xc] sm:$0xf]
  %v236 = vld [vmem:[%s231 + $0x10] sm:$0xf]
  %v237 = vld [vmem:[%s231 + $0x14] sm:$0xf]
  %v238 = vld [vmem:[%s231 + $0x18] sm:$0xf]
  %v239 = vld [vmem:[%s231 + $0x1c] sm:$0xf]
  %v240 = vld [vmem:[%s231 + $0x20] sm:$0xf]
  %v241 = vld [vmem:[%s231 + $0x24] sm:$0xf]
  %v242 = vld [vmem:[%s231 + $0x28] sm:$0xf]
  %v243 = vld [vmem:[%s231 + $0x2c] sm:$0xf]
  %v244 = vld [vmem:[%s231 + $0x30] sm:$0xf]
  %v245 = vld [vmem:[%s231 + $0x34] sm:$0xf]
  %v246 = vld [vmem:[%s231 + $0x38] sm:$0xf]
  %v247 = vld [vmem:[%s231 + $0x3c] sm:$0xf]
  %v248 = vld [vmem:[%s231 + $0x40] sm:$0xf]
  %v249 = vld [vmem:[%s231 + $0x44] sm:$0xf]
  %v250 = vld [vmem:[%s231 + $0x48] sm:$0xf]
  %v251 = vld [vmem:[%s231 + $0x4c] sm:$0xf]
  %v252 = vld [vmem:[%s231 + $0x50] sm:$0xf]
  %v253 = vld [vmem:[%s231 + $0x54] sm:$0xf]
  %v254 = vld [vmem:[%s231 + $0x58] sm:$0xf]
  %v255 = vld [vmem:[%s231 + $0x5c] sm:$0xf]
  %v256 = vld [vmem:[%s231 + $0x60] sm:$0xf]
  %v257 = vld [vmem:[%s231 + $0x64] sm:$0xf]
  %v258 = vld [vmem:[%s231 + $0x68] sm:$0xf]
  %v259 = vld [vmem:[%s231 + $0x6c] sm:$0xf]
  %v260 = vld [vmem:[%s231 + $0x70] sm:$0xf]
  %v261 = vld [vmem:[%s231 + $0x74] sm:$0xf]
  %v262 = vld [vmem:[%s231 + $0x78] sm:$0xf]
  %v263 = vld [vmem:[%s231 + $0x7c] sm:$0xf]
  %v296 = vunpack.c.l.b16 %v232
  %v297 = vunpack.c.l.b16 %v233
  %v298 = vunpack.c.l.b16 %v234
  %v299 = vunpack.c.l.b16 %v235
  %v300 = vunpack.c.l.b16 %v236
  %v301 = vunpack.c.l.b16 %v237
  %v302 = vunpack.c.l.b16 %v238
  %v303 = vunpack.c.l.b16 %v239
  %v304 = vunpack.c.l.b16 %v240
  %v305 = vunpack.c.l.b16 %v241
  %v306 = vunpack.c.l.b16 %v242
  %v307 = vunpack.c.l.b16 %v243
  %v308 = vunpack.c.l.b16 %v244
  %v309 = vunpack.c.l.b16 %v245
  %v310 = vunpack.c.l.b16 %v246
  %v311 = vunpack.c.l.b16 %v247
  %v312 = vunpack.c.l.b16 %v248
  %v313 = vunpack.c.l.b16 %v249
  %v314 = vunpack.c.l.b16 %v250
  %v315 = vunpack.c.l.b16 %v251
  %v316 = vunpack.c.l.b16 %v252
  %v317 = vunpack.c.l.b16 %v253
  %v318 = vunpack.c.l.b16 %v254
  %v319 = vunpack.c.l.b16 %v255
  %v320 = vunpack.c.l.b16 %v256
  %v321 = vunpack.c.l.b16 %v257
  %v322 = vunpack.c.l.b16 %v258
  %v323 = vunpack.c.l.b16 %v259
  %v324 = vunpack.c.l.b16 %v260
  %v325 = vunpack.c.l.b16 %v261
  %v326 = vunpack.c.l.b16 %v262
  %v327 = vunpack.c.l.b16 %v263
  %v328 = vpack.c.b16 %v297, %v296
  %v329 = vpack.c.b16 %v299, %v298
  %v330 = vpack.c.b16 %v301, %v300
  %v331 = vpack.c.b16 %v303, %v302
  %v332 = vpack.c.b16 %v305, %v304
  %v333 = vpack.c.b16 %v307, %v306
  %v334 = vpack.c.b16 %v309, %v308
  %v335 = vpack.c.b16 %v311, %v310
  %v336 = vpack.c.b16 %v313, %v312
  %v337 = vpack.c.b16 %v315, %v314
  %v338 = vpack.c.b16 %v317, %v316
  %v339 = vpack.c.b16 %v319, %v318
  %v340 = vpack.c.b16 %v321, %v320
  %v341 = vpack.c.b16 %v323, %v322
  %v342 = vpack.c.b16 %v325, %v324
  %v343 = vpack.c.b16 %v327, %v326
  %360 = vmatprep.subr.bf16.mxu0 0
  %361 = vmatpush1.bf16.msra.mxu0 %v328
  %362 = vmatprep.subr.bf16.mxu0 0
  %363 = vmatpush1.bf16.msra.mxu0 %v329
  %364 = vmatprep.subr.bf16.mxu0 0
  %365 = vmatpush1.bf16.msra.mxu0 %v330
  %366 = vmatprep.subr.bf16.mxu0 0
  %367 = vmatpush1.bf16.msra.mxu0 %v331
  %368 = vmatprep.subr.bf16.mxu0 0
  %369 = vmatpush1.bf16.msra.mxu0 %v332
  %370 = vmatprep.subr.bf16.mxu0 0
  %371 = vmatpush1.bf16.msra.mxu0 %v333
  %372 = vmatprep.subr.bf16.mxu0 0
  %373 = vmatpush1.bf16.msra.mxu0 %v334
  %374 = vmatprep.subr.bf16.mxu0 0
  %375 = vmatpush1.bf16.msra.mxu0 %v335
  %376 = vmatprep.subr.bf16.mxu0 0
  %377 = vmatpush1.bf16.msra.mxu0 %v336
  %378 = vmatprep.subr.bf16.mxu0 0
  %379 = vmatpush1.bf16.msra.mxu0 %v337
  %380 = vmatprep.subr.bf16.mxu0 0
  %381 = vmatpush1.bf16.msra.mxu0 %v338
  %382 = vmatprep.subr.bf16.mxu0 0
  %383 = vmatpush1.bf16.msra.mxu0 %v339
  %384 = vmatprep.subr.bf16.mxu0 0
  %385 = vmatpush1.bf16.msra.mxu0 %v340
  %386 = vmatprep.subr.bf16.mxu0 0
  %387 = vmatpush1.bf16.msra.mxu0 %v341
  %388 = vmatprep.subr.bf16.mxu0 0
  %389 = vmatpush1.bf16.msra.mxu0 %v342
  %390 = vmatprep.subr.bf16.mxu0 0
  %391 = vmatpush1.bf16.msra.mxu0 %v343
  %392 = vmatprep.mubr.bf16.mxu0 %v230
  %393 = vmatmul.mubr.bf16.gmra.mrb[0].mxu0 %v229
  %v394 = vpop.f32.mrb[0].mxu0
  %v395 = vadd.f32 0.0, %v394
  %v396 = vpop.f32.mrb[0].mxu0
  %v397 = vpop.f32.mrb[0].mxu0
  %v398 = vpop.f32.mrb[0].mxu0
  %399 = vdwg.mxu0
  %v432 = vunpack.c.l.b16 %v149
  %v433 = vunpack.c.l.b16 %v150
  %v434 = vunpack.c.l.b16 %v151
  %v435 = vunpack.c.l.b16 %v152
  %v436 = vunpack.c.l.b16 %v153
  %v437 = vunpack.c.l.b16 %v154
  %v438 = vunpack.c.l.b16 %v155
  %v439 = vunpack.c.l.b16 %v156
  %v440 = vunpack.c.l.b16 %v157
  %v441 = vunpack.c.l.b16 %v158
  %v442 = vunpack.c.l.b16 %v159
  %v443 = vunpack.c.l.b16 %v160
  %v444 = vunpack.c.l.b16 %v161
  %v445 = vunpack.c.l.b16 %v162
  %v446 = vunpack.c.l.b16 %v163
  %v447 = vunpack.c.l.b16 %v164
  %v448 = vunpack.c.l.b16 %v165
  %v449 = vunpack.c.l.b16 %v166
  %v450 = vunpack.c.l.b16 %v167
  %v451 = vunpack.c.l.b16 %v168
  %v452 = vunpack.c.l.b16 %v169
  %v453 = vunpack.c.l.b16 %v170
  %v454 = vunpack.c.l.b16 %v171
  %v455 = vunpack.c.l.b16 %v172
  %v456 = vunpack.c.l.b16 %v173
  %v457 = vunpack.c.l.b16 %v174
  %v458 = vunpack.c.l.b16 %v175
  %v459 = vunpack.c.l.b16 %v176
  %v460 = vunpack.c.l.b16 %v177
  %v461 = vunpack.c.l.b16 %v178
  %v462 = vunpack.c.l.b16 %v179
  %v463 = vunpack.c.l.b16 %v180
  %v464 = vpack.c.b16 %v433, %v432
  %v465 = vpack.c.b16 %v435, %v434
  %v466 = vpack.c.b16 %v437, %v436
  %v467 = vpack.c.b16 %v439, %v438
  %v468 = vpack.c.b16 %v441, %v440
  %v469 = vpack.c.b16 %v443, %v442
  %v470 = vpack.c.b16 %v445, %v444
  %v471 = vpack.c.b16 %v447, %v446
  %v472 = vpack.c.b16 %v449, %v448
  %v473 = vpack.c.b16 %v451, %v450
  %v474 = vpack.c.b16 %v453, %v452
  %v475 = vpack.c.b16 %v455, %v454
  %v476 = vpack.c.b16 %v457, %v456
  %v477 = vpack.c.b16 %v459, %v458
  %v478 = vpack.c.b16 %v461, %v460
  %v479 = vpack.c.b16 %v463, %v462
  %496 = vmatprep.subr.bf16.mxu0 0
  %497 = vmatpush1.bf16.msra.mxu0 %v464
  %498 = vmatprep.subr.bf16.mxu0 0
  %499 = vmatpush1.bf16.msra.mxu0 %v465
  %500 = vmatprep.subr.bf16.mxu0 0
  %501 = vmatpush1.bf16.msra.mxu0 %v466
  %502 = vmatprep.subr.bf16.mxu0 0
  %503 = vmatpush1.bf16.msra.mxu0 %v467
  %504 = vmatprep.subr.bf16.mxu0 0
  %505 = vmatpush1.bf16.msra.mxu0 %v468
  %506 = vmatprep.subr.bf16.mxu0 0
  %507 = vmatpush1.bf16.msra.mxu0 %v469
  %508 = vmatprep.subr.bf16.mxu0 0
  %509 = vmatpush1.bf16.msra.mxu0 %v470
  %510 = vmatprep.subr.bf16.mxu0 0
  %511 = vmatpush1.bf16.msra.mxu0 %v471
  %512 = vmatprep.subr.bf16.mxu0 0
  %513 = vmatpush1.bf16.msra.mxu0 %v472
  %514 = vmatprep.subr.bf16.mxu0 0
  %515 = vmatpush1.bf16.msra.mxu0 %v473
  %516 = vmatprep.subr.bf16.mxu0 0
  %517 = vmatpush1.bf16.msra.mxu0 %v474
  %518 = vmatprep.subr.bf16.mxu0 0
  %519 = vmatpush1.bf16.msra.mxu0 %v475
  %520 = vmatprep.subr.bf16.mxu0 0
  %521 = vmatpush1.bf16.msra.mxu0 %v476
  %522 = vmatprep.subr.bf16.mxu0 0
  %523 = vmatpush1.bf16.msra.mxu0 %v477
  %524 = vmatprep.subr.bf16.mxu0 0
  %525 = vmatpush1.bf16.msra.mxu0 %v478
  %526 = vmatprep.subr.bf16.mxu0 0
  %527 = vmatpush1.bf16.msra.mxu0 %v479
  %528 = vmatprep.mubr.bf16.mxu0 %v148
  %529 = vmatmul.mubr.bf16.gmra.mrb[0].mxu0 %v147
  %v530 = vpop.f32.mrb[0].mxu0
  %v531 = vadd.f32 %v395, %v530
  %v532 = vpop.f32.mrb[0].mxu0
  %v533 = vpop.f32.mrb[0].mxu0
  %v534 = vpop.f32.mrb[0].mxu0
  %535 = vdwg.mxu0
  %s536 = scalar_lea.vmem %s0, 2
  %v537 = vld [vmem:[%s536] sm:$0x1]
  %v539 = vsel %vm93, %v537, 0
  %541 = vmatprep.subr.bf16.mxu0 %v84
  %542 = vmatpush1.bf16.msra.mxu0 %v83
  %543 = vmatprep.subr.bf16.mxu0 %v86
  %544 = vmatpush1.bf16.msra.mxu0 %v85
  %545 = vmatprep.subr.bf16.mxu0 %v102
  %546 = vmatpush1.bf16.msra.mxu0 %v99
  %547 = vmatprep.subr.bf16.mxu0 0
  %548 = vmatpush1.bf16.msra.mxu0 0
  %549 = vmatprep.subr.bf16.mxu0 0
  %550 = vmatpush1.bf16.msra.mxu0 0
  %551 = vmatprep.subr.bf16.mxu0 0
  %552 = vmatpush1.bf16.msra.mxu0 0
  %553 = vmatprep.subr.bf16.mxu0 0
  %554 = vmatpush1.bf16.msra.mxu0 0
  %555 = vmatprep.subr.bf16.mxu0 0
  %556 = vmatpush1.bf16.msra.mxu0 0
  %557 = vmatprep.subr.bf16.mxu0 0
  %558 = vmatpush1.bf16.msra.mxu0 0
  %559 = vmatprep.subr.bf16.mxu0 0
  %560 = vmatpush1.bf16.msra.mxu0 0
  %561 = vmatprep.subr.bf16.mxu0 0
  %562 = vmatpush1.bf16.msra.mxu0 0
  %563 = vmatprep.subr.bf16.mxu0 0
  %564 = vmatpush1.bf16.msra.mxu0 0
  %565 = vmatprep.subr.bf16.mxu0 0
  %566 = vmatpush1.bf16.msra.mxu0 0
  %567 = vmatprep.subr.bf16.mxu0 0
  %568 = vmatpush1.bf16.msra.mxu0 0
  %569 = vmatprep.subr.bf16.mxu0 0
  %570 = vmatpush1.bf16.msra.mxu0 0
  %571 = vmatprep.subr.bf16.mxu0 0
  %572 = vmatpush1.bf16.msra.mxu0 0
  %573 = vmatprep.mubr.bf16.mxu0 0
  %574 = vmatmul.mubr.bf16.gmra.mrb[0].mxu0 %v539
  %v575 = vpop.f32.mrb[0].mxu0
  %v576 = vadd.f32 %v61, %v575
  %v577 = vpop.f32.mrb[0].mxu0
  %v578 = vadd.f32 %v65, %v577
  %v579 = vpop.f32.mrb[0].mxu0
  %v580 = vpop.f32.mrb[0].mxu0
  %581 = vdwg.mxu0
  %v582 = vmax.f32 %v576, 0.0
  %v583 = vmax.f32 %v578, 0.0
  %v584 = vpack.c.bf16 %v582, %v582
  %v585 = vpack.c.bf16 %v583, %v583
  %s586 = scalar_lea.vmem %s5, 256
  %v587 = vld [vmem:[%s586] sm:$0xf]
  %v588 = vld [vmem:[%s586 + $0x4] sm:$0xf]
  %v589 = vld [vmem:[%s586 + $0x8] sm:$0xf]
  %v590 = vld [vmem:[%s586 + $0xc] sm:$0xf]
  %v591 = vld [vmem:[%s586 + $0x10] sm:$0xf]
  %v592 = vld [vmem:[%s586 + $0x14] sm:$0xf]
  %v593 = vld [vmem:[%s586 + $0x18] sm:$0xf]
  %v594 = vld [vmem:[%s586 + $0x1c] sm:$0xf]
  %v595 = vld [vmem:[%s586 + $0x20] sm:$0xf]
  %v596 = vld [vmem:[%s586 + $0x24] sm:$0xf]
  %v597 = vld [vmem:[%s586 + $0x28] sm:$0xf]
  %v598 = vld [vmem:[%s586 + $0x2c] sm:$0xf]
  %v599 = vld [vmem:[%s586 + $0x30] sm:$0xf]
  %v600 = vld [vmem:[%s586 + $0x34] sm:$0xf]
  %v601 = vld [vmem:[%s586 + $0x38] sm:$0xf]
  %v602 = vld [vmem:[%s586 + $0x3c] sm:$0xf]
  %v603 = vld [vmem:[%s586 + $0x40] sm:$0xf]
  %v604 = vld [vmem:[%s586 + $0x44] sm:$0xf]
  %v605 = vld [vmem:[%s586 + $0x48] sm:$0xf]
  %v606 = vld [vmem:[%s586 + $0x4c] sm:$0xf]
  %v607 = vld [vmem:[%s586 + $0x50] sm:$0xf]
  %v608 = vld [vmem:[%s586 + $0x54] sm:$0xf]
  %v609 = vld [vmem:[%s586 + $0x58] sm:$0xf]
  %v610 = vld [vmem:[%s586 + $0x5c] sm:$0xf]
  %v611 = vld [vmem:[%s586 + $0x60] sm:$0xf]
  %v612 = vld [vmem:[%s586 + $0x64] sm:$0xf]
  %v613 = vld [vmem:[%s586 + $0x68] sm:$0xf]
  %v614 = vld [vmem:[%s586 + $0x6c] sm:$0xf]
  %v615 = vld [vmem:[%s586 + $0x70] sm:$0xf]
  %v616 = vld [vmem:[%s586 + $0x74] sm:$0xf]
  %v617 = vld [vmem:[%s586 + $0x78] sm:$0xf]
  %v618 = vld [vmem:[%s586 + $0x7c] sm:$0xf]
  %v651 = vunpack.c.l.b16 %v587
  %v652 = vunpack.c.l.b16 %v588
  %v653 = vunpack.c.l.b16 %v589
  %v654 = vunpack.c.l.b16 %v590
  %v655 = vunpack.c.l.b16 %v591
  %v656 = vunpack.c.l.b16 %v592
  %v657 = vunpack.c.l.b16 %v593
  %v658 = vunpack.c.l.b16 %v594
  %v659 = vunpack.c.l.b16 %v595
  %v660 = vunpack.c.l.b16 %v596
  %v661 = vunpack.c.l.b16 %v597
  %v662 = vunpack.c.l.b16 %v598
  %v663 = vunpack.c.l.b16 %v599
  %v664 = vunpack.c.l.b16 %v600
  %v665 = vunpack.c.l.b16 %v601
  %v666 = vunpack.c.l.b16 %v602
  %v667 = vunpack.c.l.b16 %v603
  %v668 = vunpack.c.l.b16 %v604
  %v669 = vunpack.c.l.b16 %v605
  %v670 = vunpack.c.l.b16 %v606
  %v671 = vunpack.c.l.b16 %v607
  %v672 = vunpack.c.l.b16 %v608
  %v673 = vunpack.c.l.b16 %v609
  %v674 = vunpack.c.l.b16 %v610
  %v675 = vunpack.c.l.b16 %v611
  %v676 = vunpack.c.l.b16 %v612
  %v677 = vunpack.c.l.b16 %v613
  %v678 = vunpack.c.l.b16 %v614
  %v679 = vunpack.c.l.b16 %v615
  %v680 = vunpack.c.l.b16 %v616
  %v681 = vunpack.c.l.b16 %v617
  %v682 = vunpack.c.l.b16 %v618
  %v683 = vpack.c.b16 %v652, %v651
  %v684 = vpack.c.b16 %v654, %v653
  %v685 = vpack.c.b16 %v656, %v655
  %v686 = vpack.c.b16 %v658, %v657
  %v687 = vpack.c.b16 %v660, %v659
  %v688 = vpack.c.b16 %v662, %v661
  %v689 = vpack.c.b16 %v664, %v663
  %v690 = vpack.c.b16 %v666, %v665
  %v691 = vpack.c.b16 %v668, %v667
  %v692 = vpack.c.b16 %v670, %v669
  %v693 = vpack.c.b16 %v672, %v671
  %v694 = vpack.c.b16 %v674, %v673
  %v695 = vpack.c.b16 %v676, %v675
  %v696 = vpack.c.b16 %v678, %v677
  %v697 = vpack.c.b16 %v680, %v679
  %v698 = vpack.c.b16 %v682, %v681
  %715 = vmatprep.subr.bf16.mxu0 0
  %716 = vmatpush1.bf16.msra.mxu0 %v683
  %717 = vmatprep.subr.bf16.mxu0 0
  %718 = vmatpush1.bf16.msra.mxu0 %v684
  %719 = vmatprep.subr.bf16.mxu0 0
  %720 = vmatpush1.bf16.msra.mxu0 %v685
  %721 = vmatprep.subr.bf16.mxu0 0
  %722 = vmatpush1.bf16.msra.mxu0 %v686
  %723 = vmatprep.subr.bf16.mxu0 0
  %724 = vmatpush1.bf16.msra.mxu0 %v687
  %725 = vmatprep.subr.bf16.mxu0 0
  %726 = vmatpush1.bf16.msra.mxu0 %v688
  %727 = vmatprep.subr.bf16.mxu0 0
  %728 = vmatpush1.bf16.msra.mxu0 %v689
  %729 = vmatprep.subr.bf16.mxu0 0
  %730 = vmatpush1.bf16.msra.mxu0 %v690
  %731 = vmatprep.subr.bf16.mxu0 0
  %732 = vmatpush1.bf16.msra.mxu0 %v691
  %733 = vmatprep.subr.bf16.mxu0 0
  %734 = vmatpush1.bf16.msra.mxu0 %v692
  %735 = vmatprep.subr.bf16.mxu0 0
  %736 = vmatpush1.bf16.msra.mxu0 %v693
  %737 = vmatprep.subr.bf16.mxu0 0
  %738 = vmatpush1.bf16.msra.mxu0 %v694
  %739 = vmatprep.subr.bf16.mxu0 0
  %740 = vmatpush1.bf16.msra.mxu0 %v695
  %741 = vmatprep.subr.bf16.mxu0 0
  %742 = vmatpush1.bf16.msra.mxu0 %v696
  %743 = vmatprep.subr.bf16.mxu0 0
  %744 = vmatpush1.bf16.msra.mxu0 %v697
  %745 = vmatprep.subr.bf16.mxu0 0
  %746 = vmatpush1.bf16.msra.mxu0 %v698
  %747 = vmatprep.mubr.bf16.mxu0 %v585
  %748 = vmatmul.mubr.bf16.gmra.mrb[0].mxu0 %v584
  %v749 = vpop.f32.mrb[0].mxu0
  %v750 = vadd.f32 0.0, %v749
  %v751 = vpop.f32.mrb[0].mxu0
  %v752 = vpop.f32.mrb[0].mxu0
  %v753 = vpop.f32.mrb[0].mxu0
  %754 = vdwg.mxu0
  %v755 = vadd.f32 %v531, %v750
  %s756 = scalar_lea.vmem %s0, 3
  %v757 = vld [vmem:[%s756] sm:$0x1]
  %v759 = vsel %vm93, %v757, 0
  %761 = vmatprep.subr.bf16.mxu0 %v84
  %762 = vmatpush1.bf16.msra.mxu0 %v83
  %763 = vmatprep.subr.bf16.mxu0 %v86
  %764 = vmatpush1.bf16.msra.mxu0 %v85
  %765 = vmatprep.subr.bf16.mxu0 %v102
  %766 = vmatpush1.bf16.msra.mxu0 %v99
  %767 = vmatprep.subr.bf16.mxu0 0
  %768 = vmatpush1.bf16.msra.mxu0 0
  %769 = vmatprep.subr.bf16.mxu0 0
  %770 = vmatpush1.bf16.msra.mxu0 0
  %771 = vmatprep.subr.bf16.mxu0 0
  %772 = vmatpush1.bf16.msra.mxu0 0
  %773 = vmatprep.subr.bf16.mxu0 0
  %774 = vmatpush1.bf16.msra.mxu0 0
  %775 = vmatprep.subr.bf16.mxu0 0
  %776 = vmatpush1.bf16.msra.mxu0 0
  %777 = vmatprep.subr.bf16.mxu0 0
  %778 = vmatpush1.bf16.msra.mxu0 0
  %779 = vmatprep.subr.bf16.mxu0 0
  %780 = vmatpush1.bf16.msra.mxu0 0
  %781 = vmatprep.subr.bf16.mxu0 0
  %782 = vmatpush1.bf16.msra.mxu0 0
  %783 = vmatprep.subr.bf16.mxu0 0
  %784 = vmatpush1.bf16.msra.mxu0 0
  %785 = vmatprep.subr.bf16.mxu0 0
  %786 = vmatpush1.bf16.msra.mxu0 0
  %787 = vmatprep.subr.bf16.mxu0 0
  %788 = vmatpush1.bf16.msra.mxu0 0
  %789 = vmatprep.subr.bf16.mxu0 0
  %790 = vmatpush1.bf16.msra.mxu0 0
  %791 = vmatprep.subr.bf16.mxu0 0
  %792 = vmatpush1.bf16.msra.mxu0 0
  %793 = vmatprep.mubr.bf16.mxu0 0
  %794 = vmatmul.mubr.bf16.gmra.mrb[0].mxu0 %v759
  %v795 = vpop.f32.mrb[0].mxu0
  %v796 = vadd.f32 %v61, %v795
  %v797 = vpop.f32.mrb[0].mxu0
  %v798 = vadd.f32 %v65, %v797
  %v799 = vpop.f32.mrb[0].mxu0
  %v800 = vpop.f32.mrb[0].mxu0
  %801 = vdwg.mxu0
  %v802 = vmax.f32 %v796, 0.0
  %v803 = vmax.f32 %v798, 0.0
  %v804 = vpack.c.bf16 %v802, %v802
  %v805 = vpack.c.bf16 %v803, %v803
  %s806 = scalar_lea.vmem %s5, 384
  %v807 = vld [vmem:[%s806] sm:$0xf]
  %v808 = vld [vmem:[%s806 + $0x4] sm:$0xf]
  %v809 = vld [vmem:[%s806 + $0x8] sm:$0xf]
  %v810 = vld [vmem:[%s806 + $0xc] sm:$0xf]
  %v811 = vld [vmem:[%s806 + $0x10] sm:$0xf]
  %v812 = vld [vmem:[%s806 + $0x14] sm:$0xf]
  %v813 = vld [vmem:[%s806 + $0x18] sm:$0xf]
  %v814 = vld [vmem:[%s806 + $0x1c] sm:$0xf]
  %v815 = vld [vmem:[%s806 + $0x20] sm:$0xf]
  %v816 = vld [vmem:[%s806 + $0x24] sm:$0xf]
  %v817 = vld [vmem:[%s806 + $0x28] sm:$0xf]
  %v818 = vld [vmem:[%s806 + $0x2c] sm:$0xf]
  %v819 = vld [vmem:[%s806 + $0x30] sm:$0xf]
  %v820 = vld [vmem:[%s806 + $0x34] sm:$0xf]
  %v821 = vld [vmem:[%s806 + $0x38] sm:$0xf]
  %v822 = vld [vmem:[%s806 + $0x3c] sm:$0xf]
  %v823 = vld [vmem:[%s806 + $0x40] sm:$0xf]
  %v824 = vld [vmem:[%s806 + $0x44] sm:$0xf]
  %v825 = vld [vmem:[%s806 + $0x48] sm:$0xf]
  %v826 = vld [vmem:[%s806 + $0x4c] sm:$0xf]
  %v827 = vld [vmem:[%s806 + $0x50] sm:$0xf]
  %v828 = vld [vmem:[%s806 + $0x54] sm:$0xf]
  %v829 = vld [vmem:[%s806 + $0x58] sm:$0xf]
  %v830 = vld [vmem:[%s806 + $0x5c] sm:$0xf]
  %v831 = vld [vmem:[%s806 + $0x60] sm:$0xf]
  %v832 = vld [vmem:[%s806 + $0x64] sm:$0xf]
  %v833 = vld [vmem:[%s806 + $0x68] sm:$0xf]
  %v834 = vld [vmem:[%s806 + $0x6c] sm:$0xf]
  %v835 = vld [vmem:[%s806 + $0x70] sm:$0xf]
  %v836 = vld [vmem:[%s806 + $0x74] sm:$0xf]
  %v837 = vld [vmem:[%s806 + $0x78] sm:$0xf]
  %v838 = vld [vmem:[%s806 + $0x7c] sm:$0xf]
  %v871 = vunpack.c.l.b16 %v807
  %v872 = vunpack.c.l.b16 %v808
  %v873 = vunpack.c.l.b16 %v809
  %v874 = vunpack.c.l.b16 %v810
  %v875 = vunpack.c.l.b16 %v811
  %v876 = vunpack.c.l.b16 %v812
  %v877 = vunpack.c.l.b16 %v813
  %v878 = vunpack.c.l.b16 %v814
  %v879 = vunpack.c.l.b16 %v815
  %v880 = vunpack.c.l.b16 %v816
  %v881 = vunpack.c.l.b16 %v817
  %v882 = vunpack.c.l.b16 %v818
  %v883 = vunpack.c.l.b16 %v819
  %v884 = vunpack.c.l.b16 %v820
  %v885 = vunpack.c.l.b16 %v821
  %v886 = vunpack.c.l.b16 %v822
  %v887 = vunpack.c.l.b16 %v823
  %v888 = vunpack.c.l.b16 %v824
  %v889 = vunpack.c.l.b16 %v825
  %v890 = vunpack.c.l.b16 %v826
  %v891 = vunpack.c.l.b16 %v827
  %v892 = vunpack.c.l.b16 %v828
  %v893 = vunpack.c.l.b16 %v829
  %v894 = vunpack.c.l.b16 %v830
  %v895 = vunpack.c.l.b16 %v831
  %v896 = vunpack.c.l.b16 %v832
  %v897 = vunpack.c.l.b16 %v833
  %v898 = vunpack.c.l.b16 %v834
  %v899 = vunpack.c.l.b16 %v835
  %v900 = vunpack.c.l.b16 %v836
  %v901 = vunpack.c.l.b16 %v837
  %v902 = vunpack.c.l.b16 %v838
  %v903 = vpack.c.b16 %v872, %v871
  %v904 = vpack.c.b16 %v874, %v873
  %v905 = vpack.c.b16 %v876, %v875
  %v906 = vpack.c.b16 %v878, %v877
  %v907 = vpack.c.b16 %v880, %v879
  %v908 = vpack.c.b16 %v882, %v881
  %v909 = vpack.c.b16 %v884, %v883
  %v910 = vpack.c.b16 %v886, %v885
  %v911 = vpack.c.b16 %v888, %v887
  %v912 = vpack.c.b16 %v890, %v889
  %v913 = vpack.c.b16 %v892, %v891
  %v914 = vpack.c.b16 %v894, %v893
  %v915 = vpack.c.b16 %v896, %v895
  %v916 = vpack.c.b16 %v898, %v897
  %v917 = vpack.c.b16 %v900, %v899
  %v918 = vpack.c.b16 %v902, %v901
  %935 = vmatprep.subr.bf16.mxu0 0
  %936 = vmatpush1.bf16.msra.mxu0 %v903
  %937 = vmatprep.subr.bf16.mxu0 0
  %938 = vmatpush1.bf16.msra.mxu0 %v904
  %939 = vmatprep.subr.bf16.mxu0 0
  %940 = vmatpush1.bf16.msra.mxu0 %v905
  %941 = vmatprep.subr.bf16.mxu0 0
  %942 = vmatpush1.bf16.msra.mxu0 %v906
  %943 = vmatprep.subr.bf16.mxu0 0
  %944 = vmatpush1.bf16.msra.mxu0 %v907
  %945 = vmatprep.subr.bf16.mxu0 0
  %946 = vmatpush1.bf16.msra.mxu0 %v908
  %947 = vmatprep.subr.bf16.mxu0 0
  %948 = vmatpush1.bf16.msra.mxu0 %v909
  %949 = vmatprep.subr.bf16.mxu0 0
  %950 = vmatpush1.bf16.msra.mxu0 %v910
  %951 = vmatprep.subr.bf16.mxu0 0
  %952 = vmatpush1.bf16.msra.mxu0 %v911
  %953 = vmatprep.subr.bf16.mxu0 0
  %954 = vmatpush1.bf16.msra.mxu0 %v912
  %955 = vmatprep.subr.bf16.mxu0 0
  %956 = vmatpush1.bf16.msra.mxu0 %v913
  %957 = vmatprep.subr.bf16.mxu0 0
  %958 = vmatpush1.bf16.msra.mxu0 %v914
  %959 = vmatprep.subr.bf16.mxu0 0
  %960 = vmatpush1.bf16.msra.mxu0 %v915
  %961 = vmatprep.subr.bf16.mxu0 0
  %962 = vmatpush1.bf16.msra.mxu0 %v916
  %963 = vmatprep.subr.bf16.mxu0 0
  %964 = vmatpush1.bf16.msra.mxu0 %v917
  %965 = vmatprep.subr.bf16.mxu0 0
  %966 = vmatpush1.bf16.msra.mxu0 %v918
  %967 = vmatprep.mubr.bf16.mxu0 %v805
  %968 = vmatmul.mubr.bf16.gmra.mrb[0].mxu0 %v804
  %v969 = vpop.f32.mrb[0].mxu0
  %v970 = vadd.f32 0.0, %v969
  %v971 = vpop.f32.mrb[0].mxu0
  %v972 = vpop.f32.mrb[0].mxu0
  %v973 = vpop.f32.mrb[0].mxu0
  %974 = vdwg.mxu0
  %v975 = vadd.f32 %v755, %v970
  %s976 = scalar_lea.vmem %s0, 4
  %v977 = vld [vmem:[%s976] sm:$0x1]
  %v979 = vsel %vm93, %v977, 0
  %981 = vmatprep.subr.bf16.mxu0 %v84
  %982 = vmatpush1.bf16.msra.mxu0 %v83
  %983 = vmatprep.subr.bf16.mxu0 %v86
  %984 = vmatpush1.bf16.msra.mxu0 %v85
  %985 = vmatprep.subr.bf16.mxu0 %v102
  %986 = vmatpush1.bf16.msra.mxu0 %v99
  %987 = vmatprep.subr.bf16.mxu0 0
  %988 = vmatpush1.bf16.msra.mxu0 0
  %989 = vmatprep.subr.bf16.mxu0 0
  %990 = vmatpush1.bf16.msra.mxu0 0
  %991 = vmatprep.subr.bf16.mxu0 0
  %992 = vmatpush1.bf16.msra.mxu0 0
  %993 = vmatprep.subr.bf16.mxu0 0
  %994 = vmatpush1.bf16.msra.mxu0 0
  %995 = vmatprep.subr.bf16.mxu0 0
  %996 = vmatpush1.bf16.msra.mxu0 0
  %997 = vmatprep.subr.bf16.mxu0 0
  %998 = vmatpush1.bf16.msra.mxu0 0
  %999 = vmatprep.subr.bf16.mxu0 0
  %1000 = vmatpush1.bf16.msra.mxu0 0
  %1001 = vmatprep.subr.bf16.mxu0 0
  %1002 = vmatpush1.bf16.msra.mxu0 0
  %1003 = vmatprep.subr.bf16.mxu0 0
  %1004 = vmatpush1.bf16.msra.mxu0 0
  %1005 = vmatprep.subr.bf16.mxu0 0
  %1006 = vmatpush1.bf16.msra.mxu0 0
  %1007 = vmatprep.subr.bf16.mxu0 0
  %1008 = vmatpush1.bf16.msra.mxu0 0
  %1009 = vmatprep.subr.bf16.mxu0 0
  %1010 = vmatpush1.bf16.msra.mxu0 0
  %1011 = vmatprep.subr.bf16.mxu0 0
  %1012 = vmatpush1.bf16.msra.mxu0 0
  %1013 = vmatprep.mubr.bf16.mxu0 0
  %1014 = vmatmul.mubr.bf16.gmra.mrb[0].mxu0 %v979
  %v1015 = vpop.f32.mrb[0].mxu0
  %v1016 = vadd.f32 %v61, %v1015
  %v1017 = vpop.f32.mrb[0].mxu0
  %v1018 = vadd.f32 %v65, %v1017
  %v1019 = vpop.f32.mrb[0].mxu0
  %v1020 = vpop.f32.mrb[0].mxu0
  %1021 = vdwg.mxu0
  %v1022 = vmax.f32 %v1016, 0.0
  %v1023 = vmax.f32 %v1018, 0.0
  %v1024 = vpack.c.bf16 %v1022, %v1022
  %v1025 = vpack.c.bf16 %v1023, %v1023
  %s1026 = scalar_lea.vmem %s5, 512
  %v1027 = vld [vmem:[%s1026] sm:$0xf]
  %v1028 = vld [vmem:[%s1026 + $0x4] sm:$0xf]
  %v1029 = vld [vmem:[%s1026 + $0x8] sm:$0xf]
  %v1030 = vld [vmem:[%s1026 + $0xc] sm:$0xf]
  %v1031 = vld [vmem:[%s1026 + $0x10] sm:$0xf]
  %v1032 = vld [vmem:[%s1026 + $0x14] sm:$0xf]
  %v1033 = vld [vmem:[%s1026 + $0x18] sm:$0xf]
  %v1034 = vld [vmem:[%s1026 + $0x1c] sm:$0xf]
  %v1035 = vld [vmem:[%s1026 + $0x20] sm:$0xf]
  %v1036 = vld [vmem:[%s1026 + $0x24] sm:$0xf]
  %v1037 = vld [vmem:[%s1026 + $0x28] sm:$0xf]
  %v1038 = vld [vmem:[%s1026 + $0x2c] sm:$0xf]
  %v1039 = vld [vmem:[%s1026 + $0x30] sm:$0xf]
  %v1040 = vld [vmem:[%s1026 + $0x34] sm:$0xf]
  %v1041 = vld [vmem:[%s1026 + $0x38] sm:$0xf]
  %v1042 = vld [vmem:[%s1026 + $0x3c] sm:$0xf]
  %v1043 = vld [vmem:[%s1026 + $0x40] sm:$0xf]
  %v1044 = vld [vmem:[%s1026 + $0x44] sm:$0xf]
  %v1045 = vld [vmem:[%s1026 + $0x48] sm:$0xf]
  %v1046 = vld [vmem:[%s1026 + $0x4c] sm:$0xf]
  %v1047 = vld [vmem:[%s1026 + $0x50] sm:$0xf]
  %v1048 = vld [vmem:[%s1026 + $0x54] sm:$0xf]
  %v1049 = vld [vmem:[%s1026 + $0x58] sm:$0xf]
  %v1050 = vld [vmem:[%s1026 + $0x5c] sm:$0xf]
  %v1051 = vld [vmem:[%s1026 + $0x60] sm:$0xf]
  %v1052 = vld [vmem:[%s1026 + $0x64] sm:$0xf]
  %v1053 = vld [vmem:[%s1026 + $0x68] sm:$0xf]
  %v1054 = vld [vmem:[%s1026 + $0x6c] sm:$0xf]
  %v1055 = vld [vmem:[%s1026 + $0x70] sm:$0xf]
  %v1056 = vld [vmem:[%s1026 + $0x74] sm:$0xf]
  %v1057 = vld [vmem:[%s1026 + $0x78] sm:$0xf]
  %v1058 = vld [vmem:[%s1026 + $0x7c] sm:$0xf]
  %v1091 = vunpack.c.l.b16 %v1027
  %v1092 = vunpack.c.l.b16 %v1028
  %v1093 = vunpack.c.l.b16 %v1029
  %v1094 = vunpack.c.l.b16 %v1030
  %v1095 = vunpack.c.l.b16 %v1031
  %v1096 = vunpack.c.l.b16 %v1032
  %v1097 = vunpack.c.l.b16 %v1033
  %v1098 = vunpack.c.l.b16 %v1034
  %v1099 = vunpack.c.l.b16 %v1035
  %v1100 = vunpack.c.l.b16 %v1036
  %v1101 = vunpack.c.l.b16 %v1037
  %v1102 = vunpack.c.l.b16 %v1038
  %v1103 = vunpack.c.l.b16 %v1039
  %v1104 = vunpack.c.l.b16 %v1040
  %v1105 = vunpack.c.l.b16 %v1041
  %v1106 = vunpack.c.l.b16 %v1042
  %v1107 = vunpack.c.l.b16 %v1043
  %v1108 = vunpack.c.l.b16 %v1044
  %v1109 = vunpack.c.l.b16 %v1045
  %v1110 = vunpack.c.l.b16 %v1046
  %v1111 = vunpack.c.l.b16 %v1047
  %v1112 = vunpack.c.l.b16 %v1048
  %v1113 = vunpack.c.l.b16 %v1049
  %v1114 = vunpack.c.l.b16 %v1050
  %v1115 = vunpack.c.l.b16 %v1051
  %v1116 = vunpack.c.l.b16 %v1052
  %v1117 = vunpack.c.l.b16 %v1053
  %v1118 = vunpack.c.l.b16 %v1054
  %v1119 = vunpack.c.l.b16 %v1055
  %v1120 = vunpack.c.l.b16 %v1056
  %v1121 = vunpack.c.l.b16 %v1057
  %v1122 = vunpack.c.l.b16 %v1058
  %v1123 = vpack.c.b16 %v1092, %v1091
  %v1124 = vpack.c.b16 %v1094, %v1093
  %v1125 = vpack.c.b16 %v1096, %v1095
  %v1126 = vpack.c.b16 %v1098, %v1097
  %v1127 = vpack.c.b16 %v1100, %v1099
  %v1128 = vpack.c.b16 %v1102, %v1101
  %v1129 = vpack.c.b16 %v1104, %v1103
  %v1130 = vpack.c.b16 %v1106, %v1105
  %v1131 = vpack.c.b16 %v1108, %v1107
  %v1132 = vpack.c.b16 %v1110, %v1109
  %v1133 = vpack.c.b16 %v1112, %v1111
  %v1134 = vpack.c.b16 %v1114, %v1113
  %v1135 = vpack.c.b16 %v1116, %v1115
  %v1136 = vpack.c.b16 %v1118, %v1117
  %v1137 = vpack.c.b16 %v1120, %v1119
  %v1138 = vpack.c.b16 %v1122, %v1121
  %1155 = vmatprep.subr.bf16.mxu0 0
  %1156 = vmatpush1.bf16.msra.mxu0 %v1123
  %1157 = vmatprep.subr.bf16.mxu0 0
  %1158 = vmatpush1.bf16.msra.mxu0 %v1124
  %1159 = vmatprep.subr.bf16.mxu0 0
  %1160 = vmatpush1.bf16.msra.mxu0 %v1125
  %1161 = vmatprep.subr.bf16.mxu0 0
  %1162 = vmatpush1.bf16.msra.mxu0 %v1126
  %1163 = vmatprep.subr.bf16.mxu0 0
  %1164 = vmatpush1.bf16.msra.mxu0 %v1127
  %1165 = vmatprep.subr.bf16.mxu0 0
  %1166 = vmatpush1.bf16.msra.mxu0 %v1128
  %1167 = vmatprep.subr.bf16.mxu0 0
  %1168 = vmatpush1.bf16.msra.mxu0 %v1129
  %1169 = vmatprep.subr.bf16.mxu0 0
  %1170 = vmatpush1.bf16.msra.mxu0 %v1130
  %1171 = vmatprep.subr.bf16.mxu0 0
  %1172 = vmatpush1.bf16.msra.mxu0 %v1131
  %1173 = vmatprep.subr.bf16.mxu0 0
  %1174 = vmatpush1.bf16.msra.mxu0 %v1132
  %1175 = vmatprep.subr.bf16.mxu0 0
  %1176 = vmatpush1.bf16.msra.mxu0 %v1133
  %1177 = vmatprep.subr.bf16.mxu0 0
  %1178 = vmatpush1.bf16.msra.mxu0 %v1134
  %1179 = vmatprep.subr.bf16.mxu0 0
  %1180 = vmatpush1.bf16.msra.mxu0 %v1135
  %1181 = vmatprep.subr.bf16.mxu0 0
  %1182 = vmatpush1.bf16.msra.mxu0 %v1136
  %1183 = vmatprep.subr.bf16.mxu0 0
  %1184 = vmatpush1.bf16.msra.mxu0 %v1137
  %1185 = vmatprep.subr.bf16.mxu0 0
  %1186 = vmatpush1.bf16.msra.mxu0 %v1138
  %1187 = vmatprep.mubr.bf16.mxu0 %v1025
  %1188 = vmatmul.mubr.bf16.gmra.mrb[0].mxu0 %v1024
  %v1189 = vpop.f32.mrb[0].mxu0
  %v1190 = vadd.f32 0.0, %v1189
  %v1191 = vpop.f32.mrb[0].mxu0
  %v1192 = vpop.f32.mrb[0].mxu0
  %v1193 = vpop.f32.mrb[0].mxu0
  %1194 = vdwg.mxu0
  %v1195 = vadd.f32 %v975, %v1190
  %s1196 = scalar_lea.vmem %s0, 5
  %v1197 = vld [vmem:[%s1196] sm:$0x1]
  %v1199 = vsel %vm93, %v1197, 0
  %1201 = vmatprep.subr.bf16.mxu0 %v84
  %1202 = vmatpush1.bf16.msra.mxu0 %v83
  %1203 = vmatprep.subr.bf16.mxu0 %v86
  %1204 = vmatpush1.bf16.msra.mxu0 %v85
  %1205 = vmatprep.subr.bf16.mxu0 %v102
  %1206 = vmatpush1.bf16.msra.mxu0 %v99
  %1207 = vmatprep.subr.bf16.mxu0 0
  %1208 = vmatpush1.bf16.msra.mxu0 0
  %1209 = vmatprep.subr.bf16.mxu0 0
  %1210 = vmatpush1.bf16.msra.mxu0 0
  %1211 = vmatprep.subr.bf16.mxu0 0
  %1212 = vmatpush1.bf16.msra.mxu0 0
  %1213 = vmatprep.subr.bf16.mxu0 0
  %1214 = vmatpush1.bf16.msra.mxu0 0
  %1215 = vmatprep.subr.bf16.mxu0 0
  %1216 = vmatpush1.bf16.msra.mxu0 0
  %1217 = vmatprep.subr.bf16.mxu0 0
  %1218 = vmatpush1.bf16.msra.mxu0 0
  %1219 = vmatprep.subr.bf16.mxu0 0
  %1220 = vmatpush1.bf16.msra.mxu0 0
  %1221 = vmatprep.subr.bf16.mxu0 0
  %1222 = vmatpush1.bf16.msra.mxu0 0
  %1223 = vmatprep.subr.bf16.mxu0 0
  %1224 = vmatpush1.bf16.msra.mxu0 0
  %1225 = vmatprep.subr.bf16.mxu0 0
  %1226 = vmatpush1.bf16.msra.mxu0 0
  %1227 = vmatprep.subr.bf16.mxu0 0
  %1228 = vmatpush1.bf16.msra.mxu0 0
  %1229 = vmatprep.subr.bf16.mxu0 0
  %1230 = vmatpush1.bf16.msra.mxu0 0
  %1231 = vmatprep.subr.bf16.mxu0 0
  %1232 = vmatpush1.bf16.msra.mxu0 0
  %1233 = vmatprep.mubr.bf16.mxu0 0
  %1234 = vmatmul.mubr.bf16.gmra.mrb[0].mxu0 %v1199
  %v1235 = vpop.f32.mrb[0].mxu0
  %v1236 = vadd.f32 %v61, %v1235
  %v1237 = vpop.f32.mrb[0].mxu0
  %v1238 = vadd.f32 %v65, %v1237
  %v1239 = vpop.f32.mrb[0].mxu0
  %v1240 = vpop.f32.mrb[0].mxu0
  %1241 = vdwg.mxu0
  %v1242 = vmax.f32 %v1236, 0.0
  %v1243 = vmax.f32 %v1238, 0.0
  %v1244 = vpack.c.bf16 %v1242, %v1242
  %v1245 = vpack.c.bf16 %v1243, %v1243
  %s1246 = scalar_lea.vmem %s5, 640
  %v1247 = vld [vmem:[%s1246] sm:$0xf]
  %v1248 = vld [vmem:[%s1246 + $0x4] sm:$0xf]
  %v1249 = vld [vmem:[%s1246 + $0x8] sm:$0xf]
  %v1250 = vld [vmem:[%s1246 + $0xc] sm:$0xf]
  %v1251 = vld [vmem:[%s1246 + $0x10] sm:$0xf]
  %v1252 = vld [vmem:[%s1246 + $0x14] sm:$0xf]
  %v1253 = vld [vmem:[%s1246 + $0x18] sm:$0xf]
  %v1254 = vld [vmem:[%s1246 + $0x1c] sm:$0xf]
  %v1255 = vld [vmem:[%s1246 + $0x20] sm:$0xf]
  %v1256 = vld [vmem:[%s1246 + $0x24] sm:$0xf]
  %v1257 = vld [vmem:[%s1246 + $0x28] sm:$0xf]
  %v1258 = vld [vmem:[%s1246 + $0x2c] sm:$0xf]
  %v1259 = vld [vmem:[%s1246 + $0x30] sm:$0xf]
  %v1260 = vld [vmem:[%s1246 + $0x34] sm:$0xf]
  %v1261 = vld [vmem:[%s1246 + $0x38] sm:$0xf]
  %v1262 = vld [vmem:[%s1246 + $0x3c] sm:$0xf]
  %v1263 = vld [vmem:[%s1246 + $0x40] sm:$0xf]
  %v1264 = vld [vmem:[%s1246 + $0x44] sm:$0xf]
  %v1265 = vld [vmem:[%s1246 + $0x48] sm:$0xf]
  %v1266 = vld [vmem:[%s1246 + $0x4c] sm:$0xf]
  %v1267 = vld [vmem:[%s1246 + $0x50] sm:$0xf]
  %v1268 = vld [vmem:[%s1246 + $0x54] sm:$0xf]
  %v1269 = vld [vmem:[%s1246 + $0x58] sm:$0xf]
  %v1270 = vld [vmem:[%s1246 + $0x5c] sm:$0xf]
  %v1271 = vld [vmem:[%s1246 + $0x60] sm:$0xf]
  %v1272 = vld [vmem:[%s1246 + $0x64] sm:$0xf]
  %v1273 = vld [vmem:[%s1246 + $0x68] sm:$0xf]
  %v1274 = vld [vmem:[%s1246 + $0x6c] sm:$0xf]
  %v1275 = vld [vmem:[%s1246 + $0x70] sm:$0xf]
  %v1276 = vld [vmem:[%s1246 + $0x74] sm:$0xf]
  %v1277 = vld [vmem:[%s1246 + $0x78] sm:$0xf]
  %v1278 = vld [vmem:[%s1246 + $0x7c] sm:$0xf]
  %v1311 = vunpack.c.l.b16 %v1247
  %v1312 = vunpack.c.l.b16 %v1248
  %v1313 = vunpack.c.l.b16 %v1249
  %v1314 = vunpack.c.l.b16 %v1250
  %v1315 = vunpack.c.l.b16 %v1251
  %v1316 = vunpack.c.l.b16 %v1252
  %v1317 = vunpack.c.l.b16 %v1253
  %v1318 = vunpack.c.l.b16 %v1254
  %v1319 = vunpack.c.l.b16 %v1255
  %v1320 = vunpack.c.l.b16 %v1256
  %v1321 = vunpack.c.l.b16 %v1257
  %v1322 = vunpack.c.l.b16 %v1258
  %v1323 = vunpack.c.l.b16 %v1259
  %v1324 = vunpack.c.l.b16 %v1260
  %v1325 = vunpack.c.l.b16 %v1261
  %v1326 = vunpack.c.l.b16 %v1262
  %v1327 = vunpack.c.l.b16 %v1263
  %v1328 = vunpack.c.l.b16 %v1264
  %v1329 = vunpack.c.l.b16 %v1265
  %v1330 = vunpack.c.l.b16 %v1266
  %v1331 = vunpack.c.l.b16 %v1267
  %v1332 = vunpack.c.l.b16 %v1268
  %v1333 = vunpack.c.l.b16 %v1269
  %v1334 = vunpack.c.l.b16 %v1270
  %v1335 = vunpack.c.l.b16 %v1271
  %v1336 = vunpack.c.l.b16 %v1272
  %v1337 = vunpack.c.l.b16 %v1273
  %v1338 = vunpack.c.l.b16 %v1274
  %v1339 = vunpack.c.l.b16 %v1275
  %v1340 = vunpack.c.l.b16 %v1276
  %v1341 = vunpack.c.l.b16 %v1277
  %v1342 = vunpack.c.l.b16 %v1278
  %v1343 = vpack.c.b16 %v1312, %v1311
  %v1344 = vpack.c.b16 %v1314, %v1313
  %v1345 = vpack.c.b16 %v1316, %v1315
  %v1346 = vpack.c.b16 %v1318, %v1317
  %v1347 = vpack.c.b16 %v1320, %v1319
  %v1348 = vpack.c.b16 %v1322, %v1321
  %v1349 = vpack.c.b16 %v1324, %v1323
  %v1350 = vpack.c.b16 %v1326, %v1325
  %v1351 = vpack.c.b16 %v1328, %v1327
  %v1352 = vpack.c.b16 %v1330, %v1329
  %v1353 = vpack.c.b16 %v1332, %v1331
  %v1354 = vpack.c.b16 %v1334, %v1333
  %v1355 = vpack.c.b16 %v1336, %v1335
  %v1356 = vpack.c.b16 %v1338, %v1337
  %v1357 = vpack.c.b16 %v1340, %v1339
  %v1358 = vpack.c.b16 %v1342, %v1341
  %1375 = vmatprep.subr.bf16.mxu0 0
  %1376 = vmatpush1.bf16.msra.mxu0 %v1343
  %1377 = vmatprep.subr.bf16.mxu0 0
  %1378 = vmatpush1.bf16.msra.mxu0 %v1344
  %1379 = vmatprep.subr.bf16.mxu0 0
  %1380 = vmatpush1.bf16.msra.mxu0 %v1345
  %1381 = vmatprep.subr.bf16.mxu0 0
  %1382 = vmatpush1.bf16.msra.mxu0 %v1346
  %1383 = vmatprep.subr.bf16.mxu0 0
  %1384 = vmatpush1.bf16.msra.mxu0 %v1347
  %1385 = vmatprep.subr.bf16.mxu0 0
  %1386 = vmatpush1.bf16.msra.mxu0 %v1348
  %1387 = vmatprep.subr.bf16.mxu0 0
  %1388 = vmatpush1.bf16.msra.mxu0 %v1349
  %1389 = vmatprep.subr.bf16.mxu0 0
  %1390 = vmatpush1.bf16.msra.mxu0 %v1350
  %1391 = vmatprep.subr.bf16.mxu0 0
  %1392 = vmatpush1.bf16.msra.mxu0 %v1351
  %1393 = vmatprep.subr.bf16.mxu0 0
  %1394 = vmatpush1.bf16.msra.mxu0 %v1352
  %1395 = vmatprep.subr.bf16.mxu0 0
  %1396 = vmatpush1.bf16.msra.mxu0 %v1353
  %1397 = vmatprep.subr.bf16.mxu0 0
  %1398 = vmatpush1.bf16.msra.mxu0 %v1354
  %1399 = vmatprep.subr.bf16.mxu0 0
  %1400 = vmatpush1.bf16.msra.mxu0 %v1355
  %1401 = vmatprep.subr.bf16.mxu0 0
  %1402 = vmatpush1.bf16.msra.mxu0 %v1356
  %1403 = vmatprep.subr.bf16.mxu0 0
  %1404 = vmatpush1.bf16.msra.mxu0 %v1357
  %1405 = vmatprep.subr.bf16.mxu0 0
  %1406 = vmatpush1.bf16.msra.mxu0 %v1358
  %1407 = vmatprep.mubr.bf16.mxu0 %v1245
  %1408 = vmatmul.mubr.bf16.gmra.mrb[0].mxu0 %v1244
  %v1409 = vpop.f32.mrb[0].mxu0
  %v1410 = vadd.f32 0.0, %v1409
  %v1411 = vpop.f32.mrb[0].mxu0
  %v1412 = vpop.f32.mrb[0].mxu0
  %v1413 = vpop.f32.mrb[0].mxu0
  %1414 = vdwg.mxu0
  %v1415 = vadd.f32 %v1195, %v1410
  %s1416 = scalar_lea.vmem %s0, 6
  %v1417 = vld [vmem:[%s1416] sm:$0x1]
  %v1419 = vsel %vm93, %v1417, 0
  %1421 = vmatprep.subr.bf16.mxu0 %v84
  %1422 = vmatpush1.bf16.msra.mxu0 %v83
  %1423 = vmatprep.subr.bf16.mxu0 %v86
  %1424 = vmatpush1.bf16.msra.mxu0 %v85
  %1425 = vmatprep.subr.bf16.mxu0 %v102
  %1426 = vmatpush1.bf16.msra.mxu0 %v99
  %1427 = vmatprep.subr.bf16.mxu0 0
  %1428 = vmatpush1.bf16.msra.mxu0 0
  %1429 = vmatprep.subr.bf16.mxu0 0
  %1430 = vmatpush1.bf16.msra.mxu0 0
  %1431 = vmatprep.subr.bf16.mxu0 0
  %1432 = vmatpush1.bf16.msra.mxu0 0
  %1433 = vmatprep.subr.bf16.mxu0 0
  %1434 = vmatpush1.bf16.msra.mxu0 0
  %1435 = vmatprep.subr.bf16.mxu0 0
  %1436 = vmatpush1.bf16.msra.mxu0 0
  %1437 = vmatprep.subr.bf16.mxu0 0
  %1438 = vmatpush1.bf16.msra.mxu0 0
  %1439 = vmatprep.subr.bf16.mxu0 0
  %1440 = vmatpush1.bf16.msra.mxu0 0
  %1441 = vmatprep.subr.bf16.mxu0 0
  %1442 = vmatpush1.bf16.msra.mxu0 0
  %1443 = vmatprep.subr.bf16.mxu0 0
  %1444 = vmatpush1.bf16.msra.mxu0 0
  %1445 = vmatprep.subr.bf16.mxu0 0
  %1446 = vmatpush1.bf16.msra.mxu0 0
  %1447 = vmatprep.subr.bf16.mxu0 0
  %1448 = vmatpush1.bf16.msra.mxu0 0
  %1449 = vmatprep.subr.bf16.mxu0 0
  %1450 = vmatpush1.bf16.msra.mxu0 0
  %1451 = vmatprep.subr.bf16.mxu0 0
  %1452 = vmatpush1.bf16.msra.mxu0 0
  %1453 = vmatprep.mubr.bf16.mxu0 0
  %1454 = vmatmul.mubr.bf16.gmra.mrb[0].mxu0 %v1419
  %v1455 = vpop.f32.mrb[0].mxu0
  %v1456 = vadd.f32 %v61, %v1455
  %v1457 = vpop.f32.mrb[0].mxu0
  %v1458 = vadd.f32 %v65, %v1457
  %v1459 = vpop.f32.mrb[0].mxu0
  %v1460 = vpop.f32.mrb[0].mxu0
  %1461 = vdwg.mxu0
  %v1462 = vmax.f32 %v1456, 0.0
  %v1463 = vmax.f32 %v1458, 0.0
  %v1464 = vpack.c.bf16 %v1462, %v1462
  %v1465 = vpack.c.bf16 %v1463, %v1463
  %s1466 = scalar_lea.vmem %s5, 768
  %v1467 = vld [vmem:[%s1466] sm:$0xf]
  %v1468 = vld [vmem:[%s1466 + $0x4] sm:$0xf]
  %v1469 = vld [vmem:[%s1466 + $0x8] sm:$0xf]
  %v1470 = vld [vmem:[%s1466 + $0xc] sm:$0xf]
  %v1471 = vld [vmem:[%s1466 + $0x10] sm:$0xf]
  %v1472 = vld [vmem:[%s1466 + $0x14] sm:$0xf]
  %v1473 = vld [vmem:[%s1466 + $0x18] sm:$0xf]
  %v1474 = vld [vmem:[%s1466 + $0x1c] sm:$0xf]
  %v1475 = vld [vmem:[%s1466 + $0x20] sm:$0xf]
  %v1476 = vld [vmem:[%s1466 + $0x24] sm:$0xf]
  %v1477 = vld [vmem:[%s1466 + $0x28] sm:$0xf]
  %v1478 = vld [vmem:[%s1466 + $0x2c] sm:$0xf]
  %v1479 = vld [vmem:[%s1466 + $0x30] sm:$0xf]
  %v1480 = vld [vmem:[%s1466 + $0x34] sm:$0xf]
  %v1481 = vld [vmem:[%s1466 + $0x38] sm:$0xf]
  %v1482 = vld [vmem:[%s1466 + $0x3c] sm:$0xf]
  %v1483 = vld [vmem:[%s1466 + $0x40] sm:$0xf]
  %v1484 = vld [vmem:[%s1466 + $0x44] sm:$0xf]
  %v1485 = vld [vmem:[%s1466 + $0x48] sm:$0xf]
  %v1486 = vld [vmem:[%s1466 + $0x4c] sm:$0xf]
  %v1487 = vld [vmem:[%s1466 + $0x50] sm:$0xf]
  %v1488 = vld [vmem:[%s1466 + $0x54] sm:$0xf]
  %v1489 = vld [vmem:[%s1466 + $0x58] sm:$0xf]
  %v1490 = vld [vmem:[%s1466 + $0x5c] sm:$0xf]
  %v1491 = vld [vmem:[%s1466 + $0x60] sm:$0xf]
  %v1492 = vld [vmem:[%s1466 + $0x64] sm:$0xf]
  %v1493 = vld [vmem:[%s1466 + $0x68] sm:$0xf]
  %v1494 = vld [vmem:[%s1466 + $0x6c] sm:$0xf]
  %v1495 = vld [vmem:[%s1466 + $0x70] sm:$0xf]
  %v1496 = vld [vmem:[%s1466 + $0x74] sm:$0xf]
  %v1497 = vld [vmem:[%s1466 + $0x78] sm:$0xf]
  %v1498 = vld [vmem:[%s1466 + $0x7c] sm:$0xf]
  %v1531 = vunpack.c.l.b16 %v1467
  %v1532 = vunpack.c.l.b16 %v1468
  %v1533 = vunpack.c.l.b16 %v1469
  %v1534 = vunpack.c.l.b16 %v1470
  %v1535 = vunpack.c.l.b16 %v1471
  %v1536 = vunpack.c.l.b16 %v1472
  %v1537 = vunpack.c.l.b16 %v1473
  %v1538 = vunpack.c.l.b16 %v1474
  %v1539 = vunpack.c.l.b16 %v1475
  %v1540 = vunpack.c.l.b16 %v1476
  %v1541 = vunpack.c.l.b16 %v1477
  %v1542 = vunpack.c.l.b16 %v1478
  %v1543 = vunpack.c.l.b16 %v1479
  %v1544 = vunpack.c.l.b16 %v1480
  %v1545 = vunpack.c.l.b16 %v1481
  %v1546 = vunpack.c.l.b16 %v1482
  %v1547 = vunpack.c.l.b16 %v1483
  %v1548 = vunpack.c.l.b16 %v1484
  %v1549 = vunpack.c.l.b16 %v1485
  %v1550 = vunpack.c.l.b16 %v1486
  %v1551 = vunpack.c.l.b16 %v1487
  %v1552 = vunpack.c.l.b16 %v1488
  %v1553 = vunpack.c.l.b16 %v1489
  %v1554 = vunpack.c.l.b16 %v1490
  %v1555 = vunpack.c.l.b16 %v1491
  %v1556 = vunpack.c.l.b16 %v1492
  %v1557 = vunpack.c.l.b16 %v1493
  %v1558 = vunpack.c.l.b16 %v1494
  %v1559 = vunpack.c.l.b16 %v1495
  %v1560 = vunpack.c.l.b16 %v1496
  %v1561 = vunpack.c.l.b16 %v1497
  %v1562 = vunpack.c.l.b16 %v1498
  %v1563 = vpack.c.b16 %v1532, %v1531
  %v1564 = vpack.c.b16 %v1534, %v1533
  %v1565 = vpack.c.b16 %v1536, %v1535
  %v1566 = vpack.c.b16 %v1538, %v1537
  %v1567 = vpack.c.b16 %v1540, %v1539
  %v1568 = vpack.c.b16 %v1542, %v1541
  %v1569 = vpack.c.b16 %v1544, %v1543
  %v1570 = vpack.c.b16 %v1546, %v1545
  %v1571 = vpack.c.b16 %v1548, %v1547
  %v1572 = vpack.c.b16 %v1550, %v1549
  %v1573 = vpack.c.b16 %v1552, %v1551
  %v1574 = vpack.c.b16 %v1554, %v1553
  %v1575 = vpack.c.b16 %v1556, %v1555
  %v1576 = vpack.c.b16 %v1558, %v1557
  %v1577 = vpack.c.b16 %v1560, %v1559
  %v1578 = vpack.c.b16 %v1562, %v1561
  %1595 = vmatprep.subr.bf16.mxu0 0
  %1596 = vmatpush1.bf16.msra.mxu0 %v1563
  %1597 = vmatprep.subr.bf16.mxu0 0
  %1598 = vmatpush1.bf16.msra.mxu0 %v1564
  %1599 = vmatprep.subr.bf16.mxu0 0
  %1600 = vmatpush1.bf16.msra.mxu0 %v1565
  %1601 = vmatprep.subr.bf16.mxu0 0
  %1602 = vmatpush1.bf16.msra.mxu0 %v1566
  %1603 = vmatprep.subr.bf16.mxu0 0
  %1604 = vmatpush1.bf16.msra.mxu0 %v1567
  %1605 = vmatprep.subr.bf16.mxu0 0
  %1606 = vmatpush1.bf16.msra.mxu0 %v1568
  %1607 = vmatprep.subr.bf16.mxu0 0
  %1608 = vmatpush1.bf16.msra.mxu0 %v1569
  %1609 = vmatprep.subr.bf16.mxu0 0
  %1610 = vmatpush1.bf16.msra.mxu0 %v1570
  %1611 = vmatprep.subr.bf16.mxu0 0
  %1612 = vmatpush1.bf16.msra.mxu0 %v1571
  %1613 = vmatprep.subr.bf16.mxu0 0
  %1614 = vmatpush1.bf16.msra.mxu0 %v1572
  %1615 = vmatprep.subr.bf16.mxu0 0
  %1616 = vmatpush1.bf16.msra.mxu0 %v1573
  %1617 = vmatprep.subr.bf16.mxu0 0
  %1618 = vmatpush1.bf16.msra.mxu0 %v1574
  %1619 = vmatprep.subr.bf16.mxu0 0
  %1620 = vmatpush1.bf16.msra.mxu0 %v1575
  %1621 = vmatprep.subr.bf16.mxu0 0
  %1622 = vmatpush1.bf16.msra.mxu0 %v1576
  %1623 = vmatprep.subr.bf16.mxu0 0
  %1624 = vmatpush1.bf16.msra.mxu0 %v1577
  %1625 = vmatprep.subr.bf16.mxu0 0
  %1626 = vmatpush1.bf16.msra.mxu0 %v1578
  %1627 = vmatprep.mubr.bf16.mxu0 %v1465
  %1628 = vmatmul.mubr.bf16.gmra.mrb[0].mxu0 %v1464
  %v1629 = vpop.f32.mrb[0].mxu0
  %v1630 = vadd.f32 0.0, %v1629
  %v1631 = vpop.f32.mrb[0].mxu0
  %v1632 = vpop.f32.mrb[0].mxu0
  %v1633 = vpop.f32.mrb[0].mxu0
  %1634 = vdwg.mxu0
  %v1635 = vadd.f32 %v1415, %v1630
  %s1636 = scalar_lea.vmem %s0, 7
  %v1637 = vld [vmem:[%s1636] sm:$0x1]
  %v1639 = vsel %vm93, %v1637, 0
  %1641 = vmatprep.subr.bf16.mxu0 %v84
  %1642 = vmatpush1.bf16.msra.mxu0 %v83
  %1643 = vmatprep.subr.bf16.mxu0 %v86
  %1644 = vmatpush1.bf16.msra.mxu0 %v85
  %1645 = vmatprep.subr.bf16.mxu0 %v102
  %1646 = vmatpush1.bf16.msra.mxu0 %v99
  %1647 = vmatprep.subr.bf16.mxu0 0
  %1648 = vmatpush1.bf16.msra.mxu0 0
  %1649 = vmatprep.subr.bf16.mxu0 0
  %1650 = vmatpush1.bf16.msra.mxu0 0
  %1651 = vmatprep.subr.bf16.mxu0 0
  %1652 = vmatpush1.bf16.msra.mxu0 0
  %1653 = vmatprep.subr.bf16.mxu0 0
  %1654 = vmatpush1.bf16.msra.mxu0 0
  %1655 = vmatprep.subr.bf16.mxu0 0
  %1656 = vmatpush1.bf16.msra.mxu0 0
  %1657 = vmatprep.subr.bf16.mxu0 0
  %1658 = vmatpush1.bf16.msra.mxu0 0
  %1659 = vmatprep.subr.bf16.mxu0 0
  %1660 = vmatpush1.bf16.msra.mxu0 0
  %1661 = vmatprep.subr.bf16.mxu0 0
  %1662 = vmatpush1.bf16.msra.mxu0 0
  %1663 = vmatprep.subr.bf16.mxu0 0
  %1664 = vmatpush1.bf16.msra.mxu0 0
  %1665 = vmatprep.subr.bf16.mxu0 0
  %1666 = vmatpush1.bf16.msra.mxu0 0
  %1667 = vmatprep.subr.bf16.mxu0 0
  %1668 = vmatpush1.bf16.msra.mxu0 0
  %1669 = vmatprep.subr.bf16.mxu0 0
  %1670 = vmatpush1.bf16.msra.mxu0 0
  %1671 = vmatprep.subr.bf16.mxu0 0
  %1672 = vmatpush1.bf16.msra.mxu0 0
  %1673 = vmatprep.mubr.bf16.mxu0 0
  %1674 = vmatmul.mubr.bf16.gmra.mrb[0].mxu0 %v1639
  %v1675 = vpop.f32.mrb[0].mxu0
  %v1676 = vadd.f32 %v61, %v1675
  %v1677 = vpop.f32.mrb[0].mxu0
  %v1678 = vadd.f32 %v65, %v1677
  %v1679 = vpop.f32.mrb[0].mxu0
  %v1680 = vpop.f32.mrb[0].mxu0
  %1681 = vdwg.mxu0
  %v1682 = vmax.f32 %v1676, 0.0
  %v1683 = vmax.f32 %v1678, 0.0
  %v1684 = vpack.c.bf16 %v1682, %v1682
  %v1685 = vpack.c.bf16 %v1683, %v1683
  %s1686 = scalar_lea.vmem %s5, 896
  %v1687 = vld [vmem:[%s1686] sm:$0xf]
  %v1688 = vld [vmem:[%s1686 + $0x4] sm:$0xf]
  %v1689 = vld [vmem:[%s1686 + $0x8] sm:$0xf]
  %v1690 = vld [vmem:[%s1686 + $0xc] sm:$0xf]
  %v1691 = vld [vmem:[%s1686 + $0x10] sm:$0xf]
  %v1692 = vld [vmem:[%s1686 + $0x14] sm:$0xf]
  %v1693 = vld [vmem:[%s1686 + $0x18] sm:$0xf]
  %v1694 = vld [vmem:[%s1686 + $0x1c] sm:$0xf]
  %v1695 = vld [vmem:[%s1686 + $0x20] sm:$0xf]
  %v1696 = vld [vmem:[%s1686 + $0x24] sm:$0xf]
  %v1697 = vld [vmem:[%s1686 + $0x28] sm:$0xf]
  %v1698 = vld [vmem:[%s1686 + $0x2c] sm:$0xf]
  %v1699 = vld [vmem:[%s1686 + $0x30] sm:$0xf]
  %v1700 = vld [vmem:[%s1686 + $0x34] sm:$0xf]
  %v1701 = vld [vmem:[%s1686 + $0x38] sm:$0xf]
  %v1702 = vld [vmem:[%s1686 + $0x3c] sm:$0xf]
  %v1703 = vld [vmem:[%s1686 + $0x40] sm:$0xf]
  %v1704 = vld [vmem:[%s1686 + $0x44] sm:$0xf]
  %v1705 = vld [vmem:[%s1686 + $0x48] sm:$0xf]
  %v1706 = vld [vmem:[%s1686 + $0x4c] sm:$0xf]
  %v1707 = vld [vmem:[%s1686 + $0x50] sm:$0xf]
  %v1708 = vld [vmem:[%s1686 + $0x54] sm:$0xf]
  %v1709 = vld [vmem:[%s1686 + $0x58] sm:$0xf]
  %v1710 = vld [vmem:[%s1686 + $0x5c] sm:$0xf]
  %v1711 = vld [vmem:[%s1686 + $0x60] sm:$0xf]
  %v1712 = vld [vmem:[%s1686 + $0x64] sm:$0xf]
  %v1713 = vld [vmem:[%s1686 + $0x68] sm:$0xf]
  %v1714 = vld [vmem:[%s1686 + $0x6c] sm:$0xf]
  %v1715 = vld [vmem:[%s1686 + $0x70] sm:$0xf]
  %v1716 = vld [vmem:[%s1686 + $0x74] sm:$0xf]
  %v1717 = vld [vmem:[%s1686 + $0x78] sm:$0xf]
  %v1718 = vld [vmem:[%s1686 + $0x7c] sm:$0xf]
  %v1751 = vunpack.c.l.b16 %v1687
  %v1752 = vunpack.c.l.b16 %v1688
  %v1753 = vunpack.c.l.b16 %v1689
  %v1754 = vunpack.c.l.b16 %v1690
  %v1755 = vunpack.c.l.b16 %v1691
  %v1756 = vunpack.c.l.b16 %v1692
  %v1757 = vunpack.c.l.b16 %v1693
  %v1758 = vunpack.c.l.b16 %v1694
  %v1759 = vunpack.c.l.b16 %v1695
  %v1760 = vunpack.c.l.b16 %v1696
  %v1761 = vunpack.c.l.b16 %v1697
  %v1762 = vunpack.c.l.b16 %v1698
  %v1763 = vunpack.c.l.b16 %v1699
  %v1764 = vunpack.c.l.b16 %v1700
  %v1765 = vunpack.c.l.b16 %v1701
  %v1766 = vunpack.c.l.b16 %v1702
  %v1767 = vunpack.c.l.b16 %v1703
  %v1768 = vunpack.c.l.b16 %v1704
  %v1769 = vunpack.c.l.b16 %v1705
  %v1770 = vunpack.c.l.b16 %v1706
  %v1771 = vunpack.c.l.b16 %v1707
  %v1772 = vunpack.c.l.b16 %v1708
  %v1773 = vunpack.c.l.b16 %v1709
  %v1774 = vunpack.c.l.b16 %v1710
  %v1775 = vunpack.c.l.b16 %v1711
  %v1776 = vunpack.c.l.b16 %v1712
  %v1777 = vunpack.c.l.b16 %v1713
  %v1778 = vunpack.c.l.b16 %v1714
  %v1779 = vunpack.c.l.b16 %v1715
  %v1780 = vunpack.c.l.b16 %v1716
  %v1781 = vunpack.c.l.b16 %v1717
  %v1782 = vunpack.c.l.b16 %v1718
  %v1783 = vpack.c.b16 %v1752, %v1751
  %v1784 = vpack.c.b16 %v1754, %v1753
  %v1785 = vpack.c.b16 %v1756, %v1755
  %v1786 = vpack.c.b16 %v1758, %v1757
  %v1787 = vpack.c.b16 %v1760, %v1759
  %v1788 = vpack.c.b16 %v1762, %v1761
  %v1789 = vpack.c.b16 %v1764, %v1763
  %v1790 = vpack.c.b16 %v1766, %v1765
  %v1791 = vpack.c.b16 %v1768, %v1767
  %v1792 = vpack.c.b16 %v1770, %v1769
  %v1793 = vpack.c.b16 %v1772, %v1771
  %v1794 = vpack.c.b16 %v1774, %v1773
  %v1795 = vpack.c.b16 %v1776, %v1775
  %v1796 = vpack.c.b16 %v1778, %v1777
  %v1797 = vpack.c.b16 %v1780, %v1779
  %v1798 = vpack.c.b16 %v1782, %v1781
  %1815 = vmatprep.subr.bf16.mxu0 0
  %1816 = vmatpush1.bf16.msra.mxu0 %v1783
  %1817 = vmatprep.subr.bf16.mxu0 0
  %1818 = vmatpush1.bf16.msra.mxu0 %v1784
  %1819 = vmatprep.subr.bf16.mxu0 0
  %1820 = vmatpush1.bf16.msra.mxu0 %v1785
  %1821 = vmatprep.subr.bf16.mxu0 0
  %1822 = vmatpush1.bf16.msra.mxu0 %v1786
  %1823 = vmatprep.subr.bf16.mxu0 0
  %1824 = vmatpush1.bf16.msra.mxu0 %v1787
  %1825 = vmatprep.subr.bf16.mxu0 0
  %1826 = vmatpush1.bf16.msra.mxu0 %v1788
  %1827 = vmatprep.subr.bf16.mxu0 0
  %1828 = vmatpush1.bf16.msra.mxu0 %v1789
  %1829 = vmatprep.subr.bf16.mxu0 0
  %1830 = vmatpush1.bf16.msra.mxu0 %v1790
  %1831 = vmatprep.subr.bf16.mxu0 0
  %1832 = vmatpush1.bf16.msra.mxu0 %v1791
  %1833 = vmatprep.subr.bf16.mxu0 0
  %1834 = vmatpush1.bf16.msra.mxu0 %v1792
  %1835 = vmatprep.subr.bf16.mxu0 0
  %1836 = vmatpush1.bf16.msra.mxu0 %v1793
  %1837 = vmatprep.subr.bf16.mxu0 0
  %1838 = vmatpush1.bf16.msra.mxu0 %v1794
  %1839 = vmatprep.subr.bf16.mxu0 0
  %1840 = vmatpush1.bf16.msra.mxu0 %v1795
  %1841 = vmatprep.subr.bf16.mxu0 0
  %1842 = vmatpush1.bf16.msra.mxu0 %v1796
  %1843 = vmatprep.subr.bf16.mxu0 0
  %1844 = vmatpush1.bf16.msra.mxu0 %v1797
  %1845 = vmatprep.subr.bf16.mxu0 0
  %1846 = vmatpush1.bf16.msra.mxu0 %v1798
  %1847 = vmatprep.mubr.bf16.mxu0 %v1685
  %1848 = vmatmul.mubr.bf16.gmra.mrb[0].mxu0 %v1684
  %v1849 = vpop.f32.mrb[0].mxu0
  %v1850 = vadd.f32 0.0, %v1849
  %v1851 = vpop.f32.mrb[0].mxu0
  %v1852 = vpop.f32.mrb[0].mxu0
  %v1853 = vpop.f32.mrb[0].mxu0
  %1854 = vdwg.mxu0
  %v1855 = vadd.f32 %v1635, %v1850
  %s1856 = scalar_lea.vmem %s0, 8
  %v1857 = vld [vmem:[%s1856] sm:$0x1]
  %v1859 = vsel %vm93, %v1857, 0
  %1861 = vmatprep.subr.bf16.mxu0 %v84
  %1862 = vmatpush1.bf16.msra.mxu0 %v83
  %1863 = vmatprep.subr.bf16.mxu0 %v86
  %1864 = vmatpush1.bf16.msra.mxu0 %v85
  %1865 = vmatprep.subr.bf16.mxu0 %v102
  %1866 = vmatpush1.bf16.msra.mxu0 %v99
  %1867 = vmatprep.subr.bf16.mxu0 0
  %1868 = vmatpush1.bf16.msra.mxu0 0
  %1869 = vmatprep.subr.bf16.mxu0 0
  %1870 = vmatpush1.bf16.msra.mxu0 0
  %1871 = vmatprep.subr.bf16.mxu0 0
  %1872 = vmatpush1.bf16.msra.mxu0 0
  %1873 = vmatprep.subr.bf16.mxu0 0
  %1874 = vmatpush1.bf16.msra.mxu0 0
  %1875 = vmatprep.subr.bf16.mxu0 0
  %1876 = vmatpush1.bf16.msra.mxu0 0
  %1877 = vmatprep.subr.bf16.mxu0 0
  %1878 = vmatpush1.bf16.msra.mxu0 0
  %1879 = vmatprep.subr.bf16.mxu0 0
  %1880 = vmatpush1.bf16.msra.mxu0 0
  %1881 = vmatprep.subr.bf16.mxu0 0
  %1882 = vmatpush1.bf16.msra.mxu0 0
  %1883 = vmatprep.subr.bf16.mxu0 0
  %1884 = vmatpush1.bf16.msra.mxu0 0
  %1885 = vmatprep.subr.bf16.mxu0 0
  %1886 = vmatpush1.bf16.msra.mxu0 0
  %1887 = vmatprep.subr.bf16.mxu0 0
  %1888 = vmatpush1.bf16.msra.mxu0 0
  %1889 = vmatprep.subr.bf16.mxu0 0
  %1890 = vmatpush1.bf16.msra.mxu0 0
  %1891 = vmatprep.subr.bf16.mxu0 0
  %1892 = vmatpush1.bf16.msra.mxu0 0
  %1893 = vmatprep.mubr.bf16.mxu0 0
  %1894 = vmatmul.mubr.bf16.gmra.mrb[0].mxu0 %v1859
  %v1895 = vpop.f32.mrb[0].mxu0
  %v1896 = vadd.f32 %v61, %v1895
  %v1897 = vpop.f32.mrb[0].mxu0
  %v1898 = vadd.f32 %v65, %v1897
  %v1899 = vpop.f32.mrb[0].mxu0
  %v1900 = vpop.f32.mrb[0].mxu0
  %1901 = vdwg.mxu0
  %v1902 = vmax.f32 %v1896, 0.0
  %v1903 = vmax.f32 %v1898, 0.0
  %v1904 = vpack.c.bf16 %v1902, %v1902
  %v1905 = vpack.c.bf16 %v1903, %v1903
  %s1906 = scalar_lea.vmem %s5, 1024
  %v1907 = vld [vmem:[%s1906] sm:$0xf]
  %v1908 = vld [vmem:[%s1906 + $0x4] sm:$0xf]
  %v1909 = vld [vmem:[%s1906 + $0x8] sm:$0xf]
  %v1910 = vld [vmem:[%s1906 + $0xc] sm:$0xf]
  %v1911 = vld [vmem:[%s1906 + $0x10] sm:$0xf]
  %v1912 = vld [vmem:[%s1906 + $0x14] sm:$0xf]
  %v1913 = vld [vmem:[%s1906 + $0x18] sm:$0xf]
  %v1914 = vld [vmem:[%s1906 + $0x1c] sm:$0xf]
  %v1915 = vld [vmem:[%s1906 + $0x20] sm:$0xf]
  %v1916 = vld [vmem:[%s1906 + $0x24] sm:$0xf]
  %v1917 = vld [vmem:[%s1906 + $0x28] sm:$0xf]
  %v1918 = vld [vmem:[%s1906 + $0x2c] sm:$0xf]
  %v1919 = vld [vmem:[%s1906 + $0x30] sm:$0xf]
  %v1920 = vld [vmem:[%s1906 + $0x34] sm:$0xf]
  %v1921 = vld [vmem:[%s1906 + $0x38] sm:$0xf]
  %v1922 = vld [vmem:[%s1906 + $0x3c] sm:$0xf]
  %v1923 = vld [vmem:[%s1906 + $0x40] sm:$0xf]
  %v1924 = vld [vmem:[%s1906 + $0x44] sm:$0xf]
  %v1925 = vld [vmem:[%s1906 + $0x48] sm:$0xf]
  %v1926 = vld [vmem:[%s1906 + $0x4c] sm:$0xf]
  %v1927 = vld [vmem:[%s1906 + $0x50] sm:$0xf]
  %v1928 = vld [vmem:[%s1906 + $0x54] sm:$0xf]
  %v1929 = vld [vmem:[%s1906 + $0x58] sm:$0xf]
  %v1930 = vld [vmem:[%s1906 + $0x5c] sm:$0xf]
  %v1931 = vld [vmem:[%s1906 + $0x60] sm:$0xf]
  %v1932 = vld [vmem:[%s1906 + $0x64] sm:$0xf]
  %v1933 = vld [vmem:[%s1906 + $0x68] sm:$0xf]
  %v1934 = vld [vmem:[%s1906 + $0x6c] sm:$0xf]
  %v1935 = vld [vmem:[%s1906 + $0x70] sm:$0xf]
  %v1936 = vld [vmem:[%s1906 + $0x74] sm:$0xf]
  %v1937 = vld [vmem:[%s1906 + $0x78] sm:$0xf]
  %v1938 = vld [vmem:[%s1906 + $0x7c] sm:$0xf]
  %v1971 = vunpack.c.l.b16 %v1907
  %v1972 = vunpack.c.l.b16 %v1908
  %v1973 = vunpack.c.l.b16 %v1909
  %v1974 = vunpack.c.l.b16 %v1910
  %v1975 = vunpack.c.l.b16 %v1911
  %v1976 = vunpack.c.l.b16 %v1912
  %v1977 = vunpack.c.l.b16 %v1913
  %v1978 = vunpack.c.l.b16 %v1914
  %v1979 = vunpack.c.l.b16 %v1915
  %v1980 = vunpack.c.l.b16 %v1916
  %v1981 = vunpack.c.l.b16 %v1917
  %v1982 = vunpack.c.l.b16 %v1918
  %v1983 = vunpack.c.l.b16 %v1919
  %v1984 = vunpack.c.l.b16 %v1920
  %v1985 = vunpack.c.l.b16 %v1921
  %v1986 = vunpack.c.l.b16 %v1922
  %v1987 = vunpack.c.l.b16 %v1923
  %v1988 = vunpack.c.l.b16 %v1924
  %v1989 = vunpack.c.l.b16 %v1925
  %v1990 = vunpack.c.l.b16 %v1926
  %v1991 = vunpack.c.l.b16 %v1927
  %v1992 = vunpack.c.l.b16 %v1928
  %v1993 = vunpack.c.l.b16 %v1929
  %v1994 = vunpack.c.l.b16 %v1930
  %v1995 = vunpack.c.l.b16 %v1931
  %v1996 = vunpack.c.l.b16 %v1932
  %v1997 = vunpack.c.l.b16 %v1933
  %v1998 = vunpack.c.l.b16 %v1934
  %v1999 = vunpack.c.l.b16 %v1935
  %v2000 = vunpack.c.l.b16 %v1936
  %v2001 = vunpack.c.l.b16 %v1937
  %v2002 = vunpack.c.l.b16 %v1938
  %v2003 = vpack.c.b16 %v1972, %v1971
  %v2004 = vpack.c.b16 %v1974, %v1973
  %v2005 = vpack.c.b16 %v1976, %v1975
  %v2006 = vpack.c.b16 %v1978, %v1977
  %v2007 = vpack.c.b16 %v1980, %v1979
  %v2008 = vpack.c.b16 %v1982, %v1981
  %v2009 = vpack.c.b16 %v1984, %v1983
  %v2010 = vpack.c.b16 %v1986, %v1985
  %v2011 = vpack.c.b16 %v1988, %v1987
  %v2012 = vpack.c.b16 %v1990, %v1989
  %v2013 = vpack.c.b16 %v1992, %v1991
  %v2014 = vpack.c.b16 %v1994, %v1993
  %v2015 = vpack.c.b16 %v1996, %v1995
  %v2016 = vpack.c.b16 %v1998, %v1997
  %v2017 = vpack.c.b16 %v2000, %v1999
  %v2018 = vpack.c.b16 %v2002, %v2001
  %2035 = vmatprep.subr.bf16.mxu0 0
  %2036 = vmatpush1.bf16.msra.mxu0 %v2003
  %2037 = vmatprep.subr.bf16.mxu0 0
  %2038 = vmatpush1.bf16.msra.mxu0 %v2004
  %2039 = vmatprep.subr.bf16.mxu0 0
  %2040 = vmatpush1.bf16.msra.mxu0 %v2005
  %2041 = vmatprep.subr.bf16.mxu0 0
  %2042 = vmatpush1.bf16.msra.mxu0 %v2006
  %2043 = vmatprep.subr.bf16.mxu0 0
  %2044 = vmatpush1.bf16.msra.mxu0 %v2007
  %2045 = vmatprep.subr.bf16.mxu0 0
  %2046 = vmatpush1.bf16.msra.mxu0 %v2008
  %2047 = vmatprep.subr.bf16.mxu0 0
  %2048 = vmatpush1.bf16.msra.mxu0 %v2009
  %2049 = vmatprep.subr.bf16.mxu0 0
  %2050 = vmatpush1.bf16.msra.mxu0 %v2010
  %2051 = vmatprep.subr.bf16.mxu0 0
  %2052 = vmatpush1.bf16.msra.mxu0 %v2011
  %2053 = vmatprep.subr.bf16.mxu0 0
  %2054 = vmatpush1.bf16.msra.mxu0 %v2012
  %2055 = vmatprep.subr.bf16.mxu0 0
  %2056 = vmatpush1.bf16.msra.mxu0 %v2013
  %2057 = vmatprep.subr.bf16.mxu0 0
  %2058 = vmatpush1.bf16.msra.mxu0 %v2014
  %2059 = vmatprep.subr.bf16.mxu0 0
  %2060 = vmatpush1.bf16.msra.mxu0 %v2015
  %2061 = vmatprep.subr.bf16.mxu0 0
  %2062 = vmatpush1.bf16.msra.mxu0 %v2016
  %2063 = vmatprep.subr.bf16.mxu0 0
  %2064 = vmatpush1.bf16.msra.mxu0 %v2017
  %2065 = vmatprep.subr.bf16.mxu0 0
  %2066 = vmatpush1.bf16.msra.mxu0 %v2018
  %2067 = vmatprep.mubr.bf16.mxu0 %v1905
  %2068 = vmatmul.mubr.bf16.gmra.mrb[0].mxu0 %v1904
  %v2069 = vpop.f32.mrb[0].mxu0
  %v2070 = vadd.f32 0.0, %v2069
  %v2071 = vpop.f32.mrb[0].mxu0
  %v2072 = vpop.f32.mrb[0].mxu0
  %v2073 = vpop.f32.mrb[0].mxu0
  %2074 = vdwg.mxu0
  %v2075 = vadd.f32 %v1855, %v2070
  %s2076 = scalar_lea.vmem %s0, 9
  %v2077 = vld [vmem:[%s2076] sm:$0x1]
  %v2079 = vsel %vm93, %v2077, 0
  %2081 = vmatprep.subr.bf16.mxu0 %v84
  %2082 = vmatpush1.bf16.msra.mxu0 %v83
  %2083 = vmatprep.subr.bf16.mxu0 %v86
  %2084 = vmatpush1.bf16.msra.mxu0 %v85
  %2085 = vmatprep.subr.bf16.mxu0 %v102
  %2086 = vmatpush1.bf16.msra.mxu0 %v99
  %2087 = vmatprep.subr.bf16.mxu0 0
  %2088 = vmatpush1.bf16.msra.mxu0 0
  %2089 = vmatprep.subr.bf16.mxu0 0
  %2090 = vmatpush1.bf16.msra.mxu0 0
  %2091 = vmatprep.subr.bf16.mxu0 0
  %2092 = vmatpush1.bf16.msra.mxu0 0
  %2093 = vmatprep.subr.bf16.mxu0 0
  %2094 = vmatpush1.bf16.msra.mxu0 0
  %2095 = vmatprep.subr.bf16.mxu0 0
  %2096 = vmatpush1.bf16.msra.mxu0 0
  %2097 = vmatprep.subr.bf16.mxu0 0
  %2098 = vmatpush1.bf16.msra.mxu0 0
  %2099 = vmatprep.subr.bf16.mxu0 0
  %2100 = vmatpush1.bf16.msra.mxu0 0
  %2101 = vmatprep.subr.bf16.mxu0 0
  %2102 = vmatpush1.bf16.msra.mxu0 0
  %2103 = vmatprep.subr.bf16.mxu0 0
  %2104 = vmatpush1.bf16.msra.mxu0 0
  %2105 = vmatprep.subr.bf16.mxu0 0
  %2106 = vmatpush1.bf16.msra.mxu0 0
  %2107 = vmatprep.subr.bf16.mxu0 0
  %2108 = vmatpush1.bf16.msra.mxu0 0
  %2109 = vmatprep.subr.bf16.mxu0 0
  %2110 = vmatpush1.bf16.msra.mxu0 0
  %2111 = vmatprep.subr.bf16.mxu0 0
  %2112 = vmatpush1.bf16.msra.mxu0 0
  %2113 = vmatprep.mubr.bf16.mxu0 0
  %2114 = vmatmul.mubr.bf16.gmra.mrb[0].mxu0 %v2079
  %v2115 = vpop.f32.mrb[0].mxu0
  %v2116 = vadd.f32 %v61, %v2115
  %v2117 = vpop.f32.mrb[0].mxu0
  %v2118 = vadd.f32 %v65, %v2117
  %v2119 = vpop.f32.mrb[0].mxu0
  %v2120 = vpop.f32.mrb[0].mxu0
  %2121 = vdwg.mxu0
  %v2122 = vmax.f32 %v2116, 0.0
  %v2123 = vmax.f32 %v2118, 0.0
  %v2124 = vpack.c.bf16 %v2122, %v2122
  %v2125 = vpack.c.bf16 %v2123, %v2123
  %s2126 = scalar_lea.vmem %s5, 1152
  %v2127 = vld [vmem:[%s2126] sm:$0xf]
  %v2128 = vld [vmem:[%s2126 + $0x4] sm:$0xf]
  %v2129 = vld [vmem:[%s2126 + $0x8] sm:$0xf]
  %v2130 = vld [vmem:[%s2126 + $0xc] sm:$0xf]
  %v2131 = vld [vmem:[%s2126 + $0x10] sm:$0xf]
  %v2132 = vld [vmem:[%s2126 + $0x14] sm:$0xf]
  %v2133 = vld [vmem:[%s2126 + $0x18] sm:$0xf]
  %v2134 = vld [vmem:[%s2126 + $0x1c] sm:$0xf]
  %v2135 = vld [vmem:[%s2126 + $0x20] sm:$0xf]
  %v2136 = vld [vmem:[%s2126 + $0x24] sm:$0xf]
  %v2137 = vld [vmem:[%s2126 + $0x28] sm:$0xf]
  %v2138 = vld [vmem:[%s2126 + $0x2c] sm:$0xf]
  %v2139 = vld [vmem:[%s2126 + $0x30] sm:$0xf]
  %v2140 = vld [vmem:[%s2126 + $0x34] sm:$0xf]
  %v2141 = vld [vmem:[%s2126 + $0x38] sm:$0xf]
  %v2142 = vld [vmem:[%s2126 + $0x3c] sm:$0xf]
  %v2143 = vld [vmem:[%s2126 + $0x40] sm:$0xf]
  %v2144 = vld [vmem:[%s2126 + $0x44] sm:$0xf]
  %v2145 = vld [vmem:[%s2126 + $0x48] sm:$0xf]
  %v2146 = vld [vmem:[%s2126 + $0x4c] sm:$0xf]
  %v2147 = vld [vmem:[%s2126 + $0x50] sm:$0xf]
  %v2148 = vld [vmem:[%s2126 + $0x54] sm:$0xf]
  %v2149 = vld [vmem:[%s2126 + $0x58] sm:$0xf]
  %v2150 = vld [vmem:[%s2126 + $0x5c] sm:$0xf]
  %v2151 = vld [vmem:[%s2126 + $0x60] sm:$0xf]
  %v2152 = vld [vmem:[%s2126 + $0x64] sm:$0xf]
  %v2153 = vld [vmem:[%s2126 + $0x68] sm:$0xf]
  %v2154 = vld [vmem:[%s2126 + $0x6c] sm:$0xf]
  %v2155 = vld [vmem:[%s2126 + $0x70] sm:$0xf]
  %v2156 = vld [vmem:[%s2126 + $0x74] sm:$0xf]
  %v2157 = vld [vmem:[%s2126 + $0x78] sm:$0xf]
  %v2158 = vld [vmem:[%s2126 + $0x7c] sm:$0xf]
  %v2191 = vunpack.c.l.b16 %v2127
  %v2192 = vunpack.c.l.b16 %v2128
  %v2193 = vunpack.c.l.b16 %v2129
  %v2194 = vunpack.c.l.b16 %v2130
  %v2195 = vunpack.c.l.b16 %v2131
  %v2196 = vunpack.c.l.b16 %v2132
  %v2197 = vunpack.c.l.b16 %v2133
  %v2198 = vunpack.c.l.b16 %v2134
  %v2199 = vunpack.c.l.b16 %v2135
  %v2200 = vunpack.c.l.b16 %v2136
  %v2201 = vunpack.c.l.b16 %v2137
  %v2202 = vunpack.c.l.b16 %v2138
  %v2203 = vunpack.c.l.b16 %v2139
  %v2204 = vunpack.c.l.b16 %v2140
  %v2205 = vunpack.c.l.b16 %v2141
  %v2206 = vunpack.c.l.b16 %v2142
  %v2207 = vunpack.c.l.b16 %v2143
  %v2208 = vunpack.c.l.b16 %v2144
  %v2209 = vunpack.c.l.b16 %v2145
  %v2210 = vunpack.c.l.b16 %v2146
  %v2211 = vunpack.c.l.b16 %v2147
  %v2212 = vunpack.c.l.b16 %v2148
  %v2213 = vunpack.c.l.b16 %v2149
  %v2214 = vunpack.c.l.b16 %v2150
  %v2215 = vunpack.c.l.b16 %v2151
  %v2216 = vunpack.c.l.b16 %v2152
  %v2217 = vunpack.c.l.b16 %v2153
  %v2218 = vunpack.c.l.b16 %v2154
  %v2219 = vunpack.c.l.b16 %v2155
  %v2220 = vunpack.c.l.b16 %v2156
  %v2221 = vunpack.c.l.b16 %v2157
  %v2222 = vunpack.c.l.b16 %v2158
  %v2223 = vpack.c.b16 %v2192, %v2191
  %v2224 = vpack.c.b16 %v2194, %v2193
  %v2225 = vpack.c.b16 %v2196, %v2195
  %v2226 = vpack.c.b16 %v2198, %v2197
  %v2227 = vpack.c.b16 %v2200, %v2199
  %v2228 = vpack.c.b16 %v2202, %v2201
  %v2229 = vpack.c.b16 %v2204, %v2203
  %v2230 = vpack.c.b16 %v2206, %v2205
  %v2231 = vpack.c.b16 %v2208, %v2207
  %v2232 = vpack.c.b16 %v2210, %v2209
  %v2233 = vpack.c.b16 %v2212, %v2211
  %v2234 = vpack.c.b16 %v2214, %v2213
  %v2235 = vpack.c.b16 %v2216, %v2215
  %v2236 = vpack.c.b16 %v2218, %v2217
  %v2237 = vpack.c.b16 %v2220, %v2219
  %v2238 = vpack.c.b16 %v2222, %v2221
  %2255 = vmatprep.subr.bf16.mxu0 0
  %2256 = vmatpush1.bf16.msra.mxu0 %v2223
  %2257 = vmatprep.subr.bf16.mxu0 0
  %2258 = vmatpush1.bf16.msra.mxu0 %v2224
  %2259 = vmatprep.subr.bf16.mxu0 0
  %2260 = vmatpush1.bf16.msra.mxu0 %v2225
  %2261 = vmatprep.subr.bf16.mxu0 0
  %2262 = vmatpush1.bf16.msra.mxu0 %v2226
  %2263 = vmatprep.subr.bf16.mxu0 0
  %2264 = vmatpush1.bf16.msra.mxu0 %v2227
  %2265 = vmatprep.subr.bf16.mxu0 0
  %2266 = vmatpush1.bf16.msra.mxu0 %v2228
  %2267 = vmatprep.subr.bf16.mxu0 0
  %2268 = vmatpush1.bf16.msra.mxu0 %v2229
  %2269 = vmatprep.subr.bf16.mxu0 0
  %2270 = vmatpush1.bf16.msra.mxu0 %v2230
  %2271 = vmatprep.subr.bf16.mxu0 0
  %2272 = vmatpush1.bf16.msra.mxu0 %v2231
  %2273 = vmatprep.subr.bf16.mxu0 0
  %2274 = vmatpush1.bf16.msra.mxu0 %v2232
  %2275 = vmatprep.subr.bf16.mxu0 0
  %2276 = vmatpush1.bf16.msra.mxu0 %v2233
  %2277 = vmatprep.subr.bf16.mxu0 0
  %2278 = vmatpush1.bf16.msra.mxu0 %v2234
  %2279 = vmatprep.subr.bf16.mxu0 0
  %2280 = vmatpush1.bf16.msra.mxu0 %v2235
  %2281 = vmatprep.subr.bf16.mxu0 0
  %2282 = vmatpush1.bf16.msra.mxu0 %v2236
  %2283 = vmatprep.subr.bf16.mxu0 0
  %2284 = vmatpush1.bf16.msra.mxu0 %v2237
  %2285 = vmatprep.subr.bf16.mxu0 0
  %2286 = vmatpush1.bf16.msra.mxu0 %v2238
  %2287 = vmatprep.mubr.bf16.mxu0 %v2125
  %2288 = vmatmul.mubr.bf16.gmra.mrb[0].mxu0 %v2124
  %v2289 = vpop.f32.mrb[0].mxu0
  %v2290 = vadd.f32 0.0, %v2289
  %v2291 = vpop.f32.mrb[0].mxu0
  %v2292 = vpop.f32.mrb[0].mxu0
  %v2293 = vpop.f32.mrb[0].mxu0
  %2294 = vdwg.mxu0
  %v2295 = vadd.f32 %v2075, %v2290
  %s2296 = scalar_lea.vmem %s0, 10
  %v2297 = vld [vmem:[%s2296] sm:$0x1]
  %v2299 = vsel %vm93, %v2297, 0
  %2301 = vmatprep.subr.bf16.mxu0 %v84
  %2302 = vmatpush1.bf16.msra.mxu0 %v83
  %2303 = vmatprep.subr.bf16.mxu0 %v86
  %2304 = vmatpush1.bf16.msra.mxu0 %v85
  %2305 = vmatprep.subr.bf16.mxu0 %v102
  %2306 = vmatpush1.bf16.msra.mxu0 %v99
  %2307 = vmatprep.subr.bf16.mxu0 0
  %2308 = vmatpush1.bf16.msra.mxu0 0
  %2309 = vmatprep.subr.bf16.mxu0 0
  %2310 = vmatpush1.bf16.msra.mxu0 0
  %2311 = vmatprep.subr.bf16.mxu0 0
  %2312 = vmatpush1.bf16.msra.mxu0 0
  %2313 = vmatprep.subr.bf16.mxu0 0
  %2314 = vmatpush1.bf16.msra.mxu0 0
  %2315 = vmatprep.subr.bf16.mxu0 0
  %2316 = vmatpush1.bf16.msra.mxu0 0
  %2317 = vmatprep.subr.bf16.mxu0 0
  %2318 = vmatpush1.bf16.msra.mxu0 0
  %2319 = vmatprep.subr.bf16.mxu0 0
  %2320 = vmatpush1.bf16.msra.mxu0 0
  %2321 = vmatprep.subr.bf16.mxu0 0
  %2322 = vmatpush1.bf16.msra.mxu0 0
  %2323 = vmatprep.subr.bf16.mxu0 0
  %2324 = vmatpush1.bf16.msra.mxu0 0
  %2325 = vmatprep.subr.bf16.mxu0 0
  %2326 = vmatpush1.bf16.msra.mxu0 0
  %2327 = vmatprep.subr.bf16.mxu0 0
  %2328 = vmatpush1.bf16.msra.mxu0 0
  %2329 = vmatprep.subr.bf16.mxu0 0
  %2330 = vmatpush1.bf16.msra.mxu0 0
  %2331 = vmatprep.subr.bf16.mxu0 0
  %2332 = vmatpush1.bf16.msra.mxu0 0
  %2333 = vmatprep.mubr.bf16.mxu0 0
  %2334 = vmatmul.mubr.bf16.gmra.mrb[0].mxu0 %v2299
  %v2335 = vpop.f32.mrb[0].mxu0
  %v2336 = vadd.f32 %v61, %v2335
  %v2337 = vpop.f32.mrb[0].mxu0
  %v2338 = vadd.f32 %v65, %v2337
  %v2339 = vpop.f32.mrb[0].mxu0
  %v2340 = vpop.f32.mrb[0].mxu0
  %2341 = vdwg.mxu0
  %v2342 = vmax.f32 %v2336, 0.0
  %v2343 = vmax.f32 %v2338, 0.0
  %v2344 = vpack.c.bf16 %v2342, %v2342
  %v2345 = vpack.c.bf16 %v2343, %v2343
  %s2346 = scalar_lea.vmem %s5, 1280
  %v2347 = vld [vmem:[%s2346] sm:$0xf]
  %v2348 = vld [vmem:[%s2346 + $0x4] sm:$0xf]
  %v2349 = vld [vmem:[%s2346 + $0x8] sm:$0xf]
  %v2350 = vld [vmem:[%s2346 + $0xc] sm:$0xf]
  %v2351 = vld [vmem:[%s2346 + $0x10] sm:$0xf]
  %v2352 = vld [vmem:[%s2346 + $0x14] sm:$0xf]
  %v2353 = vld [vmem:[%s2346 + $0x18] sm:$0xf]
  %v2354 = vld [vmem:[%s2346 + $0x1c] sm:$0xf]
  %v2355 = vld [vmem:[%s2346 + $0x20] sm:$0xf]
  %v2356 = vld [vmem:[%s2346 + $0x24] sm:$0xf]
  %v2357 = vld [vmem:[%s2346 + $0x28] sm:$0xf]
  %v2358 = vld [vmem:[%s2346 + $0x2c] sm:$0xf]
  %v2359 = vld [vmem:[%s2346 + $0x30] sm:$0xf]
  %v2360 = vld [vmem:[%s2346 + $0x34] sm:$0xf]
  %v2361 = vld [vmem:[%s2346 + $0x38] sm:$0xf]
  %v2362 = vld [vmem:[%s2346 + $0x3c] sm:$0xf]
  %v2363 = vld [vmem:[%s2346 + $0x40] sm:$0xf]
  %v2364 = vld [vmem:[%s2346 + $0x44] sm:$0xf]
  %v2365 = vld [vmem:[%s2346 + $0x48] sm:$0xf]
  %v2366 = vld [vmem:[%s2346 + $0x4c] sm:$0xf]
  %v2367 = vld [vmem:[%s2346 + $0x50] sm:$0xf]
  %v2368 = vld [vmem:[%s2346 + $0x54] sm:$0xf]
  %v2369 = vld [vmem:[%s2346 + $0x58] sm:$0xf]
  %v2370 = vld [vmem:[%s2346 + $0x5c] sm:$0xf]
  %v2371 = vld [vmem:[%s2346 + $0x60] sm:$0xf]
  %v2372 = vld [vmem:[%s2346 + $0x64] sm:$0xf]
  %v2373 = vld [vmem:[%s2346 + $0x68] sm:$0xf]
  %v2374 = vld [vmem:[%s2346 + $0x6c] sm:$0xf]
  %v2375 = vld [vmem:[%s2346 + $0x70] sm:$0xf]
  %v2376 = vld [vmem:[%s2346 + $0x74] sm:$0xf]
  %v2377 = vld [vmem:[%s2346 + $0x78] sm:$0xf]
  %v2378 = vld [vmem:[%s2346 + $0x7c] sm:$0xf]
  %v2411 = vunpack.c.l.b16 %v2347
  %v2412 = vunpack.c.l.b16 %v2348
  %v2413 = vunpack.c.l.b16 %v2349
  %v2414 = vunpack.c.l.b16 %v2350
  %v2415 = vunpack.c.l.b16 %v2351
  %v2416 = vunpack.c.l.b16 %v2352
  %v2417 = vunpack.c.l.b16 %v2353
  %v2418 = vunpack.c.l.b16 %v2354
  %v2419 = vunpack.c.l.b16 %v2355
  %v2420 = vunpack.c.l.b16 %v2356
  %v2421 = vunpack.c.l.b16 %v2357
  %v2422 = vunpack.c.l.b16 %v2358
  %v2423 = vunpack.c.l.b16 %v2359
  %v2424 = vunpack.c.l.b16 %v2360
  %v2425 = vunpack.c.l.b16 %v2361
  %v2426 = vunpack.c.l.b16 %v2362
  %v2427 = vunpack.c.l.b16 %v2363
  %v2428 = vunpack.c.l.b16 %v2364
  %v2429 = vunpack.c.l.b16 %v2365
  %v2430 = vunpack.c.l.b16 %v2366
  %v2431 = vunpack.c.l.b16 %v2367
  %v2432 = vunpack.c.l.b16 %v2368
  %v2433 = vunpack.c.l.b16 %v2369
  %v2434 = vunpack.c.l.b16 %v2370
  %v2435 = vunpack.c.l.b16 %v2371
  %v2436 = vunpack.c.l.b16 %v2372
  %v2437 = vunpack.c.l.b16 %v2373
  %v2438 = vunpack.c.l.b16 %v2374
  %v2439 = vunpack.c.l.b16 %v2375
  %v2440 = vunpack.c.l.b16 %v2376
  %v2441 = vunpack.c.l.b16 %v2377
  %v2442 = vunpack.c.l.b16 %v2378
  %v2443 = vpack.c.b16 %v2412, %v2411
  %v2444 = vpack.c.b16 %v2414, %v2413
  %v2445 = vpack.c.b16 %v2416, %v2415
  %v2446 = vpack.c.b16 %v2418, %v2417
  %v2447 = vpack.c.b16 %v2420, %v2419
  %v2448 = vpack.c.b16 %v2422, %v2421
  %v2449 = vpack.c.b16 %v2424, %v2423
  %v2450 = vpack.c.b16 %v2426, %v2425
  %v2451 = vpack.c.b16 %v2428, %v2427
  %v2452 = vpack.c.b16 %v2430, %v2429
  %v2453 = vpack.c.b16 %v2432, %v2431
  %v2454 = vpack.c.b16 %v2434, %v2433
  %v2455 = vpack.c.b16 %v2436, %v2435
  %v2456 = vpack.c.b16 %v2438, %v2437
  %v2457 = vpack.c.b16 %v2440, %v2439
  %v2458 = vpack.c.b16 %v2442, %v2441
  %2475 = vmatprep.subr.bf16.mxu0 0
  %2476 = vmatpush1.bf16.msra.mxu0 %v2443
  %2477 = vmatprep.subr.bf16.mxu0 0
  %2478 = vmatpush1.bf16.msra.mxu0 %v2444
  %2479 = vmatprep.subr.bf16.mxu0 0
  %2480 = vmatpush1.bf16.msra.mxu0 %v2445
  %2481 = vmatprep.subr.bf16.mxu0 0
  %2482 = vmatpush1.bf16.msra.mxu0 %v2446
  %2483 = vmatprep.subr.bf16.mxu0 0
  %2484 = vmatpush1.bf16.msra.mxu0 %v2447
  %2485 = vmatprep.subr.bf16.mxu0 0
  %2486 = vmatpush1.bf16.msra.mxu0 %v2448
  %2487 = vmatprep.subr.bf16.mxu0 0
  %2488 = vmatpush1.bf16.msra.mxu0 %v2449
  %2489 = vmatprep.subr.bf16.mxu0 0
  %2490 = vmatpush1.bf16.msra.mxu0 %v2450
  %2491 = vmatprep.subr.bf16.mxu0 0
  %2492 = vmatpush1.bf16.msra.mxu0 %v2451
  %2493 = vmatprep.subr.bf16.mxu0 0
  %2494 = vmatpush1.bf16.msra.mxu0 %v2452
  %2495 = vmatprep.subr.bf16.mxu0 0
  %2496 = vmatpush1.bf16.msra.mxu0 %v2453
  %2497 = vmatprep.subr.bf16.mxu0 0
  %2498 = vmatpush1.bf16.msra.mxu0 %v2454
  %2499 = vmatprep.subr.bf16.mxu0 0
  %2500 = vmatpush1.bf16.msra.mxu0 %v2455
  %2501 = vmatprep.subr.bf16.mxu0 0
  %2502 = vmatpush1.bf16.msra.mxu0 %v2456
  %2503 = vmatprep.subr.bf16.mxu0 0
  %2504 = vmatpush1.bf16.msra.mxu0 %v2457
  %2505 = vmatprep.subr.bf16.mxu0 0
  %2506 = vmatpush1.bf16.msra.mxu0 %v2458
  %2507 = vmatprep.mubr.bf16.mxu0 %v2345
  %2508 = vmatmul.mubr.bf16.gmra.mrb[0].mxu0 %v2344
  %v2509 = vpop.f32.mrb[0].mxu0
  %v2510 = vadd.f32 0.0, %v2509
  %v2511 = vpop.f32.mrb[0].mxu0
  %v2512 = vpop.f32.mrb[0].mxu0
  %v2513 = vpop.f32.mrb[0].mxu0
  %2514 = vdwg.mxu0
  %v2515 = vadd.f32 %v2295, %v2510
  %s2516 = scalar_lea.vmem %s0, 11
  %v2517 = vld [vmem:[%s2516] sm:$0x1]
  %v2519 = vsel %vm93, %v2517, 0
  %2521 = vmatprep.subr.bf16.mxu0 %v84
  %2522 = vmatpush1.bf16.msra.mxu0 %v83
  %2523 = vmatprep.subr.bf16.mxu0 %v86
  %2524 = vmatpush1.bf16.msra.mxu0 %v85
  %2525 = vmatprep.subr.bf16.mxu0 %v102
  %2526 = vmatpush1.bf16.msra.mxu0 %v99
  %2527 = vmatprep.subr.bf16.mxu0 0
  %2528 = vmatpush1.bf16.msra.mxu0 0
  %2529 = vmatprep.subr.bf16.mxu0 0
  %2530 = vmatpush1.bf16.msra.mxu0 0
  %2531 = vmatprep.subr.bf16.mxu0 0
  %2532 = vmatpush1.bf16.msra.mxu0 0
  %2533 = vmatprep.subr.bf16.mxu0 0
  %2534 = vmatpush1.bf16.msra.mxu0 0
  %2535 = vmatprep.subr.bf16.mxu0 0
  %2536 = vmatpush1.bf16.msra.mxu0 0
  %2537 = vmatprep.subr.bf16.mxu0 0
  %2538 = vmatpush1.bf16.msra.mxu0 0
  %2539 = vmatprep.subr.bf16.mxu0 0
  %2540 = vmatpush1.bf16.msra.mxu0 0
  %2541 = vmatprep.subr.bf16.mxu0 0
  %2542 = vmatpush1.bf16.msra.mxu0 0
  %2543 = vmatprep.subr.bf16.mxu0 0
  %2544 = vmatpush1.bf16.msra.mxu0 0
  %2545 = vmatprep.subr.bf16.mxu0 0
  %2546 = vmatpush1.bf16.msra.mxu0 0
  %2547 = vmatprep.subr.bf16.mxu0 0
  %2548 = vmatpush1.bf16.msra.mxu0 0
  %2549 = vmatprep.subr.bf16.mxu0 0
  %2550 = vmatpush1.bf16.msra.mxu0 0
  %2551 = vmatprep.subr.bf16.mxu0 0
  %2552 = vmatpush1.bf16.msra.mxu0 0
  %2553 = vmatprep.mubr.bf16.mxu0 0
  %2554 = vmatmul.mubr.bf16.gmra.mrb[0].mxu0 %v2519
  %v2555 = vpop.f32.mrb[0].mxu0
  %v2556 = vadd.f32 %v61, %v2555
  %v2557 = vpop.f32.mrb[0].mxu0
  %v2558 = vadd.f32 %v65, %v2557
  %v2559 = vpop.f32.mrb[0].mxu0
  %v2560 = vpop.f32.mrb[0].mxu0
  %2561 = vdwg.mxu0
  %v2562 = vmax.f32 %v2556, 0.0
  %v2563 = vmax.f32 %v2558, 0.0
  %v2564 = vpack.c.bf16 %v2562, %v2562
  %v2565 = vpack.c.bf16 %v2563, %v2563
  %s2566 = scalar_lea.vmem %s5, 1408
  %v2567 = vld [vmem:[%s2566] sm:$0xf]
  %v2568 = vld [vmem:[%s2566 + $0x4] sm:$0xf]
  %v2569 = vld [vmem:[%s2566 + $0x8] sm:$0xf]
  %v2570 = vld [vmem:[%s2566 + $0xc] sm:$0xf]
  %v2571 = vld [vmem:[%s2566 + $0x10] sm:$0xf]
  %v2572 = vld [vmem:[%s2566 + $0x14] sm:$0xf]
  %v2573 = vld [vmem:[%s2566 + $0x18] sm:$0xf]
  %v2574 = vld [vmem:[%s2566 + $0x1c] sm:$0xf]
  %v2575 = vld [vmem:[%s2566 + $0x20] sm:$0xf]
  %v2576 = vld [vmem:[%s2566 + $0x24] sm:$0xf]
  %v2577 = vld [vmem:[%s2566 + $0x28] sm:$0xf]
  %v2578 = vld [vmem:[%s2566 + $0x2c] sm:$0xf]
  %v2579 = vld [vmem:[%s2566 + $0x30] sm:$0xf]
  %v2580 = vld [vmem:[%s2566 + $0x34] sm:$0xf]
  %v2581 = vld [vmem:[%s2566 + $0x38] sm:$0xf]
  %v2582 = vld [vmem:[%s2566 + $0x3c] sm:$0xf]
  %v2583 = vld [vmem:[%s2566 + $0x40] sm:$0xf]
  %v2584 = vld [vmem:[%s2566 + $0x44] sm:$0xf]
  %v2585 = vld [vmem:[%s2566 + $0x48] sm:$0xf]
  %v2586 = vld [vmem:[%s2566 + $0x4c] sm:$0xf]
  %v2587 = vld [vmem:[%s2566 + $0x50] sm:$0xf]
  %v2588 = vld [vmem:[%s2566 + $0x54] sm:$0xf]
  %v2589 = vld [vmem:[%s2566 + $0x58] sm:$0xf]
  %v2590 = vld [vmem:[%s2566 + $0x5c] sm:$0xf]
  %v2591 = vld [vmem:[%s2566 + $0x60] sm:$0xf]
  %v2592 = vld [vmem:[%s2566 + $0x64] sm:$0xf]
  %v2593 = vld [vmem:[%s2566 + $0x68] sm:$0xf]
  %v2594 = vld [vmem:[%s2566 + $0x6c] sm:$0xf]
  %v2595 = vld [vmem:[%s2566 + $0x70] sm:$0xf]
  %v2596 = vld [vmem:[%s2566 + $0x74] sm:$0xf]
  %v2597 = vld [vmem:[%s2566 + $0x78] sm:$0xf]
  %v2598 = vld [vmem:[%s2566 + $0x7c] sm:$0xf]
  %v2631 = vunpack.c.l.b16 %v2567
  %v2632 = vunpack.c.l.b16 %v2568
  %v2633 = vunpack.c.l.b16 %v2569
  %v2634 = vunpack.c.l.b16 %v2570
  %v2635 = vunpack.c.l.b16 %v2571
  %v2636 = vunpack.c.l.b16 %v2572
  %v2637 = vunpack.c.l.b16 %v2573
  %v2638 = vunpack.c.l.b16 %v2574
  %v2639 = vunpack.c.l.b16 %v2575
  %v2640 = vunpack.c.l.b16 %v2576
  %v2641 = vunpack.c.l.b16 %v2577
  %v2642 = vunpack.c.l.b16 %v2578
  %v2643 = vunpack.c.l.b16 %v2579
  %v2644 = vunpack.c.l.b16 %v2580
  %v2645 = vunpack.c.l.b16 %v2581
  %v2646 = vunpack.c.l.b16 %v2582
  %v2647 = vunpack.c.l.b16 %v2583
  %v2648 = vunpack.c.l.b16 %v2584
  %v2649 = vunpack.c.l.b16 %v2585
  %v2650 = vunpack.c.l.b16 %v2586
  %v2651 = vunpack.c.l.b16 %v2587
  %v2652 = vunpack.c.l.b16 %v2588
  %v2653 = vunpack.c.l.b16 %v2589
  %v2654 = vunpack.c.l.b16 %v2590
  %v2655 = vunpack.c.l.b16 %v2591
  %v2656 = vunpack.c.l.b16 %v2592
  %v2657 = vunpack.c.l.b16 %v2593
  %v2658 = vunpack.c.l.b16 %v2594
  %v2659 = vunpack.c.l.b16 %v2595
  %v2660 = vunpack.c.l.b16 %v2596
  %v2661 = vunpack.c.l.b16 %v2597
  %v2662 = vunpack.c.l.b16 %v2598
  %v2663 = vpack.c.b16 %v2632, %v2631
  %v2664 = vpack.c.b16 %v2634, %v2633
  %v2665 = vpack.c.b16 %v2636, %v2635
  %v2666 = vpack.c.b16 %v2638, %v2637
  %v2667 = vpack.c.b16 %v2640, %v2639
  %v2668 = vpack.c.b16 %v2642, %v2641
  %v2669 = vpack.c.b16 %v2644, %v2643
  %v2670 = vpack.c.b16 %v2646, %v2645
  %v2671 = vpack.c.b16 %v2648, %v2647
  %v2672 = vpack.c.b16 %v2650, %v2649
  %v2673 = vpack.c.b16 %v2652, %v2651
  %v2674 = vpack.c.b16 %v2654, %v2653
  %v2675 = vpack.c.b16 %v2656, %v2655
  %v2676 = vpack.c.b16 %v2658, %v2657
  %v2677 = vpack.c.b16 %v2660, %v2659
  %v2678 = vpack.c.b16 %v2662, %v2661
  %2695 = vmatprep.subr.bf16.mxu0 0
  %2696 = vmatpush1.bf16.msra.mxu0 %v2663
  %2697 = vmatprep.subr.bf16.mxu0 0
  %2698 = vmatpush1.bf16.msra.mxu0 %v2664
  %2699 = vmatprep.subr.bf16.mxu0 0
  %2700 = vmatpush1.bf16.msra.mxu0 %v2665
  %2701 = vmatprep.subr.bf16.mxu0 0
  %2702 = vmatpush1.bf16.msra.mxu0 %v2666
  %2703 = vmatprep.subr.bf16.mxu0 0
  %2704 = vmatpush1.bf16.msra.mxu0 %v2667
  %2705 = vmatprep.subr.bf16.mxu0 0
  %2706 = vmatpush1.bf16.msra.mxu0 %v2668
  %2707 = vmatprep.subr.bf16.mxu0 0
  %2708 = vmatpush1.bf16.msra.mxu0 %v2669
  %2709 = vmatprep.subr.bf16.mxu0 0
  %2710 = vmatpush1.bf16.msra.mxu0 %v2670
  %2711 = vmatprep.subr.bf16.mxu0 0
  %2712 = vmatpush1.bf16.msra.mxu0 %v2671
  %2713 = vmatprep.subr.bf16.mxu0 0
  %2714 = vmatpush1.bf16.msra.mxu0 %v2672
  %2715 = vmatprep.subr.bf16.mxu0 0
  %2716 = vmatpush1.bf16.msra.mxu0 %v2673
  %2717 = vmatprep.subr.bf16.mxu0 0
  %2718 = vmatpush1.bf16.msra.mxu0 %v2674
  %2719 = vmatprep.subr.bf16.mxu0 0
  %2720 = vmatpush1.bf16.msra.mxu0 %v2675
  %2721 = vmatprep.subr.bf16.mxu0 0
  %2722 = vmatpush1.bf16.msra.mxu0 %v2676
  %2723 = vmatprep.subr.bf16.mxu0 0
  %2724 = vmatpush1.bf16.msra.mxu0 %v2677
  %2725 = vmatprep.subr.bf16.mxu0 0
  %2726 = vmatpush1.bf16.msra.mxu0 %v2678
  %2727 = vmatprep.mubr.bf16.mxu0 %v2565
  %2728 = vmatmul.mubr.bf16.gmra.mrb[0].mxu0 %v2564
  %v2729 = vpop.f32.mrb[0].mxu0
  %v2730 = vadd.f32 0.0, %v2729
  %v2731 = vpop.f32.mrb[0].mxu0
  %v2732 = vpop.f32.mrb[0].mxu0
  %v2733 = vpop.f32.mrb[0].mxu0
  %2734 = vdwg.mxu0
  %v2735 = vadd.f32 %v2515, %v2730
  %s2736 = scalar_lea.vmem %s0, 12
  %v2737 = vld [vmem:[%s2736] sm:$0x1]
  %v2739 = vsel %vm93, %v2737, 0
  %2741 = vmatprep.subr.bf16.mxu0 %v84
  %2742 = vmatpush1.bf16.msra.mxu0 %v83
  %2743 = vmatprep.subr.bf16.mxu0 %v86
  %2744 = vmatpush1.bf16.msra.mxu0 %v85
  %2745 = vmatprep.subr.bf16.mxu0 %v102
  %2746 = vmatpush1.bf16.msra.mxu0 %v99
  %2747 = vmatprep.subr.bf16.mxu0 0
  %2748 = vmatpush1.bf16.msra.mxu0 0
  %2749 = vmatprep.subr.bf16.mxu0 0
  %2750 = vmatpush1.bf16.msra.mxu0 0
  %2751 = vmatprep.subr.bf16.mxu0 0
  %2752 = vmatpush1.bf16.msra.mxu0 0
  %2753 = vmatprep.subr.bf16.mxu0 0
  %2754 = vmatpush1.bf16.msra.mxu0 0
  %2755 = vmatprep.subr.bf16.mxu0 0
  %2756 = vmatpush1.bf16.msra.mxu0 0
  %2757 = vmatprep.subr.bf16.mxu0 0
  %2758 = vmatpush1.bf16.msra.mxu0 0
  %2759 = vmatprep.subr.bf16.mxu0 0
  %2760 = vmatpush1.bf16.msra.mxu0 0
  %2761 = vmatprep.subr.bf16.mxu0 0
  %2762 = vmatpush1.bf16.msra.mxu0 0
  %2763 = vmatprep.subr.bf16.mxu0 0
  %2764 = vmatpush1.bf16.msra.mxu0 0
  %2765 = vmatprep.subr.bf16.mxu0 0
  %2766 = vmatpush1.bf16.msra.mxu0 0
  %2767 = vmatprep.subr.bf16.mxu0 0
  %2768 = vmatpush1.bf16.msra.mxu0 0
  %2769 = vmatprep.subr.bf16.mxu0 0
  %2770 = vmatpush1.bf16.msra.mxu0 0
  %2771 = vmatprep.subr.bf16.mxu0 0
  %2772 = vmatpush1.bf16.msra.mxu0 0
  %2773 = vmatprep.mubr.bf16.mxu0 0
  %2774 = vmatmul.mubr.bf16.gmra.mrb[0].mxu0 %v2739
  %v2775 = vpop.f32.mrb[0].mxu0
  %v2776 = vadd.f32 %v61, %v2775
  %v2777 = vpop.f32.mrb[0].mxu0
  %v2778 = vadd.f32 %v65, %v2777
  %v2779 = vpop.f32.mrb[0].mxu0
  %v2780 = vpop.f32.mrb[0].mxu0
  %2781 = vdwg.mxu0
  %v2782 = vmax.f32 %v2776, 0.0
  %v2783 = vmax.f32 %v2778, 0.0
  %v2784 = vpack.c.bf16 %v2782, %v2782
  %v2785 = vpack.c.bf16 %v2783, %v2783
  %s2786 = scalar_lea.vmem %s5, 1536
  %v2787 = vld [vmem:[%s2786] sm:$0xf]
  %v2788 = vld [vmem:[%s2786 + $0x4] sm:$0xf]
  %v2789 = vld [vmem:[%s2786 + $0x8] sm:$0xf]
  %v2790 = vld [vmem:[%s2786 + $0xc] sm:$0xf]
  %v2791 = vld [vmem:[%s2786 + $0x10] sm:$0xf]
  %v2792 = vld [vmem:[%s2786 + $0x14] sm:$0xf]
  %v2793 = vld [vmem:[%s2786 + $0x18] sm:$0xf]
  %v2794 = vld [vmem:[%s2786 + $0x1c] sm:$0xf]
  %v2795 = vld [vmem:[%s2786 + $0x20] sm:$0xf]
  %v2796 = vld [vmem:[%s2786 + $0x24] sm:$0xf]
  %v2797 = vld [vmem:[%s2786 + $0x28] sm:$0xf]
  %v2798 = vld [vmem:[%s2786 + $0x2c] sm:$0xf]
  %v2799 = vld [vmem:[%s2786 + $0x30] sm:$0xf]
  %v2800 = vld [vmem:[%s2786 + $0x34] sm:$0xf]
  %v2801 = vld [vmem:[%s2786 + $0x38] sm:$0xf]
  %v2802 = vld [vmem:[%s2786 + $0x3c] sm:$0xf]
  %v2803 = vld [vmem:[%s2786 + $0x40] sm:$0xf]
  %v2804 = vld [vmem:[%s2786 + $0x44] sm:$0xf]
  %v2805 = vld [vmem:[%s2786 + $0x48] sm:$0xf]
  %v2806 = vld [vmem:[%s2786 + $0x4c] sm:$0xf]
  %v2807 = vld [vmem:[%s2786 + $0x50] sm:$0xf]
  %v2808 = vld [vmem:[%s2786 + $0x54] sm:$0xf]
  %v2809 = vld [vmem:[%s2786 + $0x58] sm:$0xf]
  %v2810 = vld [vmem:[%s2786 + $0x5c] sm:$0xf]
  %v2811 = vld [vmem:[%s2786 + $0x60] sm:$0xf]
  %v2812 = vld [vmem:[%s2786 + $0x64] sm:$0xf]
  %v2813 = vld [vmem:[%s2786 + $0x68] sm:$0xf]
  %v2814 = vld [vmem:[%s2786 + $0x6c] sm:$0xf]
  %v2815 = vld [vmem:[%s2786 + $0x70] sm:$0xf]
  %v2816 = vld [vmem:[%s2786 + $0x74] sm:$0xf]
  %v2817 = vld [vmem:[%s2786 + $0x78] sm:$0xf]
  %v2818 = vld [vmem:[%s2786 + $0x7c] sm:$0xf]
  %v2851 = vunpack.c.l.b16 %v2787
  %v2852 = vunpack.c.l.b16 %v2788
  %v2853 = vunpack.c.l.b16 %v2789
  %v2854 = vunpack.c.l.b16 %v2790
  %v2855 = vunpack.c.l.b16 %v2791
  %v2856 = vunpack.c.l.b16 %v2792
  %v2857 = vunpack.c.l.b16 %v2793
  %v2858 = vunpack.c.l.b16 %v2794
  %v2859 = vunpack.c.l.b16 %v2795
  %v2860 = vunpack.c.l.b16 %v2796
  %v2861 = vunpack.c.l.b16 %v2797
  %v2862 = vunpack.c.l.b16 %v2798
  %v2863 = vunpack.c.l.b16 %v2799
  %v2864 = vunpack.c.l.b16 %v2800
  %v2865 = vunpack.c.l.b16 %v2801
  %v2866 = vunpack.c.l.b16 %v2802
  %v2867 = vunpack.c.l.b16 %v2803
  %v2868 = vunpack.c.l.b16 %v2804
  %v2869 = vunpack.c.l.b16 %v2805
  %v2870 = vunpack.c.l.b16 %v2806
  %v2871 = vunpack.c.l.b16 %v2807
  %v2872 = vunpack.c.l.b16 %v2808
  %v2873 = vunpack.c.l.b16 %v2809
  %v2874 = vunpack.c.l.b16 %v2810
  %v2875 = vunpack.c.l.b16 %v2811
  %v2876 = vunpack.c.l.b16 %v2812
  %v2877 = vunpack.c.l.b16 %v2813
  %v2878 = vunpack.c.l.b16 %v2814
  %v2879 = vunpack.c.l.b16 %v2815
  %v2880 = vunpack.c.l.b16 %v2816
  %v2881 = vunpack.c.l.b16 %v2817
  %v2882 = vunpack.c.l.b16 %v2818
  %v2883 = vpack.c.b16 %v2852, %v2851
  %v2884 = vpack.c.b16 %v2854, %v2853
  %v2885 = vpack.c.b16 %v2856, %v2855
  %v2886 = vpack.c.b16 %v2858, %v2857
  %v2887 = vpack.c.b16 %v2860, %v2859
  %v2888 = vpack.c.b16 %v2862, %v2861
  %v2889 = vpack.c.b16 %v2864, %v2863
  %v2890 = vpack.c.b16 %v2866, %v2865
  %v2891 = vpack.c.b16 %v2868, %v2867
  %v2892 = vpack.c.b16 %v2870, %v2869
  %v2893 = vpack.c.b16 %v2872, %v2871
  %v2894 = vpack.c.b16 %v2874, %v2873
  %v2895 = vpack.c.b16 %v2876, %v2875
  %v2896 = vpack.c.b16 %v2878, %v2877
  %v2897 = vpack.c.b16 %v2880, %v2879
  %v2898 = vpack.c.b16 %v2882, %v2881
  %2915 = vmatprep.subr.bf16.mxu0 0
  %2916 = vmatpush1.bf16.msra.mxu0 %v2883
  %2917 = vmatprep.subr.bf16.mxu0 0
  %2918 = vmatpush1.bf16.msra.mxu0 %v2884
  %2919 = vmatprep.subr.bf16.mxu0 0
  %2920 = vmatpush1.bf16.msra.mxu0 %v2885
  %2921 = vmatprep.subr.bf16.mxu0 0
  %2922 = vmatpush1.bf16.msra.mxu0 %v2886
  %2923 = vmatprep.subr.bf16.mxu0 0
  %2924 = vmatpush1.bf16.msra.mxu0 %v2887
  %2925 = vmatprep.subr.bf16.mxu0 0
  %2926 = vmatpush1.bf16.msra.mxu0 %v2888
  %2927 = vmatprep.subr.bf16.mxu0 0
  %2928 = vmatpush1.bf16.msra.mxu0 %v2889
  %2929 = vmatprep.subr.bf16.mxu0 0
  %2930 = vmatpush1.bf16.msra.mxu0 %v2890
  %2931 = vmatprep.subr.bf16.mxu0 0
  %2932 = vmatpush1.bf16.msra.mxu0 %v2891
  %2933 = vmatprep.subr.bf16.mxu0 0
  %2934 = vmatpush1.bf16.msra.mxu0 %v2892
  %2935 = vmatprep.subr.bf16.mxu0 0
  %2936 = vmatpush1.bf16.msra.mxu0 %v2893
  %2937 = vmatprep.subr.bf16.mxu0 0
  %2938 = vmatpush1.bf16.msra.mxu0 %v2894
  %2939 = vmatprep.subr.bf16.mxu0 0
  %2940 = vmatpush1.bf16.msra.mxu0 %v2895
  %2941 = vmatprep.subr.bf16.mxu0 0
  %2942 = vmatpush1.bf16.msra.mxu0 %v2896
  %2943 = vmatprep.subr.bf16.mxu0 0
  %2944 = vmatpush1.bf16.msra.mxu0 %v2897
  %2945 = vmatprep.subr.bf16.mxu0 0
  %2946 = vmatpush1.bf16.msra.mxu0 %v2898
  %2947 = vmatprep.mubr.bf16.mxu0 %v2785
  %2948 = vmatmul.mubr.bf16.gmra.mrb[0].mxu0 %v2784
  %v2949 = vpop.f32.mrb[0].mxu0
  %v2950 = vadd.f32 0.0, %v2949
  %v2951 = vpop.f32.mrb[0].mxu0
  %v2952 = vpop.f32.mrb[0].mxu0
  %v2953 = vpop.f32.mrb[0].mxu0
  %2954 = vdwg.mxu0
  %v2955 = vadd.f32 %v2735, %v2950
  %s2956 = scalar_lea.vmem %s0, 13
  %v2957 = vld [vmem:[%s2956] sm:$0x1]
  %v2959 = vsel %vm93, %v2957, 0
  %2961 = vmatprep.subr.bf16.mxu0 %v84
  %2962 = vmatpush1.bf16.msra.mxu0 %v83
  %2963 = vmatprep.subr.bf16.mxu0 %v86
  %2964 = vmatpush1.bf16.msra.mxu0 %v85
  %2965 = vmatprep.subr.bf16.mxu0 %v102
  %2966 = vmatpush1.bf16.msra.mxu0 %v99
  %2967 = vmatprep.subr.bf16.mxu0 0
  %2968 = vmatpush1.bf16.msra.mxu0 0
  %2969 = vmatprep.subr.bf16.mxu0 0
  %2970 = vmatpush1.bf16.msra.mxu0 0
  %2971 = vmatprep.subr.bf16.mxu0 0
  %2972 = vmatpush1.bf16.msra.mxu0 0
  %2973 = vmatprep.subr.bf16.mxu0 0
  %2974 = vmatpush1.bf16.msra.mxu0 0
  %2975 = vmatprep.subr.bf16.mxu0 0
  %2976 = vmatpush1.bf16.msra.mxu0 0
  %2977 = vmatprep.subr.bf16.mxu0 0
  %2978 = vmatpush1.bf16.msra.mxu0 0
  %2979 = vmatprep.subr.bf16.mxu0 0
  %2980 = vmatpush1.bf16.msra.mxu0 0
  %2981 = vmatprep.subr.bf16.mxu0 0
  %2982 = vmatpush1.bf16.msra.mxu0 0
  %2983 = vmatprep.subr.bf16.mxu0 0
  %2984 = vmatpush1.bf16.msra.mxu0 0
  %2985 = vmatprep.subr.bf16.mxu0 0
  %2986 = vmatpush1.bf16.msra.mxu0 0
  %2987 = vmatprep.subr.bf16.mxu0 0
  %2988 = vmatpush1.bf16.msra.mxu0 0
  %2989 = vmatprep.subr.bf16.mxu0 0
  %2990 = vmatpush1.bf16.msra.mxu0 0
  %2991 = vmatprep.subr.bf16.mxu0 0
  %2992 = vmatpush1.bf16.msra.mxu0 0
  %2993 = vmatprep.mubr.bf16.mxu0 0
  %2994 = vmatmul.mubr.bf16.gmra.mrb[0].mxu0 %v2959
  %v2995 = vpop.f32.mrb[0].mxu0
  %v2996 = vadd.f32 %v61, %v2995
  %v2997 = vpop.f32.mrb[0].mxu0
  %v2998 = vadd.f32 %v65, %v2997
  %v2999 = vpop.f32.mrb[0].mxu0
  %v3000 = vpop.f32.mrb[0].mxu0
  %3001 = vdwg.mxu0
  %v3002 = vmax.f32 %v2996, 0.0
  %v3003 = vmax.f32 %v2998, 0.0
  %v3004 = vpack.c.bf16 %v3002, %v3002
  %v3005 = vpack.c.bf16 %v3003, %v3003
  %s3006 = scalar_lea.vmem %s5, 1664
  %v3007 = vld [vmem:[%s3006] sm:$0xf]
  %v3008 = vld [vmem:[%s3006 + $0x4] sm:$0xf]
  %v3009 = vld [vmem:[%s3006 + $0x8] sm:$0xf]
  %v3010 = vld [vmem:[%s3006 + $0xc] sm:$0xf]
  %v3011 = vld [vmem:[%s3006 + $0x10] sm:$0xf]
  %v3012 = vld [vmem:[%s3006 + $0x14] sm:$0xf]
  %v3013 = vld [vmem:[%s3006 + $0x18] sm:$0xf]
  %v3014 = vld [vmem:[%s3006 + $0x1c] sm:$0xf]
  %v3015 = vld [vmem:[%s3006 + $0x20] sm:$0xf]
  %v3016 = vld [vmem:[%s3006 + $0x24] sm:$0xf]
  %v3017 = vld [vmem:[%s3006 + $0x28] sm:$0xf]
  %v3018 = vld [vmem:[%s3006 + $0x2c] sm:$0xf]
  %v3019 = vld [vmem:[%s3006 + $0x30] sm:$0xf]
  %v3020 = vld [vmem:[%s3006 + $0x34] sm:$0xf]
  %v3021 = vld [vmem:[%s3006 + $0x38] sm:$0xf]
  %v3022 = vld [vmem:[%s3006 + $0x3c] sm:$0xf]
  %v3023 = vld [vmem:[%s3006 + $0x40] sm:$0xf]
  %v3024 = vld [vmem:[%s3006 + $0x44] sm:$0xf]
  %v3025 = vld [vmem:[%s3006 + $0x48] sm:$0xf]
  %v3026 = vld [vmem:[%s3006 + $0x4c] sm:$0xf]
  %v3027 = vld [vmem:[%s3006 + $0x50] sm:$0xf]
  %v3028 = vld [vmem:[%s3006 + $0x54] sm:$0xf]
  %v3029 = vld [vmem:[%s3006 + $0x58] sm:$0xf]
  %v3030 = vld [vmem:[%s3006 + $0x5c] sm:$0xf]
  %v3031 = vld [vmem:[%s3006 + $0x60] sm:$0xf]
  %v3032 = vld [vmem:[%s3006 + $0x64] sm:$0xf]
  %v3033 = vld [vmem:[%s3006 + $0x68] sm:$0xf]
  %v3034 = vld [vmem:[%s3006 + $0x6c] sm:$0xf]
  %v3035 = vld [vmem:[%s3006 + $0x70] sm:$0xf]
  %v3036 = vld [vmem:[%s3006 + $0x74] sm:$0xf]
  %v3037 = vld [vmem:[%s3006 + $0x78] sm:$0xf]
  %v3038 = vld [vmem:[%s3006 + $0x7c] sm:$0xf]
  %v3071 = vunpack.c.l.b16 %v3007
  %v3072 = vunpack.c.l.b16 %v3008
  %v3073 = vunpack.c.l.b16 %v3009
  %v3074 = vunpack.c.l.b16 %v3010
  %v3075 = vunpack.c.l.b16 %v3011
  %v3076 = vunpack.c.l.b16 %v3012
  %v3077 = vunpack.c.l.b16 %v3013
  %v3078 = vunpack.c.l.b16 %v3014
  %v3079 = vunpack.c.l.b16 %v3015
  %v3080 = vunpack.c.l.b16 %v3016
  %v3081 = vunpack.c.l.b16 %v3017
  %v3082 = vunpack.c.l.b16 %v3018
  %v3083 = vunpack.c.l.b16 %v3019
  %v3084 = vunpack.c.l.b16 %v3020
  %v3085 = vunpack.c.l.b16 %v3021
  %v3086 = vunpack.c.l.b16 %v3022
  %v3087 = vunpack.c.l.b16 %v3023
  %v3088 = vunpack.c.l.b16 %v3024
  %v3089 = vunpack.c.l.b16 %v3025
  %v3090 = vunpack.c.l.b16 %v3026
  %v3091 = vunpack.c.l.b16 %v3027
  %v3092 = vunpack.c.l.b16 %v3028
  %v3093 = vunpack.c.l.b16 %v3029
  %v3094 = vunpack.c.l.b16 %v3030
  %v3095 = vunpack.c.l.b16 %v3031
  %v3096 = vunpack.c.l.b16 %v3032
  %v3097 = vunpack.c.l.b16 %v3033
  %v3098 = vunpack.c.l.b16 %v3034
  %v3099 = vunpack.c.l.b16 %v3035
  %v3100 = vunpack.c.l.b16 %v3036
  %v3101 = vunpack.c.l.b16 %v3037
  %v3102 = vunpack.c.l.b16 %v3038
  %v3103 = vpack.c.b16 %v3072, %v3071
  %v3104 = vpack.c.b16 %v3074, %v3073
  %v3105 = vpack.c.b16 %v3076, %v3075
  %v3106 = vpack.c.b16 %v3078, %v3077
  %v3107 = vpack.c.b16 %v3080, %v3079
  %v3108 = vpack.c.b16 %v3082, %v3081
  %v3109 = vpack.c.b16 %v3084, %v3083
  %v3110 = vpack.c.b16 %v3086, %v3085
  %v3111 = vpack.c.b16 %v3088, %v3087
  %v3112 = vpack.c.b16 %v3090, %v3089
  %v3113 = vpack.c.b16 %v3092, %v3091
  %v3114 = vpack.c.b16 %v3094, %v3093
  %v3115 = vpack.c.b16 %v3096, %v3095
  %v3116 = vpack.c.b16 %v3098, %v3097
  %v3117 = vpack.c.b16 %v3100, %v3099
  %v3118 = vpack.c.b16 %v3102, %v3101
  %3135 = vmatprep.subr.bf16.mxu0 0
  %3136 = vmatpush1.bf16.msra.mxu0 %v3103
  %3137 = vmatprep.subr.bf16.mxu0 0
  %3138 = vmatpush1.bf16.msra.mxu0 %v3104
  %3139 = vmatprep.subr.bf16.mxu0 0
  %3140 = vmatpush1.bf16.msra.mxu0 %v3105
  %3141 = vmatprep.subr.bf16.mxu0 0
  %3142 = vmatpush1.bf16.msra.mxu0 %v3106
  %3143 = vmatprep.subr.bf16.mxu0 0
  %3144 = vmatpush1.bf16.msra.mxu0 %v3107
  %3145 = vmatprep.subr.bf16.mxu0 0
  %3146 = vmatpush1.bf16.msra.mxu0 %v3108
  %3147 = vmatprep.subr.bf16.mxu0 0
  %3148 = vmatpush1.bf16.msra.mxu0 %v3109
  %3149 = vmatprep.subr.bf16.mxu0 0
  %3150 = vmatpush1.bf16.msra.mxu0 %v3110
  %3151 = vmatprep.subr.bf16.mxu0 0
  %3152 = vmatpush1.bf16.msra.mxu0 %v3111
  %3153 = vmatprep.subr.bf16.mxu0 0
  %3154 = vmatpush1.bf16.msra.mxu0 %v3112
  %3155 = vmatprep.subr.bf16.mxu0 0
  %3156 = vmatpush1.bf16.msra.mxu0 %v3113
  %3157 = vmatprep.subr.bf16.mxu0 0
  %3158 = vmatpush1.bf16.msra.mxu0 %v3114
  %3159 = vmatprep.subr.bf16.mxu0 0
  %3160 = vmatpush1.bf16.msra.mxu0 %v3115
  %3161 = vmatprep.subr.bf16.mxu0 0
  %3162 = vmatpush1.bf16.msra.mxu0 %v3116
  %3163 = vmatprep.subr.bf16.mxu0 0
  %3164 = vmatpush1.bf16.msra.mxu0 %v3117
  %3165 = vmatprep.subr.bf16.mxu0 0
  %3166 = vmatpush1.bf16.msra.mxu0 %v3118
  %3167 = vmatprep.mubr.bf16.mxu0 %v3005
  %3168 = vmatmul.mubr.bf16.gmra.mrb[0].mxu0 %v3004
  %v3169 = vpop.f32.mrb[0].mxu0
  %v3170 = vadd.f32 0.0, %v3169
  %v3171 = vpop.f32.mrb[0].mxu0
  %v3172 = vpop.f32.mrb[0].mxu0
  %v3173 = vpop.f32.mrb[0].mxu0
  %3174 = vdwg.mxu0
  %v3175 = vadd.f32 %v2955, %v3170
  %s3176 = scalar_lea.vmem %s0, 14
  %v3177 = vld [vmem:[%s3176] sm:$0x1]
  %v3179 = vsel %vm93, %v3177, 0
  %3181 = vmatprep.subr.bf16.mxu0 %v84
  %3182 = vmatpush1.bf16.msra.mxu0 %v83
  %3183 = vmatprep.subr.bf16.mxu0 %v86
  %3184 = vmatpush1.bf16.msra.mxu0 %v85
  %3185 = vmatprep.subr.bf16.mxu0 %v102
  %3186 = vmatpush1.bf16.msra.mxu0 %v99
  %3187 = vmatprep.subr.bf16.mxu0 0
  %3188 = vmatpush1.bf16.msra.mxu0 0
  %3189 = vmatprep.subr.bf16.mxu0 0
  %3190 = vmatpush1.bf16.msra.mxu0 0
  %3191 = vmatprep.subr.bf16.mxu0 0
  %3192 = vmatpush1.bf16.msra.mxu0 0
  %3193 = vmatprep.subr.bf16.mxu0 0
  %3194 = vmatpush1.bf16.msra.mxu0 0
  %3195 = vmatprep.subr.bf16.mxu0 0
  %3196 = vmatpush1.bf16.msra.mxu0 0
  %3197 = vmatprep.subr.bf16.mxu0 0
  %3198 = vmatpush1.bf16.msra.mxu0 0
  %3199 = vmatprep.subr.bf16.mxu0 0
  %3200 = vmatpush1.bf16.msra.mxu0 0
  %3201 = vmatprep.subr.bf16.mxu0 0
  %3202 = vmatpush1.bf16.msra.mxu0 0
  %3203 = vmatprep.subr.bf16.mxu0 0
  %3204 = vmatpush1.bf16.msra.mxu0 0
  %3205 = vmatprep.subr.bf16.mxu0 0
  %3206 = vmatpush1.bf16.msra.mxu0 0
  %3207 = vmatprep.subr.bf16.mxu0 0
  %3208 = vmatpush1.bf16.msra.mxu0 0
  %3209 = vmatprep.subr.bf16.mxu0 0
  %3210 = vmatpush1.bf16.msra.mxu0 0
  %3211 = vmatprep.subr.bf16.mxu0 0
  %3212 = vmatpush1.bf16.msra.mxu0 0
  %3213 = vmatprep.mubr.bf16.mxu0 0
  %3214 = vmatmul.mubr.bf16.gmra.mrb[0].mxu0 %v3179
  %v3215 = vpop.f32.mrb[0].mxu0
  %v3216 = vadd.f32 %v61, %v3215
  %v3217 = vpop.f32.mrb[0].mxu0
  %v3218 = vadd.f32 %v65, %v3217
  %v3219 = vpop.f32.mrb[0].mxu0
  %v3220 = vpop.f32.mrb[0].mxu0
  %3221 = vdwg.mxu0
  %v3222 = vmax.f32 %v3216, 0.0
  %v3223 = vmax.f32 %v3218, 0.0
  %v3224 = vpack.c.bf16 %v3222, %v3222
  %v3225 = vpack.c.bf16 %v3223, %v3223
  %s3226 = scalar_lea.vmem %s5, 1792
  %v3227 = vld [vmem:[%s3226] sm:$0xf]
  %v3228 = vld [vmem:[%s3226 + $0x4] sm:$0xf]
  %v3229 = vld [vmem:[%s3226 + $0x8] sm:$0xf]
  %v3230 = vld [vmem:[%s3226 + $0xc] sm:$0xf]
  %v3231 = vld [vmem:[%s3226 + $0x10] sm:$0xf]
  %v3232 = vld [vmem:[%s3226 + $0x14] sm:$0xf]
  %v3233 = vld [vmem:[%s3226 + $0x18] sm:$0xf]
  %v3234 = vld [vmem:[%s3226 + $0x1c] sm:$0xf]
  %v3235 = vld [vmem:[%s3226 + $0x20] sm:$0xf]
  %v3236 = vld [vmem:[%s3226 + $0x24] sm:$0xf]
  %v3237 = vld [vmem:[%s3226 + $0x28] sm:$0xf]
  %v3238 = vld [vmem:[%s3226 + $0x2c] sm:$0xf]
  %v3239 = vld [vmem:[%s3226 + $0x30] sm:$0xf]
  %v3240 = vld [vmem:[%s3226 + $0x34] sm:$0xf]
  %v3241 = vld [vmem:[%s3226 + $0x38] sm:$0xf]
  %v3242 = vld [vmem:[%s3226 + $0x3c] sm:$0xf]
  %v3243 = vld [vmem:[%s3226 + $0x40] sm:$0xf]
  %v3244 = vld [vmem:[%s3226 + $0x44] sm:$0xf]
  %v3245 = vld [vmem:[%s3226 + $0x48] sm:$0xf]
  %v3246 = vld [vmem:[%s3226 + $0x4c] sm:$0xf]
  %v3247 = vld [vmem:[%s3226 + $0x50] sm:$0xf]
  %v3248 = vld [vmem:[%s3226 + $0x54] sm:$0xf]
  %v3249 = vld [vmem:[%s3226 + $0x58] sm:$0xf]
  %v3250 = vld [vmem:[%s3226 + $0x5c] sm:$0xf]
  %v3251 = vld [vmem:[%s3226 + $0x60] sm:$0xf]
  %v3252 = vld [vmem:[%s3226 + $0x64] sm:$0xf]
  %v3253 = vld [vmem:[%s3226 + $0x68] sm:$0xf]
  %v3254 = vld [vmem:[%s3226 + $0x6c] sm:$0xf]
  %v3255 = vld [vmem:[%s3226 + $0x70] sm:$0xf]
  %v3256 = vld [vmem:[%s3226 + $0x74] sm:$0xf]
  %v3257 = vld [vmem:[%s3226 + $0x78] sm:$0xf]
  %v3258 = vld [vmem:[%s3226 + $0x7c] sm:$0xf]
  %v3291 = vunpack.c.l.b16 %v3227
  %v3292 = vunpack.c.l.b16 %v3228
  %v3293 = vunpack.c.l.b16 %v3229
  %v3294 = vunpack.c.l.b16 %v3230
  %v3295 = vunpack.c.l.b16 %v3231
  %v3296 = vunpack.c.l.b16 %v3232
  %v3297 = vunpack.c.l.b16 %v3233
  %v3298 = vunpack.c.l.b16 %v3234
  %v3299 = vunpack.c.l.b16 %v3235
  %v3300 = vunpack.c.l.b16 %v3236
  %v3301 = vunpack.c.l.b16 %v3237
  %v3302 = vunpack.c.l.b16 %v3238
  %v3303 = vunpack.c.l.b16 %v3239
  %v3304 = vunpack.c.l.b16 %v3240
  %v3305 = vunpack.c.l.b16 %v3241
  %v3306 = vunpack.c.l.b16 %v3242
  %v3307 = vunpack.c.l.b16 %v3243
  %v3308 = vunpack.c.l.b16 %v3244
  %v3309 = vunpack.c.l.b16 %v3245
  %v3310 = vunpack.c.l.b16 %v3246
  %v3311 = vunpack.c.l.b16 %v3247
  %v3312 = vunpack.c.l.b16 %v3248
  %v3313 = vunpack.c.l.b16 %v3249
  %v3314 = vunpack.c.l.b16 %v3250
  %v3315 = vunpack.c.l.b16 %v3251
  %v3316 = vunpack.c.l.b16 %v3252
  %v3317 = vunpack.c.l.b16 %v3253
  %v3318 = vunpack.c.l.b16 %v3254
  %v3319 = vunpack.c.l.b16 %v3255
  %v3320 = vunpack.c.l.b16 %v3256
  %v3321 = vunpack.c.l.b16 %v3257
  %v3322 = vunpack.c.l.b16 %v3258
  %v3323 = vpack.c.b16 %v3292, %v3291
  %v3324 = vpack.c.b16 %v3294, %v3293
  %v3325 = vpack.c.b16 %v3296, %v3295
  %v3326 = vpack.c.b16 %v3298, %v3297
  %v3327 = vpack.c.b16 %v3300, %v3299
  %v3328 = vpack.c.b16 %v3302, %v3301
  %v3329 = vpack.c.b16 %v3304, %v3303
  %v3330 = vpack.c.b16 %v3306, %v3305
  %v3331 = vpack.c.b16 %v3308, %v3307
  %v3332 = vpack.c.b16 %v3310, %v3309
  %v3333 = vpack.c.b16 %v3312, %v3311
  %v3334 = vpack.c.b16 %v3314, %v3313
  %v3335 = vpack.c.b16 %v3316, %v3315
  %v3336 = vpack.c.b16 %v3318, %v3317
  %v3337 = vpack.c.b16 %v3320, %v3319
  %v3338 = vpack.c.b16 %v3322, %v3321
  %3355 = vmatprep.subr.bf16.mxu0 0
  %3356 = vmatpush1.bf16.msra.mxu0 %v3323
  %3357 = vmatprep.subr.bf16.mxu0 0
  %3358 = vmatpush1.bf16.msra.mxu0 %v3324
  %3359 = vmatprep.subr.bf16.mxu0 0
  %3360 = vmatpush1.bf16.msra.mxu0 %v3325
  %3361 = vmatprep.subr.bf16.mxu0 0
  %3362 = vmatpush1.bf16.msra.mxu0 %v3326
  %3363 = vmatprep.subr.bf16.mxu0 0
  %3364 = vmatpush1.bf16.msra.mxu0 %v3327
  %3365 = vmatprep.subr.bf16.mxu0 0
  %3366 = vmatpush1.bf16.msra.mxu0 %v3328
  %3367 = vmatprep.subr.bf16.mxu0 0
  %3368 = vmatpush1.bf16.msra.mxu0 %v3329
  %3369 = vmatprep.subr.bf16.mxu0 0
  %3370 = vmatpush1.bf16.msra.mxu0 %v3330
  %3371 = vmatprep.subr.bf16.mxu0 0
  %3372 = vmatpush1.bf16.msra.mxu0 %v3331
  %3373 = vmatprep.subr.bf16.mxu0 0
  %3374 = vmatpush1.bf16.msra.mxu0 %v3332
  %3375 = vmatprep.subr.bf16.mxu0 0
  %3376 = vmatpush1.bf16.msra.mxu0 %v3333
  %3377 = vmatprep.subr.bf16.mxu0 0
  %3378 = vmatpush1.bf16.msra.mxu0 %v3334
  %3379 = vmatprep.subr.bf16.mxu0 0
  %3380 = vmatpush1.bf16.msra.mxu0 %v3335
  %3381 = vmatprep.subr.bf16.mxu0 0
  %3382 = vmatpush1.bf16.msra.mxu0 %v3336
  %3383 = vmatprep.subr.bf16.mxu0 0
  %3384 = vmatpush1.bf16.msra.mxu0 %v3337
  %3385 = vmatprep.subr.bf16.mxu0 0
  %3386 = vmatpush1.bf16.msra.mxu0 %v3338
  %3387 = vmatprep.mubr.bf16.mxu0 %v3225
  %3388 = vmatmul.mubr.bf16.gmra.mrb[0].mxu0 %v3224
  %v3389 = vpop.f32.mrb[0].mxu0
  %v3390 = vadd.f32 0.0, %v3389
  %v3391 = vpop.f32.mrb[0].mxu0
  %v3392 = vpop.f32.mrb[0].mxu0
  %v3393 = vpop.f32.mrb[0].mxu0
  %3394 = vdwg.mxu0
  %v3395 = vadd.f32 %v3175, %v3390
  %s3396 = scalar_lea.vmem %s0, 15
  %v3397 = vld [vmem:[%s3396] sm:$0x1]
  %v3399 = vsel %vm93, %v3397, 0
  %3401 = vmatprep.subr.bf16.mxu0 %v84
  %3402 = vmatpush1.bf16.msra.mxu0 %v83
  %3403 = vmatprep.subr.bf16.mxu0 %v86
  %3404 = vmatpush1.bf16.msra.mxu0 %v85
  %3405 = vmatprep.subr.bf16.mxu0 %v102
  %3406 = vmatpush1.bf16.msra.mxu0 %v99
  %3407 = vmatprep.subr.bf16.mxu0 0
  %3408 = vmatpush1.bf16.msra.mxu0 0
  %3409 = vmatprep.subr.bf16.mxu0 0
  %3410 = vmatpush1.bf16.msra.mxu0 0
  %3411 = vmatprep.subr.bf16.mxu0 0
  %3412 = vmatpush1.bf16.msra.mxu0 0
  %3413 = vmatprep.subr.bf16.mxu0 0
  %3414 = vmatpush1.bf16.msra.mxu0 0
  %3415 = vmatprep.subr.bf16.mxu0 0
  %3416 = vmatpush1.bf16.msra.mxu0 0
  %3417 = vmatprep.subr.bf16.mxu0 0
  %3418 = vmatpush1.bf16.msra.mxu0 0
  %3419 = vmatprep.subr.bf16.mxu0 0
  %3420 = vmatpush1.bf16.msra.mxu0 0
  %3421 = vmatprep.subr.bf16.mxu0 0
  %3422 = vmatpush1.bf16.msra.mxu0 0
  %3423 = vmatprep.subr.bf16.mxu0 0
  %3424 = vmatpush1.bf16.msra.mxu0 0
  %3425 = vmatprep.subr.bf16.mxu0 0
  %3426 = vmatpush1.bf16.msra.mxu0 0
  %3427 = vmatprep.subr.bf16.mxu0 0
  %3428 = vmatpush1.bf16.msra.mxu0 0
  %3429 = vmatprep.subr.bf16.mxu0 0
  %3430 = vmatpush1.bf16.msra.mxu0 0
  %3431 = vmatprep.subr.bf16.mxu0 0
  %3432 = vmatpush1.bf16.msra.mxu0 0
  %3433 = vmatprep.mubr.bf16.mxu0 0
  %3434 = vmatmul.mubr.bf16.gmra.mrb[0].mxu0 %v3399
  %v3435 = vpop.f32.mrb[0].mxu0
  %v3436 = vadd.f32 %v61, %v3435
  %v3437 = vpop.f32.mrb[0].mxu0
  %v3438 = vadd.f32 %v65, %v3437
  %v3439 = vpop.f32.mrb[0].mxu0
  %v3440 = vpop.f32.mrb[0].mxu0
  %3441 = vdwg.mxu0
  %v3442 = vmax.f32 %v3436, 0.0
  %v3443 = vmax.f32 %v3438, 0.0
  %v3444 = vpack.c.bf16 %v3442, %v3442
  %v3445 = vpack.c.bf16 %v3443, %v3443
  %s3446 = scalar_lea.vmem %s5, 1920
  %v3447 = vld [vmem:[%s3446] sm:$0xf]
  %v3448 = vld [vmem:[%s3446 + $0x4] sm:$0xf]
  %v3449 = vld [vmem:[%s3446 + $0x8] sm:$0xf]
  %v3450 = vld [vmem:[%s3446 + $0xc] sm:$0xf]
  %v3451 = vld [vmem:[%s3446 + $0x10] sm:$0xf]
  %v3452 = vld [vmem:[%s3446 + $0x14] sm:$0xf]
  %v3453 = vld [vmem:[%s3446 + $0x18] sm:$0xf]
  %v3454 = vld [vmem:[%s3446 + $0x1c] sm:$0xf]
  %v3455 = vld [vmem:[%s3446 + $0x20] sm:$0xf]
  %v3456 = vld [vmem:[%s3446 + $0x24] sm:$0xf]
  %v3457 = vld [vmem:[%s3446 + $0x28] sm:$0xf]
  %v3458 = vld [vmem:[%s3446 + $0x2c] sm:$0xf]
  %v3459 = vld [vmem:[%s3446 + $0x30] sm:$0xf]
  %v3460 = vld [vmem:[%s3446 + $0x34] sm:$0xf]
  %v3461 = vld [vmem:[%s3446 + $0x38] sm:$0xf]
  %v3462 = vld [vmem:[%s3446 + $0x3c] sm:$0xf]
  %v3463 = vld [vmem:[%s3446 + $0x40] sm:$0xf]
  %v3464 = vld [vmem:[%s3446 + $0x44] sm:$0xf]
  %v3465 = vld [vmem:[%s3446 + $0x48] sm:$0xf]
  %v3466 = vld [vmem:[%s3446 + $0x4c] sm:$0xf]
  %v3467 = vld [vmem:[%s3446 + $0x50] sm:$0xf]
  %v3468 = vld [vmem:[%s3446 + $0x54] sm:$0xf]
  %v3469 = vld [vmem:[%s3446 + $0x58] sm:$0xf]
  %v3470 = vld [vmem:[%s3446 + $0x5c] sm:$0xf]
  %v3471 = vld [vmem:[%s3446 + $0x60] sm:$0xf]
  %v3472 = vld [vmem:[%s3446 + $0x64] sm:$0xf]
  %v3473 = vld [vmem:[%s3446 + $0x68] sm:$0xf]
  %v3474 = vld [vmem:[%s3446 + $0x6c] sm:$0xf]
  %v3475 = vld [vmem:[%s3446 + $0x70] sm:$0xf]
  %v3476 = vld [vmem:[%s3446 + $0x74] sm:$0xf]
  %v3477 = vld [vmem:[%s3446 + $0x78] sm:$0xf]
  %v3478 = vld [vmem:[%s3446 + $0x7c] sm:$0xf]
  %v3511 = vunpack.c.l.b16 %v3447
  %v3512 = vunpack.c.l.b16 %v3448
  %v3513 = vunpack.c.l.b16 %v3449
  %v3514 = vunpack.c.l.b16 %v3450
  %v3515 = vunpack.c.l.b16 %v3451
  %v3516 = vunpack.c.l.b16 %v3452
  %v3517 = vunpack.c.l.b16 %v3453
  %v3518 = vunpack.c.l.b16 %v3454
  %v3519 = vunpack.c.l.b16 %v3455
  %v3520 = vunpack.c.l.b16 %v3456
  %v3521 = vunpack.c.l.b16 %v3457
  %v3522 = vunpack.c.l.b16 %v3458
  %v3523 = vunpack.c.l.b16 %v3459
  %v3524 = vunpack.c.l.b16 %v3460
  %v3525 = vunpack.c.l.b16 %v3461
  %v3526 = vunpack.c.l.b16 %v3462
  %v3527 = vunpack.c.l.b16 %v3463
  %v3528 = vunpack.c.l.b16 %v3464
  %v3529 = vunpack.c.l.b16 %v3465
  %v3530 = vunpack.c.l.b16 %v3466
  %v3531 = vunpack.c.l.b16 %v3467
  %v3532 = vunpack.c.l.b16 %v3468
  %v3533 = vunpack.c.l.b16 %v3469
  %v3534 = vunpack.c.l.b16 %v3470
  %v3535 = vunpack.c.l.b16 %v3471
  %v3536 = vunpack.c.l.b16 %v3472
  %v3537 = vunpack.c.l.b16 %v3473
  %v3538 = vunpack.c.l.b16 %v3474
  %v3539 = vunpack.c.l.b16 %v3475
  %v3540 = vunpack.c.l.b16 %v3476
  %v3541 = vunpack.c.l.b16 %v3477
  %v3542 = vunpack.c.l.b16 %v3478
  %v3543 = vpack.c.b16 %v3512, %v3511
  %v3544 = vpack.c.b16 %v3514, %v3513
  %v3545 = vpack.c.b16 %v3516, %v3515
  %v3546 = vpack.c.b16 %v3518, %v3517
  %v3547 = vpack.c.b16 %v3520, %v3519
  %v3548 = vpack.c.b16 %v3522, %v3521
  %v3549 = vpack.c.b16 %v3524, %v3523
  %v3550 = vpack.c.b16 %v3526, %v3525
  %v3551 = vpack.c.b16 %v3528, %v3527
  %v3552 = vpack.c.b16 %v3530, %v3529
  %v3553 = vpack.c.b16 %v3532, %v3531
  %v3554 = vpack.c.b16 %v3534, %v3533
  %v3555 = vpack.c.b16 %v3536, %v3535
  %v3556 = vpack.c.b16 %v3538, %v3537
  %v3557 = vpack.c.b16 %v3540, %v3539
  %v3558 = vpack.c.b16 %v3542, %v3541
  %3575 = vmatprep.subr.bf16.mxu0 0
  %3576 = vmatpush1.bf16.msra.mxu0 %v3543
  %3577 = vmatprep.subr.bf16.mxu0 0
  %3578 = vmatpush1.bf16.msra.mxu0 %v3544
  %3579 = vmatprep.subr.bf16.mxu0 0
  %3580 = vmatpush1.bf16.msra.mxu0 %v3545
  %3581 = vmatprep.subr.bf16.mxu0 0
  %3582 = vmatpush1.bf16.msra.mxu0 %v3546
  %3583 = vmatprep.subr.bf16.mxu0 0
  %3584 = vmatpush1.bf16.msra.mxu0 %v3547
  %3585 = vmatprep.subr.bf16.mxu0 0
  %3586 = vmatpush1.bf16.msra.mxu0 %v3548
  %3587 = vmatprep.subr.bf16.mxu0 0
  %3588 = vmatpush1.bf16.msra.mxu0 %v3549
  %3589 = vmatprep.subr.bf16.mxu0 0
  %3590 = vmatpush1.bf16.msra.mxu0 %v3550
  %3591 = vmatprep.subr.bf16.mxu0 0
  %3592 = vmatpush1.bf16.msra.mxu0 %v3551
  %3593 = vmatprep.subr.bf16.mxu0 0
  %3594 = vmatpush1.bf16.msra.mxu0 %v3552
  %3595 = vmatprep.subr.bf16.mxu0 0
  %3596 = vmatpush1.bf16.msra.mxu0 %v3553
  %3597 = vmatprep.subr.bf16.mxu0 0
  %3598 = vmatpush1.bf16.msra.mxu0 %v3554
  %3599 = vmatprep.subr.bf16.mxu0 0
  %3600 = vmatpush1.bf16.msra.mxu0 %v3555
  %3601 = vmatprep.subr.bf16.mxu0 0
  %3602 = vmatpush1.bf16.msra.mxu0 %v3556
  %3603 = vmatprep.subr.bf16.mxu0 0
  %3604 = vmatpush1.bf16.msra.mxu0 %v3557
  %3605 = vmatprep.subr.bf16.mxu0 0
  %3606 = vmatpush1.bf16.msra.mxu0 %v3558
  %3607 = vmatprep.mubr.bf16.mxu0 %v3445
  %3608 = vmatmul.mubr.bf16.gmra.mrb[0].mxu0 %v3444
  %v3609 = vpop.f32.mrb[0].mxu0
  %v3610 = vadd.f32 0.0, %v3609
  %v3611 = vpop.f32.mrb[0].mxu0
  %v3612 = vpop.f32.mrb[0].mxu0
  %v3613 = vpop.f32.mrb[0].mxu0
  %3614 = vdwg.mxu0
  %v3615 = vadd.f32 %v3395, %v3610
  %s3616 = scalar_lea.vmem %s0, 16
  %v3617 = vld [vmem:[%s3616] sm:$0x1]
  %v3619 = vsel %vm93, %v3617, 0
  %3621 = vmatprep.subr.bf16.mxu0 %v84
  %3622 = vmatpush1.bf16.msra.mxu0 %v83
  %3623 = vmatprep.subr.bf16.mxu0 %v86
  %3624 = vmatpush1.bf16.msra.mxu0 %v85
  %3625 = vmatprep.subr.bf16.mxu0 %v102
  %3626 = vmatpush1.bf16.msra.mxu0 %v99
  %3627 = vmatprep.subr.bf16.mxu0 0
  %3628 = vmatpush1.bf16.msra.mxu0 0
  %3629 = vmatprep.subr.bf16.mxu0 0
  %3630 = vmatpush1.bf16.msra.mxu0 0
  %3631 = vmatprep.subr.bf16.mxu0 0
  %3632 = vmatpush1.bf16.msra.mxu0 0
  %3633 = vmatprep.subr.bf16.mxu0 0
  %3634 = vmatpush1.bf16.msra.mxu0 0
  %3635 = vmatprep.subr.bf16.mxu0 0
  %3636 = vmatpush1.bf16.msra.mxu0 0
  %3637 = vmatprep.subr.bf16.mxu0 0
  %3638 = vmatpush1.bf16.msra.mxu0 0
  %3639 = vmatprep.subr.bf16.mxu0 0
  %3640 = vmatpush1.bf16.msra.mxu0 0
  %3641 = vmatprep.subr.bf16.mxu0 0
  %3642 = vmatpush1.bf16.msra.mxu0 0
  %3643 = vmatprep.subr.bf16.mxu0 0
  %3644 = vmatpush1.bf16.msra.mxu0 0
  %3645 = vmatprep.subr.bf16.mxu0 0
  %3646 = vmatpush1.bf16.msra.mxu0 0
  %3647 = vmatprep.subr.bf16.mxu0 0
  %3648 = vmatpush1.bf16.msra.mxu0 0
  %3649 = vmatprep.subr.bf16.mxu0 0
  %3650 = vmatpush1.bf16.msra.mxu0 0
  %3651 = vmatprep.subr.bf16.mxu0 0
  %3652 = vmatpush1.bf16.msra.mxu0 0
  %3653 = vmatprep.mubr.bf16.mxu0 0
  %3654 = vmatmul.mubr.bf16.gmra.mrb[0].mxu0 %v3619
  %v3655 = vpop.f32.mrb[0].mxu0
  %v3656 = vadd.f32 %v61, %v3655
  %v3657 = vpop.f32.mrb[0].mxu0
  %v3658 = vadd.f32 %v65, %v3657
  %v3659 = vpop.f32.mrb[0].mxu0
  %v3660 = vpop.f32.mrb[0].mxu0
  %3661 = vdwg.mxu0
  %v3662 = vmax.f32 %v3656, 0.0
  %v3663 = vmax.f32 %v3658, 0.0
  %v3664 = vpack.c.bf16 %v3662, %v3662
  %v3665 = vpack.c.bf16 %v3663, %v3663
  %s3666 = scalar_lea.vmem %s5, 2048
  %v3667 = vld [vmem:[%s3666] sm:$0xf]
  %v3668 = vld [vmem:[%s3666 + $0x4] sm:$0xf]
  %v3669 = vld [vmem:[%s3666 + $0x8] sm:$0xf]
  %v3670 = vld [vmem:[%s3666 + $0xc] sm:$0xf]
  %v3671 = vld [vmem:[%s3666 + $0x10] sm:$0xf]
  %v3672 = vld [vmem:[%s3666 + $0x14] sm:$0xf]
  %v3673 = vld [vmem:[%s3666 + $0x18] sm:$0xf]
  %v3674 = vld [vmem:[%s3666 + $0x1c] sm:$0xf]
  %v3675 = vld [vmem:[%s3666 + $0x20] sm:$0xf]
  %v3676 = vld [vmem:[%s3666 + $0x24] sm:$0xf]
  %v3677 = vld [vmem:[%s3666 + $0x28] sm:$0xf]
  %v3678 = vld [vmem:[%s3666 + $0x2c] sm:$0xf]
  %v3679 = vld [vmem:[%s3666 + $0x30] sm:$0xf]
  %v3680 = vld [vmem:[%s3666 + $0x34] sm:$0xf]
  %v3681 = vld [vmem:[%s3666 + $0x38] sm:$0xf]
  %v3682 = vld [vmem:[%s3666 + $0x3c] sm:$0xf]
  %v3683 = vld [vmem:[%s3666 + $0x40] sm:$0xf]
  %v3684 = vld [vmem:[%s3666 + $0x44] sm:$0xf]
  %v3685 = vld [vmem:[%s3666 + $0x48] sm:$0xf]
  %v3686 = vld [vmem:[%s3666 + $0x4c] sm:$0xf]
  %v3687 = vld [vmem:[%s3666 + $0x50] sm:$0xf]
  %v3688 = vld [vmem:[%s3666 + $0x54] sm:$0xf]
  %v3689 = vld [vmem:[%s3666 + $0x58] sm:$0xf]
  %v3690 = vld [vmem:[%s3666 + $0x5c] sm:$0xf]
  %v3691 = vld [vmem:[%s3666 + $0x60] sm:$0xf]
  %v3692 = vld [vmem:[%s3666 + $0x64] sm:$0xf]
  %v3693 = vld [vmem:[%s3666 + $0x68] sm:$0xf]
  %v3694 = vld [vmem:[%s3666 + $0x6c] sm:$0xf]
  %v3695 = vld [vmem:[%s3666 + $0x70] sm:$0xf]
  %v3696 = vld [vmem:[%s3666 + $0x74] sm:$0xf]
  %v3697 = vld [vmem:[%s3666 + $0x78] sm:$0xf]
  %v3698 = vld [vmem:[%s3666 + $0x7c] sm:$0xf]
  %v3731 = vunpack.c.l.b16 %v3667
  %v3732 = vunpack.c.l.b16 %v3668
  %v3733 = vunpack.c.l.b16 %v3669
  %v3734 = vunpack.c.l.b16 %v3670
  %v3735 = vunpack.c.l.b16 %v3671
  %v3736 = vunpack.c.l.b16 %v3672
  %v3737 = vunpack.c.l.b16 %v3673
  %v3738 = vunpack.c.l.b16 %v3674
  %v3739 = vunpack.c.l.b16 %v3675
  %v3740 = vunpack.c.l.b16 %v3676
  %v3741 = vunpack.c.l.b16 %v3677
  %v3742 = vunpack.c.l.b16 %v3678
  %v3743 = vunpack.c.l.b16 %v3679
  %v3744 = vunpack.c.l.b16 %v3680
  %v3745 = vunpack.c.l.b16 %v3681
  %v3746 = vunpack.c.l.b16 %v3682
  %v3747 = vunpack.c.l.b16 %v3683
  %v3748 = vunpack.c.l.b16 %v3684
  %v3749 = vunpack.c.l.b16 %v3685
  %v3750 = vunpack.c.l.b16 %v3686
  %v3751 = vunpack.c.l.b16 %v3687
  %v3752 = vunpack.c.l.b16 %v3688
  %v3753 = vunpack.c.l.b16 %v3689
  %v3754 = vunpack.c.l.b16 %v3690
  %v3755 = vunpack.c.l.b16 %v3691
  %v3756 = vunpack.c.l.b16 %v3692
  %v3757 = vunpack.c.l.b16 %v3693
  %v3758 = vunpack.c.l.b16 %v3694
  %v3759 = vunpack.c.l.b16 %v3695
  %v3760 = vunpack.c.l.b16 %v3696
  %v3761 = vunpack.c.l.b16 %v3697
  %v3762 = vunpack.c.l.b16 %v3698
  %v3763 = vpack.c.b16 %v3732, %v3731
  %v3764 = vpack.c.b16 %v3734, %v3733
  %v3765 = vpack.c.b16 %v3736, %v3735
  %v3766 = vpack.c.b16 %v3738, %v3737
  %v3767 = vpack.c.b16 %v3740, %v3739
  %v3768 = vpack.c.b16 %v3742, %v3741
  %v3769 = vpack.c.b16 %v3744, %v3743
  %v3770 = vpack.c.b16 %v3746, %v3745
  %v3771 = vpack.c.b16 %v3748, %v3747
  %v3772 = vpack.c.b16 %v3750, %v3749
  %v3773 = vpack.c.b16 %v3752, %v3751
  %v3774 = vpack.c.b16 %v3754, %v3753
  %v3775 = vpack.c.b16 %v3756, %v3755
  %v3776 = vpack.c.b16 %v3758, %v3757
  %v3777 = vpack.c.b16 %v3760, %v3759
  %v3778 = vpack.c.b16 %v3762, %v3761
  %3795 = vmatprep.subr.bf16.mxu0 0
  %3796 = vmatpush1.bf16.msra.mxu0 %v3763
  %3797 = vmatprep.subr.bf16.mxu0 0
  %3798 = vmatpush1.bf16.msra.mxu0 %v3764
  %3799 = vmatprep.subr.bf16.mxu0 0
  %3800 = vmatpush1.bf16.msra.mxu0 %v3765
  %3801 = vmatprep.subr.bf16.mxu0 0
  %3802 = vmatpush1.bf16.msra.mxu0 %v3766
  %3803 = vmatprep.subr.bf16.mxu0 0
  %3804 = vmatpush1.bf16.msra.mxu0 %v3767
  %3805 = vmatprep.subr.bf16.mxu0 0
  %3806 = vmatpush1.bf16.msra.mxu0 %v3768
  %3807 = vmatprep.subr.bf16.mxu0 0
  %3808 = vmatpush1.bf16.msra.mxu0 %v3769
  %3809 = vmatprep.subr.bf16.mxu0 0
  %3810 = vmatpush1.bf16.msra.mxu0 %v3770
  %3811 = vmatprep.subr.bf16.mxu0 0
  %3812 = vmatpush1.bf16.msra.mxu0 %v3771
  %3813 = vmatprep.subr.bf16.mxu0 0
  %3814 = vmatpush1.bf16.msra.mxu0 %v3772
  %3815 = vmatprep.subr.bf16.mxu0 0
  %3816 = vmatpush1.bf16.msra.mxu0 %v3773
  %3817 = vmatprep.subr.bf16.mxu0 0
  %3818 = vmatpush1.bf16.msra.mxu0 %v3774
  %3819 = vmatprep.subr.bf16.mxu0 0
  %3820 = vmatpush1.bf16.msra.mxu0 %v3775
  %3821 = vmatprep.subr.bf16.mxu0 0
  %3822 = vmatpush1.bf16.msra.mxu0 %v3776
  %3823 = vmatprep.subr.bf16.mxu0 0
  %3824 = vmatpush1.bf16.msra.mxu0 %v3777
  %3825 = vmatprep.subr.bf16.mxu0 0
  %3826 = vmatpush1.bf16.msra.mxu0 %v3778
  %3827 = vmatprep.mubr.bf16.mxu0 %v3665
  %3828 = vmatmul.mubr.bf16.gmra.mrb[0].mxu0 %v3664
  %v3829 = vpop.f32.mrb[0].mxu0
  %v3830 = vadd.f32 0.0, %v3829
  %v3831 = vpop.f32.mrb[0].mxu0
  %v3832 = vpop.f32.mrb[0].mxu0
  %v3833 = vpop.f32.mrb[0].mxu0
  %3834 = vdwg.mxu0
  %v3835 = vadd.f32 %v3615, %v3830
  %s3836 = scalar_lea.vmem %s0, 17
  %v3837 = vld [vmem:[%s3836] sm:$0x1]
  %v3839 = vsel %vm93, %v3837, 0
  %3841 = vmatprep.subr.bf16.mxu0 %v84
  %3842 = vmatpush1.bf16.msra.mxu0 %v83
  %3843 = vmatprep.subr.bf16.mxu0 %v86
  %3844 = vmatpush1.bf16.msra.mxu0 %v85
  %3845 = vmatprep.subr.bf16.mxu0 %v102
  %3846 = vmatpush1.bf16.msra.mxu0 %v99
  %3847 = vmatprep.subr.bf16.mxu0 0
  %3848 = vmatpush1.bf16.msra.mxu0 0
  %3849 = vmatprep.subr.bf16.mxu0 0
  %3850 = vmatpush1.bf16.msra.mxu0 0
  %3851 = vmatprep.subr.bf16.mxu0 0
  %3852 = vmatpush1.bf16.msra.mxu0 0
  %3853 = vmatprep.subr.bf16.mxu0 0
  %3854 = vmatpush1.bf16.msra.mxu0 0
  %3855 = vmatprep.subr.bf16.mxu0 0
  %3856 = vmatpush1.bf16.msra.mxu0 0
  %3857 = vmatprep.subr.bf16.mxu0 0
  %3858 = vmatpush1.bf16.msra.mxu0 0
  %3859 = vmatprep.subr.bf16.mxu0 0
  %3860 = vmatpush1.bf16.msra.mxu0 0
  %3861 = vmatprep.subr.bf16.mxu0 0
  %3862 = vmatpush1.bf16.msra.mxu0 0
  %3863 = vmatprep.subr.bf16.mxu0 0
  %3864 = vmatpush1.bf16.msra.mxu0 0
  %3865 = vmatprep.subr.bf16.mxu0 0
  %3866 = vmatpush1.bf16.msra.mxu0 0
  %3867 = vmatprep.subr.bf16.mxu0 0
  %3868 = vmatpush1.bf16.msra.mxu0 0
  %3869 = vmatprep.subr.bf16.mxu0 0
  %3870 = vmatpush1.bf16.msra.mxu0 0
  %3871 = vmatprep.subr.bf16.mxu0 0
  %3872 = vmatpush1.bf16.msra.mxu0 0
  %3873 = vmatprep.mubr.bf16.mxu0 0
  %3874 = vmatmul.mubr.bf16.gmra.mrb[0].mxu0 %v3839
  %v3875 = vpop.f32.mrb[0].mxu0
  %v3876 = vadd.f32 %v61, %v3875
  %v3877 = vpop.f32.mrb[0].mxu0
  %v3878 = vadd.f32 %v65, %v3877
  %v3879 = vpop.f32.mrb[0].mxu0
  %v3880 = vpop.f32.mrb[0].mxu0
  %3881 = vdwg.mxu0
  %v3882 = vmax.f32 %v3876, 0.0
  %v3883 = vmax.f32 %v3878, 0.0
  %v3884 = vpack.c.bf16 %v3882, %v3882
  %v3885 = vpack.c.bf16 %v3883, %v3883
  %s3886 = scalar_lea.vmem %s5, 2176
  %v3887 = vld [vmem:[%s3886] sm:$0xf]
  %v3888 = vld [vmem:[%s3886 + $0x4] sm:$0xf]
  %v3889 = vld [vmem:[%s3886 + $0x8] sm:$0xf]
  %v3890 = vld [vmem:[%s3886 + $0xc] sm:$0xf]
  %v3891 = vld [vmem:[%s3886 + $0x10] sm:$0xf]
  %v3892 = vld [vmem:[%s3886 + $0x14] sm:$0xf]
  %v3893 = vld [vmem:[%s3886 + $0x18] sm:$0xf]
  %v3894 = vld [vmem:[%s3886 + $0x1c] sm:$0xf]
  %v3895 = vld [vmem:[%s3886 + $0x20] sm:$0xf]
  %v3896 = vld [vmem:[%s3886 + $0x24] sm:$0xf]
  %v3897 = vld [vmem:[%s3886 + $0x28] sm:$0xf]
  %v3898 = vld [vmem:[%s3886 + $0x2c] sm:$0xf]
  %v3899 = vld [vmem:[%s3886 + $0x30] sm:$0xf]
  %v3900 = vld [vmem:[%s3886 + $0x34] sm:$0xf]
  %v3901 = vld [vmem:[%s3886 + $0x38] sm:$0xf]
  %v3902 = vld [vmem:[%s3886 + $0x3c] sm:$0xf]
  %v3903 = vld [vmem:[%s3886 + $0x40] sm:$0xf]
  %v3904 = vld [vmem:[%s3886 + $0x44] sm:$0xf]
  %v3905 = vld [vmem:[%s3886 + $0x48] sm:$0xf]
  %v3906 = vld [vmem:[%s3886 + $0x4c] sm:$0xf]
  %v3907 = vld [vmem:[%s3886 + $0x50] sm:$0xf]
  %v3908 = vld [vmem:[%s3886 + $0x54] sm:$0xf]
  %v3909 = vld [vmem:[%s3886 + $0x58] sm:$0xf]
  %v3910 = vld [vmem:[%s3886 + $0x5c] sm:$0xf]
  %v3911 = vld [vmem:[%s3886 + $0x60] sm:$0xf]
  %v3912 = vld [vmem:[%s3886 + $0x64] sm:$0xf]
  %v3913 = vld [vmem:[%s3886 + $0x68] sm:$0xf]
  %v3914 = vld [vmem:[%s3886 + $0x6c] sm:$0xf]
  %v3915 = vld [vmem:[%s3886 + $0x70] sm:$0xf]
  %v3916 = vld [vmem:[%s3886 + $0x74] sm:$0xf]
  %v3917 = vld [vmem:[%s3886 + $0x78] sm:$0xf]
  %v3918 = vld [vmem:[%s3886 + $0x7c] sm:$0xf]
  %v3951 = vunpack.c.l.b16 %v3887
  %v3952 = vunpack.c.l.b16 %v3888
  %v3953 = vunpack.c.l.b16 %v3889
  %v3954 = vunpack.c.l.b16 %v3890
  %v3955 = vunpack.c.l.b16 %v3891
  %v3956 = vunpack.c.l.b16 %v3892
  %v3957 = vunpack.c.l.b16 %v3893
  %v3958 = vunpack.c.l.b16 %v3894
  %v3959 = vunpack.c.l.b16 %v3895
  %v3960 = vunpack.c.l.b16 %v3896
  %v3961 = vunpack.c.l.b16 %v3897
  %v3962 = vunpack.c.l.b16 %v3898
  %v3963 = vunpack.c.l.b16 %v3899
  %v3964 = vunpack.c.l.b16 %v3900
  %v3965 = vunpack.c.l.b16 %v3901
  %v3966 = vunpack.c.l.b16 %v3902
  %v3967 = vunpack.c.l.b16 %v3903
  %v3968 = vunpack.c.l.b16 %v3904
  %v3969 = vunpack.c.l.b16 %v3905
  %v3970 = vunpack.c.l.b16 %v3906
  %v3971 = vunpack.c.l.b16 %v3907
  %v3972 = vunpack.c.l.b16 %v3908
  %v3973 = vunpack.c.l.b16 %v3909
  %v3974 = vunpack.c.l.b16 %v3910
  %v3975 = vunpack.c.l.b16 %v3911
  %v3976 = vunpack.c.l.b16 %v3912
  %v3977 = vunpack.c.l.b16 %v3913
  %v3978 = vunpack.c.l.b16 %v3914
  %v3979 = vunpack.c.l.b16 %v3915
  %v3980 = vunpack.c.l.b16 %v3916
  %v3981 = vunpack.c.l.b16 %v3917
  %v3982 = vunpack.c.l.b16 %v3918
  %v3983 = vpack.c.b16 %v3952, %v3951
  %v3984 = vpack.c.b16 %v3954, %v3953
  %v3985 = vpack.c.b16 %v3956, %v3955
  %v3986 = vpack.c.b16 %v3958, %v3957
  %v3987 = vpack.c.b16 %v3960, %v3959
  %v3988 = vpack.c.b16 %v3962, %v3961
  %v3989 = vpack.c.b16 %v3964, %v3963
  %v3990 = vpack.c.b16 %v3966, %v3965
  %v3991 = vpack.c.b16 %v3968, %v3967
  %v3992 = vpack.c.b16 %v3970, %v3969
  %v3993 = vpack.c.b16 %v3972, %v3971
  %v3994 = vpack.c.b16 %v3974, %v3973
  %v3995 = vpack.c.b16 %v3976, %v3975
  %v3996 = vpack.c.b16 %v3978, %v3977
  %v3997 = vpack.c.b16 %v3980, %v3979
  %v3998 = vpack.c.b16 %v3982, %v3981
  %4015 = vmatprep.subr.bf16.mxu0 0
  %4016 = vmatpush1.bf16.msra.mxu0 %v3983
  %4017 = vmatprep.subr.bf16.mxu0 0
  %4018 = vmatpush1.bf16.msra.mxu0 %v3984
  %4019 = vmatprep.subr.bf16.mxu0 0
  %4020 = vmatpush1.bf16.msra.mxu0 %v3985
  %4021 = vmatprep.subr.bf16.mxu0 0
  %4022 = vmatpush1.bf16.msra.mxu0 %v3986
  %4023 = vmatprep.subr.bf16.mxu0 0
  %4024 = vmatpush1.bf16.msra.mxu0 %v3987
  %4025 = vmatprep.subr.bf16.mxu0 0
  %4026 = vmatpush1.bf16.msra.mxu0 %v3988
  %4027 = vmatprep.subr.bf16.mxu0 0
  %4028 = vmatpush1.bf16.msra.mxu0 %v3989
  %4029 = vmatprep.subr.bf16.mxu0 0
  %4030 = vmatpush1.bf16.msra.mxu0 %v3990
  %4031 = vmatprep.subr.bf16.mxu0 0
  %4032 = vmatpush1.bf16.msra.mxu0 %v3991
  %4033 = vmatprep.subr.bf16.mxu0 0
  %4034 = vmatpush1.bf16.msra.mxu0 %v3992
  %4035 = vmatprep.subr.bf16.mxu0 0
  %4036 = vmatpush1.bf16.msra.mxu0 %v3993
  %4037 = vmatprep.subr.bf16.mxu0 0
  %4038 = vmatpush1.bf16.msra.mxu0 %v3994
  %4039 = vmatprep.subr.bf16.mxu0 0
  %4040 = vmatpush1.bf16.msra.mxu0 %v3995
  %4041 = vmatprep.subr.bf16.mxu0 0
  %4042 = vmatpush1.bf16.msra.mxu0 %v3996
  %4043 = vmatprep.subr.bf16.mxu0 0
  %4044 = vmatpush1.bf16.msra.mxu0 %v3997
  %4045 = vmatprep.subr.bf16.mxu0 0
  %4046 = vmatpush1.bf16.msra.mxu0 %v3998
  %4047 = vmatprep.mubr.bf16.mxu0 %v3885
  %4048 = vmatmul.mubr.bf16.gmra.mrb[0].mxu0 %v3884
  %v4049 = vpop.f32.mrb[0].mxu0
  %v4050 = vadd.f32 0.0, %v4049
  %v4051 = vpop.f32.mrb[0].mxu0
  %v4052 = vpop.f32.mrb[0].mxu0
  %v4053 = vpop.f32.mrb[0].mxu0
  %4054 = vdwg.mxu0
  %v4055 = vadd.f32 %v3835, %v4050
  %s4056 = scalar_lea.vmem %s0, 18
  %v4057 = vld [vmem:[%s4056] sm:$0x1]
  %v4059 = vsel %vm93, %v4057, 0
  %4061 = vmatprep.subr.bf16.mxu0 %v84
  %4062 = vmatpush1.bf16.msra.mxu0 %v83
  %4063 = vmatprep.subr.bf16.mxu0 %v86
  %4064 = vmatpush1.bf16.msra.mxu0 %v85
  %4065 = vmatprep.subr.bf16.mxu0 %v102
  %4066 = vmatpush1.bf16.msra.mxu0 %v99
  %4067 = vmatprep.subr.bf16.mxu0 0
  %4068 = vmatpush1.bf16.msra.mxu0 0
  %4069 = vmatprep.subr.bf16.mxu0 0
  %4070 = vmatpush1.bf16.msra.mxu0 0
  %4071 = vmatprep.subr.bf16.mxu0 0
  %4072 = vmatpush1.bf16.msra.mxu0 0
  %4073 = vmatprep.subr.bf16.mxu0 0
  %4074 = vmatpush1.bf16.msra.mxu0 0
  %4075 = vmatprep.subr.bf16.mxu0 0
  %4076 = vmatpush1.bf16.msra.mxu0 0
  %4077 = vmatprep.subr.bf16.mxu0 0
  %4078 = vmatpush1.bf16.msra.mxu0 0
  %4079 = vmatprep.subr.bf16.mxu0 0
  %4080 = vmatpush1.bf16.msra.mxu0 0
  %4081 = vmatprep.subr.bf16.mxu0 0
  %4082 = vmatpush1.bf16.msra.mxu0 0
  %4083 = vmatprep.subr.bf16.mxu0 0
  %4084 = vmatpush1.bf16.msra.mxu0 0
  %4085 = vmatprep.subr.bf16.mxu0 0
  %4086 = vmatpush1.bf16.msra.mxu0 0
  %4087 = vmatprep.subr.bf16.mxu0 0
  %4088 = vmatpush1.bf16.msra.mxu0 0
  %4089 = vmatprep.subr.bf16.mxu0 0
  %4090 = vmatpush1.bf16.msra.mxu0 0
  %4091 = vmatprep.subr.bf16.mxu0 0
  %4092 = vmatpush1.bf16.msra.mxu0 0
  %4093 = vmatprep.mubr.bf16.mxu0 0
  %4094 = vmatmul.mubr.bf16.gmra.mrb[0].mxu0 %v4059
  %v4095 = vpop.f32.mrb[0].mxu0
  %v4096 = vadd.f32 %v61, %v4095
  %v4097 = vpop.f32.mrb[0].mxu0
  %v4098 = vadd.f32 %v65, %v4097
  %v4099 = vpop.f32.mrb[0].mxu0
  %v4100 = vpop.f32.mrb[0].mxu0
  %4101 = vdwg.mxu0
  %v4102 = vmax.f32 %v4096, 0.0
  %v4103 = vmax.f32 %v4098, 0.0
  %v4104 = vpack.c.bf16 %v4102, %v4102
  %v4105 = vpack.c.bf16 %v4103, %v4103
  %s4106 = scalar_lea.vmem %s5, 2304
  %v4107 = vld [vmem:[%s4106] sm:$0xf]
  %v4108 = vld [vmem:[%s4106 + $0x4] sm:$0xf]
  %v4109 = vld [vmem:[%s4106 + $0x8] sm:$0xf]
  %v4110 = vld [vmem:[%s4106 + $0xc] sm:$0xf]
  %v4111 = vld [vmem:[%s4106 + $0x10] sm:$0xf]
  %v4112 = vld [vmem:[%s4106 + $0x14] sm:$0xf]
  %v4113 = vld [vmem:[%s4106 + $0x18] sm:$0xf]
  %v4114 = vld [vmem:[%s4106 + $0x1c] sm:$0xf]
  %v4115 = vld [vmem:[%s4106 + $0x20] sm:$0xf]
  %v4116 = vld [vmem:[%s4106 + $0x24] sm:$0xf]
  %v4117 = vld [vmem:[%s4106 + $0x28] sm:$0xf]
  %v4118 = vld [vmem:[%s4106 + $0x2c] sm:$0xf]
  %v4119 = vld [vmem:[%s4106 + $0x30] sm:$0xf]
  %v4120 = vld [vmem:[%s4106 + $0x34] sm:$0xf]
  %v4121 = vld [vmem:[%s4106 + $0x38] sm:$0xf]
  %v4122 = vld [vmem:[%s4106 + $0x3c] sm:$0xf]
  %v4123 = vld [vmem:[%s4106 + $0x40] sm:$0xf]
  %v4124 = vld [vmem:[%s4106 + $0x44] sm:$0xf]
  %v4125 = vld [vmem:[%s4106 + $0x48] sm:$0xf]
  %v4126 = vld [vmem:[%s4106 + $0x4c] sm:$0xf]
  %v4127 = vld [vmem:[%s4106 + $0x50] sm:$0xf]
  %v4128 = vld [vmem:[%s4106 + $0x54] sm:$0xf]
  %v4129 = vld [vmem:[%s4106 + $0x58] sm:$0xf]
  %v4130 = vld [vmem:[%s4106 + $0x5c] sm:$0xf]
  %v4131 = vld [vmem:[%s4106 + $0x60] sm:$0xf]
  %v4132 = vld [vmem:[%s4106 + $0x64] sm:$0xf]
  %v4133 = vld [vmem:[%s4106 + $0x68] sm:$0xf]
  %v4134 = vld [vmem:[%s4106 + $0x6c] sm:$0xf]
  %v4135 = vld [vmem:[%s4106 + $0x70] sm:$0xf]
  %v4136 = vld [vmem:[%s4106 + $0x74] sm:$0xf]
  %v4137 = vld [vmem:[%s4106 + $0x78] sm:$0xf]
  %v4138 = vld [vmem:[%s4106 + $0x7c] sm:$0xf]
  %v4171 = vunpack.c.l.b16 %v4107
  %v4172 = vunpack.c.l.b16 %v4108
  %v4173 = vunpack.c.l.b16 %v4109
  %v4174 = vunpack.c.l.b16 %v4110
  %v4175 = vunpack.c.l.b16 %v4111
  %v4176 = vunpack.c.l.b16 %v4112
  %v4177 = vunpack.c.l.b16 %v4113
  %v4178 = vunpack.c.l.b16 %v4114
  %v4179 = vunpack.c.l.b16 %v4115
  %v4180 = vunpack.c.l.b16 %v4116
  %v4181 = vunpack.c.l.b16 %v4117
  %v4182 = vunpack.c.l.b16 %v4118
  %v4183 = vunpack.c.l.b16 %v4119
  %v4184 = vunpack.c.l.b16 %v4120
  %v4185 = vunpack.c.l.b16 %v4121
  %v4186 = vunpack.c.l.b16 %v4122
  %v4187 = vunpack.c.l.b16 %v4123
  %v4188 = vunpack.c.l.b16 %v4124
  %v4189 = vunpack.c.l.b16 %v4125
  %v4190 = vunpack.c.l.b16 %v4126
  %v4191 = vunpack.c.l.b16 %v4127
  %v4192 = vunpack.c.l.b16 %v4128
  %v4193 = vunpack.c.l.b16 %v4129
  %v4194 = vunpack.c.l.b16 %v4130
  %v4195 = vunpack.c.l.b16 %v4131
  %v4196 = vunpack.c.l.b16 %v4132
  %v4197 = vunpack.c.l.b16 %v4133
  %v4198 = vunpack.c.l.b16 %v4134
  %v4199 = vunpack.c.l.b16 %v4135
  %v4200 = vunpack.c.l.b16 %v4136
  %v4201 = vunpack.c.l.b16 %v4137
  %v4202 = vunpack.c.l.b16 %v4138
  %v4203 = vpack.c.b16 %v4172, %v4171
  %v4204 = vpack.c.b16 %v4174, %v4173
  %v4205 = vpack.c.b16 %v4176, %v4175
  %v4206 = vpack.c.b16 %v4178, %v4177
  %v4207 = vpack.c.b16 %v4180, %v4179
  %v4208 = vpack.c.b16 %v4182, %v4181
  %v4209 = vpack.c.b16 %v4184, %v4183
  %v4210 = vpack.c.b16 %v4186, %v4185
  %v4211 = vpack.c.b16 %v4188, %v4187
  %v4212 = vpack.c.b16 %v4190, %v4189
  %v4213 = vpack.c.b16 %v4192, %v4191
  %v4214 = vpack.c.b16 %v4194, %v4193
  %v4215 = vpack.c.b16 %v4196, %v4195
  %v4216 = vpack.c.b16 %v4198, %v4197
  %v4217 = vpack.c.b16 %v4200, %v4199
  %v4218 = vpack.c.b16 %v4202, %v4201
  %4235 = vmatprep.subr.bf16.mxu0 0
  %4236 = vmatpush1.bf16.msra.mxu0 %v4203
  %4237 = vmatprep.subr.bf16.mxu0 0
  %4238 = vmatpush1.bf16.msra.mxu0 %v4204
  %4239 = vmatprep.subr.bf16.mxu0 0
  %4240 = vmatpush1.bf16.msra.mxu0 %v4205
  %4241 = vmatprep.subr.bf16.mxu0 0
  %4242 = vmatpush1.bf16.msra.mxu0 %v4206
  %4243 = vmatprep.subr.bf16.mxu0 0
  %4244 = vmatpush1.bf16.msra.mxu0 %v4207
  %4245 = vmatprep.subr.bf16.mxu0 0
  %4246 = vmatpush1.bf16.msra.mxu0 %v4208
  %4247 = vmatprep.subr.bf16.mxu0 0
  %4248 = vmatpush1.bf16.msra.mxu0 %v4209
  %4249 = vmatprep.subr.bf16.mxu0 0
  %4250 = vmatpush1.bf16.msra.mxu0 %v4210
  %4251 = vmatprep.subr.bf16.mxu0 0
  %4252 = vmatpush1.bf16.msra.mxu0 %v4211
  %4253 = vmatprep.subr.bf16.mxu0 0
  %4254 = vmatpush1.bf16.msra.mxu0 %v4212
  %4255 = vmatprep.subr.bf16.mxu0 0
  %4256 = vmatpush1.bf16.msra.mxu0 %v4213
  %4257 = vmatprep.subr.bf16.mxu0 0
  %4258 = vmatpush1.bf16.msra.mxu0 %v4214
  %4259 = vmatprep.subr.bf16.mxu0 0
  %4260 = vmatpush1.bf16.msra.mxu0 %v4215
  %4261 = vmatprep.subr.bf16.mxu0 0
  %4262 = vmatpush1.bf16.msra.mxu0 %v4216
  %4263 = vmatprep.subr.bf16.mxu0 0
  %4264 = vmatpush1.bf16.msra.mxu0 %v4217
  %4265 = vmatprep.subr.bf16.mxu0 0
  %4266 = vmatpush1.bf16.msra.mxu0 %v4218
  %4267 = vmatprep.mubr.bf16.mxu0 %v4105
  %4268 = vmatmul.mubr.bf16.gmra.mrb[0].mxu0 %v4104
  %v4269 = vpop.f32.mrb[0].mxu0
  %v4270 = vadd.f32 0.0, %v4269
  %v4271 = vpop.f32.mrb[0].mxu0
  %v4272 = vpop.f32.mrb[0].mxu0
  %v4273 = vpop.f32.mrb[0].mxu0
  %4274 = vdwg.mxu0
  %v4275 = vadd.f32 %v4055, %v4270
  %v4276 = vld [vmem:[%s6] sm:$0x1]
  %v4278 = vlaneseq
  %v4279 = vshrl.u32 %v4278, 7
  %v4280 = vsub.s32 0, %v4279
  %v4281 = vrot.slane %v4276, %v4280
  %v4283 = vadd.f32 %v4275, %v4281
  %v4284 = vmax.f32 %v4283, 0.0
  %v4285 = vld [vmem:[%s7] sm:$0xff]
  %v4286 = vld [vmem:[%s7 + $0x8] sm:$0xff]
  %v4287 = vld [vmem:[%s7 + $0x10] sm:$0xff]
  %v4288 = vld [vmem:[%s7 + $0x18] sm:$0xff]
  %v4289 = vld [vmem:[%s7 + $0x20] sm:$0xff]
  %v4290 = vld [vmem:[%s7 + $0x28] sm:$0xff]
  %v4291 = vld [vmem:[%s7 + $0x30] sm:$0xff]
  %v4292 = vld [vmem:[%s7 + $0x38] sm:$0xff]
  %v4293 = vld [vmem:[%s8] sm:$0x1]
  %v4295 = vlaneseq
  %v4296 = vshrl.u32 %v4295, 7
  %v4297 = vsub.s32 0, %v4296
  %v4298 = vrot.slane %v4293, %v4297
  %vm4300 = vcmask 523264
  %v4302 = vsel %vm4300, %v4284, 0
  %4304 = vmatprep.subr.mxu0 0.0
  %4305 = vmatpush1.msra.mxu0 %v4285
  %4306 = vmatprep.subr.mxu0 0.0
  %4307 = vmatpush1.msra.mxu0 %v4286
  %4308 = vmatprep.subr.mxu0 0.0
  %4309 = vmatpush1.msra.mxu0 %v4287
  %4310 = vmatprep.subr.mxu0 0.0
  %4311 = vmatpush1.msra.mxu0 %v4288
  %4312 = vmatprep.subr.mxu0 0.0
  %4313 = vmatpush1.msra.mxu0 %v4289
  %4314 = vmatprep.subr.mxu0 0.0
  %4315 = vmatpush1.msra.mxu0 %v4290
  %4316 = vmatprep.subr.mxu0 0.0
  %4317 = vmatpush1.msra.mxu0 %v4291
  %4318 = vmatprep.subr.mxu0 0.0
  %4319 = vmatpush1.msra.mxu0 %v4292
  %4320 = vmatprep.subr.mxu0 0.0
  %4321 = vmatpush1.msra.mxu0 0.0
  %4322 = vmatprep.subr.mxu0 0.0
  %4323 = vmatpush1.msra.mxu0 0.0
  %4324 = vmatprep.subr.mxu0 0.0
  %4325 = vmatpush1.msra.mxu0 0.0
  %4326 = vmatprep.subr.mxu0 0.0
  %4327 = vmatpush1.msra.mxu0 0.0
  %4328 = vmatprep.subr.mxu0 0.0
  %4329 = vmatpush1.msra.mxu0 0.0
  %4330 = vmatprep.subr.mxu0 0.0
  %4331 = vmatpush1.msra.mxu0 0.0
  %4332 = vmatprep.subr.mxu0 0.0
  %4333 = vmatpush1.msra.mxu0 0.0
  %4334 = vmatprep.subr.mxu0 0.0
  %4335 = vmatpush1.msra.mxu0 0.0
  %4336 = vmatprep.subr.mxu0 0.0
  %4337 = vmatpush1.msra.mxu0 0.0
  %4338 = vmatprep.subr.mxu0 0.0
  %4339 = vmatpush1.msra.mxu0 0.0
  %4340 = vmatprep.subr.mxu0 0.0
  %4341 = vmatpush1.msra.mxu0 0.0
  %4342 = vmatprep.subr.mxu0 0.0
  %4343 = vmatpush1.msra.mxu0 0.0
  %4344 = vmatprep.subr.mxu0 0.0
  %4345 = vmatpush1.msra.mxu0 0.0
  %4346 = vmatprep.subr.mxu0 0.0
  %4347 = vmatpush1.msra.mxu0 0.0
  %4348 = vmatprep.subr.mxu0 0.0
  %4349 = vmatpush1.msra.mxu0 0.0
  %4350 = vmatprep.subr.mxu0 0.0
  %4351 = vmatpush1.msra.mxu0 0.0
  %4352 = vmatprep.subr.mxu0 0.0
  %4353 = vmatpush1.msra.mxu0 0.0
  %4354 = vmatprep.subr.mxu0 0.0
  %4355 = vmatpush1.msra.mxu0 0.0
  %4356 = vmatprep.subr.mxu0 0.0
  %4357 = vmatpush1.msra.mxu0 0.0
  %4358 = vmatprep.subr.mxu0 0.0
  %4359 = vmatpush1.msra.mxu0 0.0
  %4360 = vmatprep.subr.mxu0 0.0
  %4361 = vmatpush1.msra.mxu0 0.0
  %4362 = vmatprep.subr.mxu0 0.0
  %4363 = vmatpush1.msra.mxu0 0.0
  %4364 = vmatprep.subr.mxu0 0.0
  %4365 = vmatpush1.msra.mxu0 0.0
  %4366 = vmatprep.subr.mxu0 0.0
  %4367 = vmatpush1.msra.mxu0 0.0
  %4368 = vmatprep.mubr.f32.mxu0 0.0
  %4369 = vmatmul.mubr.f32.gmra.mrb[0].mxu0 %v4302
  %v4370 = vpop.f32.mrb[0].mxu0
  %v4371 = vadd.f32 %v4298, %v4370
  %v4372 = vpop.f32.mrb[0].mxu0
  %4373 = vdwg.mxu0
  %v4374 = vld [vmem:[%s2] sm:$0x3]
  %v4375 = vmul.f32 %v4371, 0.5
  %v4376 = vmul.f32 %v4375, 1.442695
  %v4377 = vpow.pop %v4376
  %4379 = vrot.lane.b32.xlu0 %v4377, 120
  %v4380 = vpop.permute.xlu0 %4379
  %v4382 = vmul.f32 %v4374, %v4380
  %v4383 = vadd.f32 %v4382, %v4371
  %v4384 = vld [vmem:[%s9] sm:$0xff]
  %v4385 = vld [vmem:[%s1] sm:$0x3]
  %v4386 = vld [vmem:[%s10] sm:$0x1]
  %4388 = vset.pattern.permute.xlu0 0
  %4389 = vperm.xlu0 %4388, %v4385
  %v4390 = vpop.permute.xlu0 %4389
  %v4393 = vlaneseq
  %v4394 = vshrl.u32 %v4393, 7
  %v4395 = vsub.s32 0, %v4394
  %v4396 = vrot.slane %v4386, %v4395
  %v4398 = vmul.f32 %v4390, %v4396
  %vm4399 = vcmask 64512
  %v4401 = vsel %vm4399, %v4383, 0
  %4403 = vmatprep.subr.mxu0 0.0
  %4404 = vmatpush1.msra.mxu0 %v4384
  %4405 = vmatprep.subr.mxu0 0.0
  %4406 = vmatpush1.msra.mxu0 0.0
  %4407 = vmatprep.subr.mxu0 0.0
  %4408 = vmatpush1.msra.mxu0 0.0
  %4409 = vmatprep.subr.mxu0 0.0
  %4410 = vmatpush1.msra.mxu0 0.0
  %4411 = vmatprep.subr.mxu0 0.0
  %4412 = vmatpush1.msra.mxu0 0.0
  %4413 = vmatprep.subr.mxu0 0.0
  %4414 = vmatpush1.msra.mxu0 0.0
  %4415 = vmatprep.subr.mxu0 0.0
  %4416 = vmatpush1.msra.mxu0 0.0
  %4417 = vmatprep.subr.mxu0 0.0
  %4418 = vmatpush1.msra.mxu0 0.0
  %4419 = vmatprep.subr.mxu0 0.0
  %4420 = vmatpush1.msra.mxu0 0.0
  %4421 = vmatprep.subr.mxu0 0.0
  %4422 = vmatpush1.msra.mxu0 0.0
  %4423 = vmatprep.subr.mxu0 0.0
  %4424 = vmatpush1.msra.mxu0 0.0
  %4425 = vmatprep.subr.mxu0 0.0
  %4426 = vmatpush1.msra.mxu0 0.0
  %4427 = vmatprep.subr.mxu0 0.0
  %4428 = vmatpush1.msra.mxu0 0.0
  %4429 = vmatprep.subr.mxu0 0.0
  %4430 = vmatpush1.msra.mxu0 0.0
  %4431 = vmatprep.subr.mxu0 0.0
  %4432 = vmatpush1.msra.mxu0 0.0
  %4433 = vmatprep.subr.mxu0 0.0
  %4434 = vmatpush1.msra.mxu0 0.0
  %4435 = vmatprep.subr.mxu0 0.0
  %4436 = vmatpush1.msra.mxu0 0.0
  %4437 = vmatprep.subr.mxu0 0.0
  %4438 = vmatpush1.msra.mxu0 0.0
  %4439 = vmatprep.subr.mxu0 0.0
  %4440 = vmatpush1.msra.mxu0 0.0
  %4441 = vmatprep.subr.mxu0 0.0
  %4442 = vmatpush1.msra.mxu0 0.0
  %4443 = vmatprep.subr.mxu0 0.0
  %4444 = vmatpush1.msra.mxu0 0.0
  %4445 = vmatprep.subr.mxu0 0.0
  %4446 = vmatpush1.msra.mxu0 0.0
  %4447 = vmatprep.subr.mxu0 0.0
  %4448 = vmatpush1.msra.mxu0 0.0
  %4449 = vmatprep.subr.mxu0 0.0
  %4450 = vmatpush1.msra.mxu0 0.0
  %4451 = vmatprep.subr.mxu0 0.0
  %4452 = vmatpush1.msra.mxu0 0.0
  %4453 = vmatprep.subr.mxu0 0.0
  %4454 = vmatpush1.msra.mxu0 0.0
  %4455 = vmatprep.subr.mxu0 0.0
  %4456 = vmatpush1.msra.mxu0 0.0
  %4457 = vmatprep.subr.mxu0 0.0
  %4458 = vmatpush1.msra.mxu0 0.0
  %4459 = vmatprep.subr.mxu0 0.0
  %4460 = vmatpush1.msra.mxu0 0.0
  %4461 = vmatprep.subr.mxu0 0.0
  %4462 = vmatpush1.msra.mxu0 0.0
  %4463 = vmatprep.subr.mxu0 0.0
  %4464 = vmatpush1.msra.mxu0 0.0
  %4465 = vmatprep.subr.mxu0 0.0
  %4466 = vmatpush1.msra.mxu0 0.0
  %4467 = vmatprep.mubr.f32.mxu0 0.0
  %4468 = vmatmul.mubr.f32.gmra.mrb[0].mxu0 %v4401
  %v4469 = vpop.f32.mrb[0].mxu0
  %v4470 = vadd.f32 %v4398, %v4469
  %v4471 = vpop.f32.mrb[0].mxu0
  %4472 = vdwg.mxu0
  %v4473 = vld [vmem:[%s11] sm:$0x1]
  %v4475 = vlaneseq
  %v4476 = vshrl.u32 %v4475, 7
  %v4477 = vsub.s32 0, %v4476
  %v4478 = vrot.slane %v4473, %v4477
  %v4480 = vadd.f32 %v4470, %v4478
  %v4481 = vmax.f32 %v4480, 0.0
  %v4482 = vpack.c.bf16 %v4481, %v4481
  %v4483 = vld [vmem:[%s12] sm:$0xff]
  %v4484 = vld [vmem:[%s12 + $0x8] sm:$0xff]
  %v4485 = vld [vmem:[%s12 + $0x10] sm:$0xf]
  %v4486 = vld [vmem:[%s12 + $0x14] sm:$0xff]
  %v4487 = vld [vmem:[%s12 + $0x1c] sm:$0xff]
  %v4488 = vld [vmem:[%s12 + $0x24] sm:$0xf]
  %v4489 = vld [vmem:[%s12 + $0x28] sm:$0xff]
  %v4490 = vld [vmem:[%s12 + $0x30] sm:$0xff]
  %v4491 = vld [vmem:[%s12 + $0x38] sm:$0xf]
  %v4492 = vld [vmem:[%s12 + $0x3c] sm:$0xff]
  %v4493 = vld [vmem:[%s12 + $0x44] sm:$0xff]
  %v4494 = vld [vmem:[%s12 + $0x4c] sm:$0xf]
  %v4495 = vld [vmem:[%s12 + $0x50] sm:$0xff]
  %v4496 = vld [vmem:[%s12 + $0x58] sm:$0xff]
  %v4497 = vld [vmem:[%s12 + $0x60] sm:$0xf]
  %v4498 = vld [vmem:[%s12 + $0x64] sm:$0xff]
  %v4499 = vld [vmem:[%s12 + $0x6c] sm:$0xff]
  %v4500 = vld [vmem:[%s12 + $0x74] sm:$0xf]
  %v4501 = vld [vmem:[%s12 + $0x78] sm:$0xff]
  %v4502 = vld [vmem:[%s12 + $0x80] sm:$0xff]
  %v4503 = vld [vmem:[%s12 + $0x88] sm:$0xf]
  %v4504 = vld [vmem:[%s12 + $0x8c] sm:$0xff]
  %v4505 = vld [vmem:[%s12 + $0x94] sm:$0xff]
  %v4506 = vld [vmem:[%s12 + $0x9c] sm:$0xf]
  %v4507 = vld [vmem:[%s13] sm:$0x1f]
  %v4509 = vlaneseq
  %v4510 = vshrl.u32 %v4509, 7
  %v4511 = vsub.s32 0, %v4510
  %v4512 = vrot.slane %v4507, %v4511
  %v4513 = vlaneseq
  %v4514 = vshrl.u32 %v4513, 7
  %v4515 = vsub.s32 1, %v4514
  %v4516 = vrot.slane %v4507, %v4515
  %v4517 = vlaneseq
  %v4518 = vshrl.u32 %v4517, 7
  %v4519 = vsub.s32 2, %v4518
  %v4520 = vrot.slane %v4507, %v4519
  %v4521 = vlaneseq
  %v4522 = vshrl.u32 %v4521, 7
  %v4523 = vsub.s32 3, %v4522
  %v4524 = vrot.slane %v4507, %v4523
  %v4525 = vlaneseq
  %v4526 = vshrl.u32 %v4525, 7
  %v4527 = vsub.s32 4, %v4526
  %v4528 = vrot.slane %v4507, %v4527
  %v4558 = vunpack.c.l.b16 %v4483
  %v4559 = vunpack.c.h.b16 %v4483
  %v4560 = vunpack.c.l.b16 %v4484
  %v4561 = vunpack.c.h.b16 %v4484
  %v4562 = vunpack.c.l.b16 %v4485
  %v4563 = vunpack.c.l.b16 %v4486
  %v4564 = vunpack.c.h.b16 %v4486
  %v4565 = vunpack.c.l.b16 %v4487
  %v4566 = vunpack.c.h.b16 %v4487
  %v4567 = vunpack.c.l.b16 %v4488
  %v4568 = vunpack.c.l.b16 %v4489
  %v4569 = vunpack.c.h.b16 %v4489
  %v4570 = vunpack.c.l.b16 %v4490
  %v4571 = vunpack.c.h.b16 %v4490
  %v4572 = vunpack.c.l.b16 %v4491
  %v4573 = vunpack.c.l.b16 %v4492
  %v4574 = vunpack.c.h.b16 %v4492
  %v4575 = vunpack.c.l.b16 %v4493
  %v4576 = vunpack.c.h.b16 %v4493
  %v4577 = vunpack.c.l.b16 %v4494
  %v4578 = vunpack.c.l.b16 %v4495
  %v4579 = vunpack.c.h.b16 %v4495
  %v4580 = vunpack.c.l.b16 %v4496
  %v4581 = vunpack.c.h.b16 %v4496
  %v4582 = vunpack.c.l.b16 %v4497
  %v4583 = vunpack.c.l.b16 %v4498
  %v4584 = vunpack.c.h.b16 %v4498
  %v4585 = vunpack.c.l.b16 %v4499
  %v4586 = vunpack.c.h.b16 %v4499
  %v4587 = vunpack.c.l.b16 %v4500
  %v4588 = vunpack.c.l.b16 %v4501
  %v4589 = vunpack.c.h.b16 %v4501
  %v4590 = vunpack.c.l.b16 %v4502
  %v4591 = vunpack.c.h.b16 %v4502
  %v4592 = vunpack.c.l.b16 %v4503
  %v4593 = vunpack.c.l.b16 %v4504
  %v4594 = vunpack.c.h.b16 %v4504
  %v4595 = vunpack.c.l.b16 %v4505
  %v4596 = vunpack.c.h.b16 %v4505
  %v4597 = vunpack.c.l.b16 %v4506
  %v4598 = vpack.c.b16 %v4563, %v4558
  %v4599 = vpack.c.b16 %v4564, %v4559
  %v4600 = vpack.c.b16 %v4565, %v4560
  %v4601 = vpack.c.b16 %v4566, %v4561
  %v4602 = vpack.c.b16 %v4567, %v4562
  %v4603 = vpack.c.b16 %v4573, %v4568
  %v4604 = vpack.c.b16 %v4574, %v4569
  %v4605 = vpack.c.b16 %v4575, %v4570
  %v4606 = vpack.c.b16 %v4576, %v4571
  %v4607 = vpack.c.b16 %v4577, %v4572
  %v4608 = vpack.c.b16 %v4583, %v4578
  %v4609 = vpack.c.b16 %v4584, %v4579
  %v4610 = vpack.c.b16 %v4585, %v4580
  %v4611 = vpack.c.b16 %v4586, %v4581
  %v4612 = vpack.c.b16 %v4587, %v4582
  %v4613 = vpack.c.b16 %v4593, %v4588
  %v4614 = vpack.c.b16 %v4594, %v4589
  %v4615 = vpack.c.b16 %v4595, %v4590
  %v4616 = vpack.c.b16 %v4596, %v4591
  %v4617 = vpack.c.b16 %v4597, %v4592
  %v4639 = vsel %vm4300, %v4482, 0
  %4641 = vmatprep.subr.bf16.mxu0 %v4599
  %4642 = vmatpush1.bf16.msra.mxu0 %v4598
  %4643 = vmatprep.subr.bf16.mxu0 %v4604
  %4644 = vmatpush1.bf16.msra.mxu0 %v4603
  %4645 = vmatprep.subr.bf16.mxu0 %v4609
  %4646 = vmatpush1.bf16.msra.mxu0 %v4608
  %4647 = vmatprep.subr.bf16.mxu0 %v4614
  %4648 = vmatpush1.bf16.msra.mxu0 %v4613
  %4649 = vmatprep.subr.bf16.mxu0 0
  %4650 = vmatpush1.bf16.msra.mxu0 0
  %4651 = vmatprep.subr.bf16.mxu0 0
  %4652 = vmatpush1.bf16.msra.mxu0 0
  %4653 = vmatprep.subr.bf16.mxu0 0
  %4654 = vmatpush1.bf16.msra.mxu0 0
  %4655 = vmatprep.subr.bf16.mxu0 0
  %4656 = vmatpush1.bf16.msra.mxu0 0
  %4657 = vmatprep.subr.bf16.mxu0 0
  %4658 = vmatpush1.bf16.msra.mxu0 0
  %4659 = vmatprep.subr.bf16.mxu0 0
  %4660 = vmatpush1.bf16.msra.mxu0 0
  %4661 = vmatprep.subr.bf16.mxu0 0
  %4662 = vmatpush1.bf16.msra.mxu0 0
  %4663 = vmatprep.subr.bf16.mxu0 0
  %4664 = vmatpush1.bf16.msra.mxu0 0
  %4665 = vmatprep.subr.bf16.mxu0 0
  %4666 = vmatpush1.bf16.msra.mxu0 0
  %4667 = vmatprep.subr.bf16.mxu0 0
  %4668 = vmatpush1.bf16.msra.mxu0 0
  %4669 = vmatprep.subr.bf16.mxu0 0
  %4670 = vmatpush1.bf16.msra.mxu0 0
  %4671 = vmatprep.subr.bf16.mxu0 0
  %4672 = vmatpush1.bf16.msra.mxu0 0
  %4673 = vmatprep.mubr.bf16.mxu0 0
  %4674 = vmatmul.mubr.bf16.gmra.mrb[0].mxu0 %v4639
  %v4675 = vpop.f32.mrb[0].mxu0
  %v4676 = vadd.f32 %v4512, %v4675
  %v4677 = vpop.f32.mrb[0].mxu0
  %v4678 = vadd.f32 %v4516, %v4677
  %v4679 = vpop.f32.mrb[0].mxu0
  %v4680 = vpop.f32.mrb[0].mxu0
  %4681 = vdwg.mxu0
  %4682 = vmatprep.subr.bf16.mxu0 %v4601
  %4683 = vmatpush1.bf16.msra.mxu0 %v4600
  %4684 = vmatprep.subr.bf16.mxu0 %v4606
  %4685 = vmatpush1.bf16.msra.mxu0 %v4605
  %4686 = vmatprep.subr.bf16.mxu0 %v4611
  %4687 = vmatpush1.bf16.msra.mxu0 %v4610
  %4688 = vmatprep.subr.bf16.mxu0 %v4616
  %4689 = vmatpush1.bf16.msra.mxu0 %v4615
  %4690 = vmatprep.subr.bf16.mxu0 0
  %4691 = vmatpush1.bf16.msra.mxu0 0
  %4692 = vmatprep.subr.bf16.mxu0 0
  %4693 = vmatpush1.bf16.msra.mxu0 0
  %4694 = vmatprep.subr.bf16.mxu0 0
  %4695 = vmatpush1.bf16.msra.mxu0 0
  %4696 = vmatprep.subr.bf16.mxu0 0
  %4697 = vmatpush1.bf16.msra.mxu0 0
  %4698 = vmatprep.subr.bf16.mxu0 0
  %4699 = vmatpush1.bf16.msra.mxu0 0
  %4700 = vmatprep.subr.bf16.mxu0 0
  %4701 = vmatpush1.bf16.msra.mxu0 0
  %4702 = vmatprep.subr.bf16.mxu0 0
  %4703 = vmatpush1.bf16.msra.mxu0 0
  %4704 = vmatprep.subr.bf16.mxu0 0
  %4705 = vmatpush1.bf16.msra.mxu0 0
  %4706 = vmatprep.subr.bf16.mxu0 0
  %4707 = vmatpush1.bf16.msra.mxu0 0
  %4708 = vmatprep.subr.bf16.mxu0 0
  %4709 = vmatpush1.bf16.msra.mxu0 0
  %4710 = vmatprep.subr.bf16.mxu0 0
  %4711 = vmatpush1.bf16.msra.mxu0 0
  %4712 = vmatprep.subr.bf16.mxu0 0
  %4713 = vmatpush1.bf16.msra.mxu0 0
  %4714 = vmatprep.mubr.bf16.mxu0 0
  %4715 = vmatmul.mubr.bf16.gmra.mrb[0].mxu0 %v4639
  %v4716 = vpop.f32.mrb[0].mxu0
  %v4717 = vadd.f32 %v4520, %v4716
  %v4718 = vpop.f32.mrb[0].mxu0
  %v4719 = vadd.f32 %v4524, %v4718
  %v4720 = vpop.f32.mrb[0].mxu0
  %v4721 = vpop.f32.mrb[0].mxu0
  %4722 = vdwg.mxu0
  %4723 = vmatprep.subr.bf16.mxu0 0
  %4724 = vmatpush1.bf16.msra.mxu0 %v4602
  %4725 = vmatprep.subr.bf16.mxu0 0
  %4726 = vmatpush1.bf16.msra.mxu0 %v4607
  %4727 = vmatprep.subr.bf16.mxu0 0
  %4728 = vmatpush1.bf16.msra.mxu0 %v4612
  %4729 = vmatprep.subr.bf16.mxu0 0
  %4730 = vmatpush1.bf16.msra.mxu0 %v4617
  %4731 = vmatprep.subr.bf16.mxu0 0
  %4732 = vmatpush1.bf16.msra.mxu0 0
  %4733 = vmatprep.subr.bf16.mxu0 0
  %4734 = vmatpush1.bf16.msra.mxu0 0
  %4735 = vmatprep.subr.bf16.mxu0 0
  %4736 = vmatpush1.bf16.msra.mxu0 0
  %4737 = vmatprep.subr.bf16.mxu0 0
  %4738 = vmatpush1.bf16.msra.mxu0 0
  %4739 = vmatprep.subr.bf16.mxu0 0
  %4740 = vmatpush1.bf16.msra.mxu0 0
  %4741 = vmatprep.subr.bf16.mxu0 0
  %4742 = vmatpush1.bf16.msra.mxu0 0
  %4743 = vmatprep.subr.bf16.mxu0 0
  %4744 = vmatpush1.bf16.msra.mxu0 0
  %4745 = vmatprep.subr.bf16.mxu0 0
  %4746 = vmatpush1.bf16.msra.mxu0 0
  %4747 = vmatprep.subr.bf16.mxu0 0
  %4748 = vmatpush1.bf16.msra.mxu0 0
  %4749 = vmatprep.subr.bf16.mxu0 0
  %4750 = vmatpush1.bf16.msra.mxu0 0
  %4751 = vmatprep.subr.bf16.mxu0 0
  %4752 = vmatpush1.bf16.msra.mxu0 0
  %4753 = vmatprep.subr.bf16.mxu0 0
  %4754 = vmatpush1.bf16.msra.mxu0 0
  %4755 = vmatprep.mubr.bf16.mxu0 0
  %4756 = vmatmul.mubr.bf16.gmra.mrb[0].mxu0 %v4639
  %v4757 = vpop.f32.mrb[0].mxu0
  %v4758 = vadd.f32 %v4528, %v4757
  %v4759 = vpop.f32.mrb[0].mxu0
  %v4760 = vpop.f32.mrb[0].mxu0
  %v4761 = vpop.f32.mrb[0].mxu0
  %4762 = vdwg.mxu0
  %v4763 = vxor.u32 %v4676, 2147483648
  %v4764 = vxor.u32 %v4678, 2147483648
  %v4765 = vxor.u32 %v4717, 2147483648
  %v4766 = vxor.u32 %v4719, 2147483648
  %v4767 = vxor.u32 %v4758, 2147483648
  %v4768 = vmul.f32 %v4763, 1.442695
  %v4769 = vpow.pop %v4768
  %v4770 = vmul.f32 %v4764, 1.442695
  %v4771 = vpow.pop %v4770
  %v4772 = vmul.f32 %v4765, 1.442695
  %v4773 = vpow.pop %v4772
  %v4774 = vmul.f32 %v4766, 1.442695
  %v4775 = vpow.pop %v4774
  %v4776 = vmul.f32 %v4767, 1.442695
  %v4777 = vpow.pop %v4776
  %v4778 = vadd.f32 %v4769, 1.0
  %v4779 = vadd.f32 %v4771, 1.0
  %v4780 = vadd.f32 %v4773, 1.0
  %v4781 = vadd.f32 %v4775, 1.0
  %v4782 = vadd.f32 %v4777, 1.0
  %v4783 = vrcp.pop %v4778
  %v4784 = vmul.f32 1.0, %v4783
  %v4785 = vrcp.pop %v4779
  %v4786 = vmul.f32 1.0, %v4785
  %v4787 = vrcp.pop %v4780
  %v4788 = vmul.f32 1.0, %v4787
  %v4789 = vrcp.pop %v4781
  %v4790 = vmul.f32 1.0, %v4789
  %v4791 = vrcp.pop %v4782
  %v4792 = vmul.f32 1.0, %v4791
  %v4798 = vcombine.low %v4784, %v4786
  %v4799 = vcombine.low %v4788, %v4790
  %v4801 = vunpack.c.l.s4 1983009808
  %v4802 = vunpack.c.0.s8 %v4801
  %v4803 = vlaneseq
  %v4804 = vshrl.u32 %v4803, 7
  %v4805 = vsub.s32 %v4802, %v4804
  %v4806 = vrot.slane %v4798, %v4805
  %v4808 = vunpack.c.l.s4 1983009808
  %v4809 = vunpack.c.0.s8 %v4808
  %v4810 = vlaneseq
  %v4811 = vshrl.u32 %v4810, 7
  %v4812 = vsub.s32 %v4809, %v4811
  %v4813 = vrot.slane %v4799, %v4812
  %v4814 = vcombine.low %v4806, %v4813
  %v4816 = vunpack.c.l.s4 1983009808
  %v4817 = vunpack.c.0.s8 %v4816
  %v4818 = vlaneseq
  %v4819 = vshrl.u32 %v4818, 7
  %v4820 = vsub.s32 %v4817, %v4819
  %v4821 = vrot.slane %v4792, %v4820
  %4824 = vst [vmem:[%s14] sm:$0xff] %v4814
  %4825 = vst [vmem:[%s14 + $0x8] sm:$0x3] %v4821
  %4826 = vst [vmem:[%s15] sm:$0x3] %v4371
  // Predicated region
  $region58: #{cvae_forward.1} parent=0 // pred_check
    _
  $region59: #{cvae_forward.1} parent=0 // pred_check_branch
    %4828 = sbr.rel (0) target = $region61
  $region60: #{cvae_forward.1} parent=0 // pred_region
    _
  $region61: #{cvae_forward.1} parent=0 // pred_fallthru
    _
  // Predicated region
  $region62: #{cvae_forward.1} parent=0 // pred_check
    _
  $region63: #{cvae_forward.1} parent=0 // pred_check_branch
    %4830 = sbr.rel (0) target = $region65
  $region64: #{cvae_forward.1} parent=0 // pred_region
    _
  $region65: #{cvae_forward.1} parent=0 // pred_fallthru
    _
  // Predicated region
  $region66: #{cvae_forward.1} parent=0 // pred_check
    _
  $region67: #{cvae_forward.1} parent=0 // pred_check_branch
    %4832 = sbr.rel (0) target = $region69
  $region68: #{cvae_forward.1} parent=0 // pred_region
    _
  $region69: #{cvae_forward.1} parent=0 // pred_fallthru
    _
  // Predicated region
  $region70: #{cvae_forward.1} parent=0 // pred_check
    _
  $region71: #{cvae_forward.1} parent=0 // pred_check_branch
    %4834 = sbr.rel (0) target = $region73
  $region72: #{cvae_forward.1} parent=0 // pred_region
    _
  $region73: #{cvae_forward.1} parent=0 // pred_fallthru
    _

</llo_original>
